<compile_context>
chip_gen: v5e
topology: v5e:2x2
jax: 0.10.0
libtpu: 0.0.40
codegen_flags: <defaults>
</compile_context>

<pallas_src>
import functools

import jax
import jax.numpy as jnp
from jax import lax
from jax.experimental import pallas as pl
from jax.experimental.pallas import tpu as pltpu


def _default_vmem_limit():
    """3/4 of physical VMEM (v5e/v6e -> ~96 MiB, v7x -> ~48 MiB)."""
    try:
        cap = pltpu.get_tpu_info().vmem_capacity_bytes
        return min(int(cap) * 3 // 4, 100 * 1024 * 1024)
    except Exception:
        return 32 * 1024 * 1024  # conservative fallback


VMEM_LIMIT = _default_vmem_limit()


# ----------------------------- in-kernel helpers ----------------------------

def _ln(v, g, b, eps=1e-8):
    """LayerNorm over last dim, f32 math (module uses eps=1e-08)."""
    mu = jnp.mean(v, axis=-1, keepdims=True)
    var = jnp.mean((v - mu) ** 2, axis=-1, keepdims=True)
    return (v - mu) * lax.rsqrt(var + eps) * g + b


def _mm(a, wt):
    """a(M,K) f32 @ wt(K,N) bf16: bf16 MXU inputs, f32 accumulation."""
    return jnp.dot(a.astype(jnp.bfloat16), wt,
                   preferred_element_type=jnp.float32)


def _full_spec(arr):
    """Whole-array VMEM block, grid-constant index map (loaded once, resident)."""
    nd = arr.ndim
    return pl.BlockSpec(arr.shape, lambda *_: (0,) * nd)


# ----------------------------- tiled linear ---------------------------------

def _linear_kernel(x_ref, wt_ref, b_ref, o_ref):
    o_ref[...] = _mm(x_ref[...], wt_ref[...]) + b_ref[...]


def linear_tiled(x, wt, b, *, tm=256, tn=1024):
    """y = x @ wt + b.  x:(M,K) f32, wt:(K,N) bf16 pre-transposed, b:(N,).

    Grid is (N tiles OUTER, M tiles inner): the weight tile index map depends
    only on the outer axis, so each weight tile is DMA'd from HBM exactly once
    and the (small) activation is the re-streamed operand.
    """
    M, K = x.shape
    N = wt.shape[1]
    tm = M if M <= tm else tm            # full dim or multiple of 8
    tn = N if N <= tn else tn            # full dim or multiple of 128
    grid = (pl.cdiv(N, tn), pl.cdiv(M, tm))
    return pl.pallas_call(
        _linear_kernel,
        out_shape=jax.ShapeDtypeStruct((M, N), jnp.float32),
        grid_spec=pltpu.PrefetchScalarGridSpec(
            num_scalar_prefetch=0, grid=grid,
            in_specs=[pl.BlockSpec((tm, K), lambda j, i: (i, 0)),
                      pl.BlockSpec((K, tn), lambda j, i: (0, j)),
                      pl.BlockSpec((1, tn), lambda j, i: (0, j))],
            out_specs=pl.BlockSpec((tm, tn), lambda j, i: (i, j))),
        compiler_params=pltpu.CompilerParams(
            dimension_semantics=("parallel", "parallel"),
            vmem_limit_bytes=VMEM_LIMIT),
    )(x, wt, b.reshape(1, N))


# ------------------- fused attention layer (per batch) ----------------------

def _attn_layer_kernel(x_ref, keep_ref,
                       ln1_g_ref, ln1_b_ref,
                       q_wt_ref, q_b_ref, kv_wt_ref, kv_b_ref,
                       o_wt_ref, o_b_ref,
                       ln2_g_ref, ln2_b_ref,
                       w1t_ref, b1_ref, w2t_ref, b2_ref,
                       out_ref, *, num_heads):
    x = x_ref[0]                      # (L, E) masked output of previous layer
    keep = keep_ref[0]                # (L, 1)

    L, E = x.shape
    dh = E // num_heads

    # LN1 + Q projection (1/sqrt(dh) pre-folded into q_wt/q_b) + fused K|V
    q_in = _ln(x, ln1_g_ref[...], ln1_b_ref[...])
    q = _mm(q_in, q_wt_ref[...]) + q_b_ref[...]
    kv = _mm(x, kv_wt_ref[...]) + kv_b_ref[...]          # (L, 2E): [K | V]

    # causal additive mask generated in-kernel (no HBM (L,L) input)
    row = lax.broadcasted_iota(jnp.int32, (L, L), 0)
    col = lax.broadcasted_iota(jnp.int32, (L, L), 1)
    neg = jnp.where(col > row, -1e9, 0.0)

    o_w = o_wt_ref[...]                                  # (E, E) bf16, resident

    # per-head SDPA with the output projection fused into the head loop:
    # mha = sum_h head_h @ Wo[h*dh:(h+1)*dh, :]   (no concat, same FLOPs)
    mha = jnp.zeros((L, E), jnp.float32)
    for h in range(num_heads):
        sl = slice(h * dh, (h + 1) * dh)
        qh = q[:, sl].astype(jnp.bfloat16)
        kh = kv[:, sl].astype(jnp.bfloat16)
        vh = kv[:, E + h * dh:E + (h + 1) * dh].astype(jnp.bfloat16)
        s = lax.dot_general(qh, kh, (((1,), (1,)), ((), ())),
                            preferred_element_type=jnp.float32)   # (L, L)
        s = s + neg
        s = s - jnp.max(s, axis=-1, keepdims=True)
        p = jnp.exp(s)
        p = p * pl.reciprocal(jnp.sum(p, axis=-1, keepdims=True), approx=True)
        head = jnp.dot(p.astype(jnp.bfloat16), vh,
                       preferred_element_type=jnp.float32)        # (L, dh)
        mha = mha + jnp.dot(head.astype(jnp.bfloat16), o_w[sl, :],
                            preferred_element_type=jnp.float32)
    mha = mha + o_b_ref[...]

    # residual on LN'd Q (as in the reference) + LN2 + pointwise FFN (+ resid)
    x2 = q_in + mha
    y = _ln(x2, ln2_g_ref[...], ln2_b_ref[...])
    h1 = jnp.maximum(_mm(y, w1t_ref[...]) + b1_ref[...], 0.0)
    outp = _mm(h1, w2t_ref[...]) + b2_ref[...] + y

    out_ref[0] = outp * keep                                       # pad mask


def attention_layer(l_feat, keep, lyr, *, num_heads):
    B, L, E = l_feat.shape
    weight_args = [
        lyr["ln1_g"].reshape(1, E), lyr["ln1_b"].reshape(1, E),
        lyr["q_wt"], lyr["q_b"].reshape(1, E),
        lyr["kv_wt"], lyr["kv_b"].reshape(1, 2 * E),
        lyr["o_wt"], lyr["o_b"].reshape(1, E),
        lyr["ln2_g"].reshape(1, E), lyr["ln2_b"].reshape(1, E),
        lyr["ffn_w1t"], lyr["ffn_b1"].reshape(1, E),
        lyr["ffn_w2t"], lyr["ffn_b2"].reshape(1, E),
    ]
    in_specs = [pl.BlockSpec((1, L, E), lambda b: (b, 0, 0)),
                pl.BlockSpec((1, L, 1), lambda b: (b, 0, 0))]
    in_specs += [_full_spec(a) for a in weight_args]
    return pl.pallas_call(
        functools.partial(_attn_layer_kernel, num_heads=num_heads),
        out_shape=jax.ShapeDtypeStruct((B, L, E), jnp.float32),
        grid_spec=pltpu.PrefetchScalarGridSpec(
            num_scalar_prefetch=0, grid=(B,),
            in_specs=in_specs,
            out_specs=pl.BlockSpec((1, L, E), lambda b: (b, 0, 0))),
        compiler_params=pltpu.CompilerParams(
            dimension_semantics=("parallel",),
            vmem_limit_bytes=VMEM_LIMIT),
    )(l_feat, keep, *weight_args)


# --------------------------- GRU recurrence ----------------------------------
# Batch-first, L-chunked: grid = (batch blocks "parallel", L chunks
# "arbitrary"); hidden state lives in VMEM scratch and is carried across the
# sequential L-chunk axis, so only one chunk of gi is resident at a time.

def _gru_rec_kernel(gi_ref, whh_t_ref, bhh_ref, o_ref, h_ref, *, lc, hidden):
    @pl.when(pl.program_id(1) == 0)
    def _():
        h_ref[...] = jnp.zeros_like(h_ref)

    whh_t = whh_t_ref[...]                 # (H, 3H) bf16, resident
    bhh = bhh_ref[...]                     # (1, 3H) f32
    H = hidden
    for tt in range(lc):                   # static indices -> no dynamic slicing
        gi = gi_ref[:, tt, :]              # (tb, 3H) f32 (precomputed x @ W_ih^T)
        h = h_ref[...]                     # (tb, H) f32
        gh = jnp.dot(h.astype(jnp.bfloat16), whh_t,
                     preferred_element_type=jnp.float32) + bhh
        r = jax.nn.sigmoid(gi[:, 0:H] + gh[:, 0:H])
        z = jax.nn.sigmoid(gi[:, H:2 * H] + gh[:, H:2 * H])
        n = jnp.tanh(gi[:, 2 * H:3 * H] + r * gh[:, 2 * H:3 * H])
        h_new = (1.0 - z) * n + z * h
        h_ref[...] = h_new
        o_ref[:, tt, :] = h_new


def gru_recurrence(gi_blh, whh_t, bhh):
    B, L, H3 = gi_blh.shape
    H = H3 // 3
    lc = L if L <= 32 else 32                      # L-chunk (multiple of 8 / full)
    tb = B if B <= 256 else 256                    # fill MXU M dimension
    max_tb = max(1, (8 * 1024 * 1024) // (lc * H3 * 4))   # keep gi block <=8 MiB
    tb = min(tb, max_tb)
    grid = (pl.cdiv(B, tb), pl.cdiv(L, lc))
    bhh2 = bhh.reshape(1, H3)
    return pl.pallas_call(
        functools.partial(_gru_rec_kernel, lc=lc, hidden=H),
        out_shape=jax.ShapeDtypeStruct((B, L, H), jnp.float32),
        grid_spec=pltpu.PrefetchScalarGridSpec(
            num_scalar_prefetch=0, grid=grid,
            in_specs=[pl.BlockSpec((tb, lc, H3), lambda b, t: (b, t, 0)),
                      _full_spec(whh_t),
                      _full_spec(bhh2)],
            out_specs=pl.BlockSpec((tb, lc, H), lambda b, t: (b, t, 0)),
            scratch_shapes=[pltpu.VMEM((tb, H), jnp.float32)]),
        compiler_params=pltpu.CompilerParams(
            dimension_semantics=("parallel", "arbitrary"),
            vmem_limit_bytes=VMEM_LIMIT),
    )(gi_blh, whh_t, bhh2)


# ---------------- fused branch combination (per batch) ------------------------
# last_LN(l) + last_LN(s) + geo_LN(geo_linear(geo)) + user_LN(user_linear(u));
# the user projection is computed once per batch element (not per token) and
# broadcast over L inside the kernel.

def _combine_kernel(l_ref, s_ref, geo_ref, usr_ref,
                    last_g_ref, last_b_ref,
                    geo_wt_ref, geo_bias_ref, geo_g_ref, geo_beta_ref,
                    usr_wt_ref, usr_bias_ref, usr_g_ref, usr_beta_ref,
                    o_ref):
    l = _ln(l_ref[0], last_g_ref[...], last_b_ref[...])
    s = _ln(s_ref[0], last_g_ref[...], last_b_ref[...])
    g = _mm(geo_ref[0], geo_wt_ref[...]) + geo_bias_ref[...]
    g = _ln(g, geo_g_ref[...], geo_beta_ref[...])
    u = _mm(usr_ref[0], usr_wt_ref[...]) + usr_bias_ref[...]      # (1, E)
    u = _ln(u, usr_g_ref[...], usr_beta_ref[...])
    o_ref[0] = l + s + g + u                                      # u broadcasts


def combine_branches(l_feat, s_feat, geo_feat, user_row, params):
    B, L, E = l_feat.shape
    Gg = geo_feat.shape[-1]
    Hu = user_row.shape[-1]
    weights = [
        params["last_ln_g"].reshape(1, E), params["last_ln_b"].reshape(1, E),
        params["geo_wt"], params["geo_b"].reshape(1, E),
        params["geo_ln_g"].reshape(1, E), params["geo_ln_b"].reshape(1, E),
        params["user_wt"], params["user_b"].reshape(1, E),
        params["user_ln_g"].reshape(1, E), params["user_ln_b"].reshape(1, E),
    ]
    in_specs = [pl.BlockSpec((1, L, E), lambda b: (b, 0, 0)),
                pl.BlockSpec((1, L, E), lambda b: (b, 0, 0)),
                pl.BlockSpec((1, L, Gg), lambda b: (b, 0, 0)),
                pl.BlockSpec((1, 1, Hu), lambda b: (b, 0, 0))]
    in_specs += [_full_spec(w) for w in weights]
    return pl.pallas_call(
        _combine_kernel,
        out_shape=jax.ShapeDtypeStruct((B, L, E), jnp.float32),
        grid_spec=pltpu.PrefetchScalarGridSpec(
            num_scalar_prefetch=0, grid=(B,),
            in_specs=in_specs,
            out_specs=pl.BlockSpec((1, L, E), lambda b: (b, 0, 0))),
        compiler_params=pltpu.CompilerParams(
            dimension_semantics=("parallel",),
            vmem_limit_bytes=VMEM_LIMIT),
    )(l_feat, s_feat, geo_feat, user_row, *weights)


# ----------------------------- parameters ------------------------------------

def init_params(key, *, user_num, poi_num, time_num, cate_num,
                user_hidden, poi_hidden, time_hidden, cate_hidden,
                num_layers, num_heads):
    """Matmul weights pre-transposed (in, out) and stored bf16; the
    MultiheadAttention 1/sqrt(dh) scale is folded into the Q projection;
    K/V projections are concatenated into one (E, 2E) matrix."""
    E = poi_hidden + time_hidden + cate_hidden
    assert E % num_heads == 0
    dh = E // num_heads
    scale = dh ** -0.5
    keys = iter(jax.random.split(key, 128))

    def nrm(shape, s=0.02):
        return jax.random.normal(next(keys), shape, jnp.float32) * s

    def emb(n, h):
        w = nrm((n + 1, h))
        return w.at[0].set(0.0)  # padding_idx = 0

    def bf16(w):
        return w.astype(jnp.bfloat16)

    params = dict(
        user_emb=emb(user_num, user_hidden),
        poi_emb=emb(poi_num, poi_hidden),
        time_emb=emb(time_num, time_hidden),
        cate_emb=emb(cate_num, cate_hidden),
        # TODO(synk): single GRU layer (args.rnn_num_layers > 1 would stack).
        gru_wih_t=bf16(nrm((3 * E, E)).T), gru_whh_t=bf16(nrm((3 * E, E)).T),
        gru_b_ih=jnp.zeros((3 * E,), jnp.float32),
        gru_b_hh=jnp.zeros((3 * E,), jnp.float32),
        last_ln_g=jnp.ones((E,), jnp.float32),
        last_ln_b=jnp.zeros((E,), jnp.float32),
        geo_wt=bf16(nrm((E, poi_hidden + cate_hidden)).T),
        geo_b=jnp.zeros((E,), jnp.float32),
        geo_ln_g=jnp.ones((E,), jnp.float32), geo_ln_b=jnp.zeros((E,), jnp.float32),
        user_wt=bf16(nrm((E, user_hidden)).T), user_b=jnp.zeros((E,), jnp.float32),
        user_ln_g=jnp.ones((E,), jnp.float32), user_ln_b=jnp.zeros((E,), jnp.float32),
        out_wt=bf16(nrm((poi_num, E)).T), out_b=jnp.zeros((poi_num,), jnp.float32),
        out_cate_wt=bf16(nrm((cate_num, E)).T),
        out_cate_b=jnp.zeros((cate_num,), jnp.float32),
        poi2cate=jnp.array([(p % cate_num) + 1 for p in range(1, poi_num + 1)],
                           jnp.int32),
    )
    layers = []
    for _ in range(num_layers):
        in_proj_w = nrm((3 * E, E))                      # PyTorch (3E, E)
        in_proj_b = jnp.zeros((3 * E,), jnp.float32)
        wq, wk, wv = jnp.split(in_proj_w, 3, axis=0)
        bq, bk, bv = jnp.split(in_proj_b, 3, axis=0)
        layers.append(dict(
            ln1_g=jnp.ones((E,), jnp.float32), ln1_b=jnp.zeros((E,), jnp.float32),
            q_wt=bf16((wq * scale).T), q_b=bq * scale,   # scale folded in
            kv_wt=bf16(jnp.concatenate([wk.T, wv.T], axis=1)),   # (E, 2E)
            kv_b=jnp.concatenate([bk, bv]),
            o_wt=bf16(nrm((E, E)).T), o_b=jnp.zeros((E,), jnp.float32),
            ln2_g=jnp.ones((E,), jnp.float32), ln2_b=jnp.zeros((E,), jnp.float32),
            ffn_w1t=bf16(nrm((E, E)).T), ffn_b1=jnp.zeros((E,), jnp.float32),
            ffn_w2t=bf16(nrm((E, E)).T), ffn_b2=jnp.zeros((E,), jnp.float32),
        ))
    params["layers"] = layers
    return params


# -------------------------------- forward -------------------------------------

def sstp_forward(params, users, pois, times, cates, *, time_num, num_heads):
    B, L = pois.shape
    E = params["last_ln_g"].shape[0]

    t_idx = (times // 3600) % time_num + 1

    user_emb = jnp.take(params["user_emb"], users, axis=0)           # (B, Hu)
    poi_emb = jnp.take(params["poi_emb"], pois, axis=0)              # (B, L, Hp)
    time_emb = jnp.take(params["time_emb"], t_idx, axis=0)
    cate_emb = jnp.take(params["cate_emb"], cates, axis=0)

    feat_cat = jnp.concatenate([poi_emb, time_emb, cate_emb], axis=2)  # (B,L,E)

    # ---- recurrent branch (batch-first, no XLA transposes) ----
    gi = linear_tiled(feat_cat.reshape(B * L, E),
                      params["gru_wih_t"], params["gru_b_ih"])       # (B*L, 3E)
    s_feat = gru_recurrence(gi.reshape(B, L, 3 * E),
                            params["gru_whh_t"], params["gru_b_hh"]) # (B, L, E)

    # ---- self-attention branch (one fused kernel per layer, grid over B) ----
    keep = (pois != 0).astype(jnp.float32)[..., None]                # (B,L,1)
    l_feat = feat_cat * keep
    for lyr in params["layers"]:
        l_feat = attention_layer(l_feat, keep, lyr, num_heads=num_heads)

    # ---- geographical branch ----
    # TODO(synk): DGL GATConv neighbor message passing (build_geographical) has
    # no clean Pallas equivalent; we feed the raw per-POI (poi||cate) feature
    # the GAT would consume as a deterministic stand-in.
    poi_cat_feat = jnp.concatenate(
        [params["poi_emb"][1:],
         jnp.take(params["cate_emb"], params["poi2cate"], axis=0)], axis=1)
    geo_idx = jnp.clip(pois - 1, 0, poi_cat_feat.shape[0] - 1)
    geo_feat = jnp.take(poi_cat_feat, geo_idx, axis=0) * keep        # (B,L,Ggnn)

    # ---- social branch ----
    # TODO(synk): random.choice neighbor sampling over user_adj/user_poi_dict is
    # non-deterministic Python; we use build_social's deterministic fallback
    # path (the current user embedding) for every user.  The user projection +
    # LN is done once per user inside the combine kernel (no (B,L,Hu) broadcast).
    Hu = user_emb.shape[-1]
    user_row = user_emb.reshape(B, 1, Hu)

    feat = combine_branches(l_feat, s_feat, geo_feat, user_row, params)
    feat2d = feat.reshape(B * L, E)

    # vocab-sized projections: two calls (fuse+split would re-write the logits)
    feat_out = linear_tiled(feat2d, params["out_wt"],
                            params["out_b"]).reshape(B, L, -1)
    feat_out_cate = linear_tiled(feat2d, params["out_cate_wt"],
                                 params["out_cate_b"]).reshape(B, L, -1)
    return feat_out, feat_out_cate


# --------------------------------- main ---------------------------------------

if __name__ == "__main__":
    # small, forward-consistent shapes
    B, L = 2, 8
    user_num, poi_num, time_num, cate_num = 10, 20, 24, 5
    user_hidden, poi_hidden, time_hidden, cate_hidden = 16, 16, 8, 8
    num_heads, num_layers = 2, 2

    key = jax.random.PRNGKey(0)
    pkey, k_users, k_pois, k_times, k_cates = jax.random.split(key, 5)

    params = init_params(pkey, user_num=user_num, poi_num=poi_num,
                         time_num=time_num, cate_num=cate_num,
                         user_hidden=user_hidden, poi_hidden=poi_hidden,
                         time_hidden=time_hidden, cate_hidden=cate_hidden,
                         num_layers=num_layers, num_heads=num_heads)

    users = jax.random.randint(k_users, (B,), 1, user_num + 1, jnp.int32)
    pois = jax.random.randint(k_pois, (B, L), 1, poi_num + 1, jnp.int32)
    pois = pois.at[0, :2].set(0)                    # some left padding
    times = jax.random.randint(k_times, (B, L), 0, 86400, jnp.int32)
    cates = jax.random.randint(k_cates, (B, L), 1, cate_num + 1, jnp.int32)
    cates = jnp.where(pois == 0, 0, cates)

    fwd = jax.jit(functools.partial(sstp_forward,
                                    time_num=time_num, num_heads=num_heads))
    feat_out, feat_out_cate = fwd(params, users, pois, times, cates)

    jax.block_until_ready(feat_out)
    jax.block_until_ready(feat_out_cate)
    assert feat_out.shape == (B, L, poi_num)
    assert feat_out_cate.shape == (B, L, cate_num)
    print("KERNEL_OK")
</pallas_src>

<mosaic_0001>
module attributes {stable_mosaic.version = 11 : i64} {
  func.func @_attn_layer_kernel(%arg0: i32, %arg1: memref<1x8x32xf32, #tpu.memory_space<vmem>>, %arg2: memref<1x8x1xf32, #tpu.memory_space<vmem>>, %arg3: memref<1x32xf32, #tpu.memory_space<vmem>>, %arg4: memref<1x32xf32, #tpu.memory_space<vmem>>, %arg5: memref<32x32xbf16, #tpu.memory_space<vmem>>, %arg6: memref<1x32xf32, #tpu.memory_space<vmem>>, %arg7: memref<32x64xbf16, #tpu.memory_space<vmem>>, %arg8: memref<1x64xf32, #tpu.memory_space<vmem>>, %arg9: memref<32x32xbf16, #tpu.memory_space<vmem>>, %arg10: memref<1x32xf32, #tpu.memory_space<vmem>>, %arg11: memref<1x32xf32, #tpu.memory_space<vmem>>, %arg12: memref<1x32xf32, #tpu.memory_space<vmem>>, %arg13: memref<32x32xbf16, #tpu.memory_space<vmem>>, %arg14: memref<1x32xf32, #tpu.memory_space<vmem>>, %arg15: memref<32x32xbf16, #tpu.memory_space<vmem>>, %arg16: memref<1x32xf32, #tpu.memory_space<vmem>>, %arg17: memref<1x8x32xf32, #tpu.memory_space<vmem>>) attributes {dimension_semantics = [#tpu.dimension_semantics<parallel>], iteration_bounds = array<i64: 2>, scalar_prefetch = 0 : i64, scratch_operands = 0 : i64, tpu.core_type = #tpu.core_type<tc>, window_params = [{transform_indices = @transform_0, window_bounds = array<i64: 1, 8, 32>}, {transform_indices = @transform_1, window_bounds = array<i64: 1, 8, 1>}, {pipeline_mode = #tpu.pipeline_mode<synchronous>, transform_indices = @transform_2, window_bounds = array<i64: 1, 32>}, {pipeline_mode = #tpu.pipeline_mode<synchronous>, transform_indices = @transform_3, window_bounds = array<i64: 1, 32>}, {pipeline_mode = #tpu.pipeline_mode<synchronous>, transform_indices = @transform_4, window_bounds = array<i64: 32, 32>}, {pipeline_mode = #tpu.pipeline_mode<synchronous>, transform_indices = @transform_5, window_bounds = array<i64: 1, 32>}, {pipeline_mode = #tpu.pipeline_mode<synchronous>, transform_indices = @transform_6, window_bounds = array<i64: 32, 64>}, {pipeline_mode = #tpu.pipeline_mode<synchronous>, transform_indices = @transform_7, window_bounds = array<i64: 1, 64>}, {pipeline_mode = #tpu.pipeline_mode<synchronous>, transform_indices = @transform_8, window_bounds = array<i64: 32, 32>}, {pipeline_mode = #tpu.pipeline_mode<synchronous>, transform_indices = @transform_9, window_bounds = array<i64: 1, 32>}, {pipeline_mode = #tpu.pipeline_mode<synchronous>, transform_indices = @transform_10, window_bounds = array<i64: 1, 32>}, {pipeline_mode = #tpu.pipeline_mode<synchronous>, transform_indices = @transform_11, window_bounds = array<i64: 1, 32>}, {pipeline_mode = #tpu.pipeline_mode<synchronous>, transform_indices = @transform_12, window_bounds = array<i64: 32, 32>}, {pipeline_mode = #tpu.pipeline_mode<synchronous>, transform_indices = @transform_13, window_bounds = array<i64: 1, 32>}, {pipeline_mode = #tpu.pipeline_mode<synchronous>, transform_indices = @transform_14, window_bounds = array<i64: 32, 32>}, {pipeline_mode = #tpu.pipeline_mode<synchronous>, transform_indices = @transform_15, window_bounds = array<i64: 1, 32>}, {transform_indices = @transform_16, window_bounds = array<i64: 1, 8, 32>}]} {
    %c0 = arith.constant 0 : index
    %c0_0 = arith.constant 0 : index
    %c0_1 = arith.constant 0 : index
    %0 = vector.load %arg1[%c0, %c0_0, %c0_1] : memref<1x8x32xf32, #tpu.memory_space<vmem>>, vector<1x8x32xf32>
    %1 = vector.shape_cast %0 : vector<1x8x32xf32> to vector<8x32xf32>
    %c0_2 = arith.constant 0 : index
    %c0_3 = arith.constant 0 : index
    %c0_4 = arith.constant 0 : index
    %2 = vector.load %arg2[%c0_2, %c0_3, %c0_4] : memref<1x8x1xf32, #tpu.memory_space<vmem>>, vector<1x8x1xf32>
    %3 = vector.shape_cast %2 : vector<1x8x1xf32> to vector<8x1xf32>
    %c0_5 = arith.constant 0 : index
    %c0_6 = arith.constant 0 : index
    %4 = vector.load %arg3[%c0_5, %c0_6] : memref<1x32xf32, #tpu.memory_space<vmem>>, vector<1x32xf32>
    %c0_7 = arith.constant 0 : index
    %c0_8 = arith.constant 0 : index
    %5 = vector.load %arg4[%c0_7, %c0_8] : memref<1x32xf32, #tpu.memory_space<vmem>>, vector<1x32xf32>
    %cst = arith.constant dense<0.000000e+00> : vector<8xf32>
    %6 = vector.multi_reduction <add>, %1, %cst [1] : vector<8x32xf32> to vector<8xf32>
    %7 = vector.shape_cast %6 : vector<8xf32> to vector<8x1xf32>
    %cst_9 = arith.constant 3.200000e+01 : f32
    %8 = vector.broadcast %cst_9 : f32 to vector<8x1xf32>
    %9 = arith.divf %7, %8 : vector<8x1xf32>
    %10 = vector.broadcast %9 : vector<8x1xf32> to vector<8x32xf32>
    %11 = arith.subf %1, %10 : vector<8x32xf32>
    %12 = arith.mulf %11, %11 : vector<8x32xf32>
    %cst_10 = arith.constant dense<0.000000e+00> : vector<8xf32>
    %13 = vector.multi_reduction <add>, %12, %cst_10 [1] : vector<8x32xf32> to vector<8xf32>
    %14 = vector.shape_cast %13 : vector<8xf32> to vector<8x1xf32>
    %cst_11 = arith.constant 3.200000e+01 : f32
    %15 = vector.broadcast %cst_11 : f32 to vector<8x1xf32>
    %16 = arith.divf %14, %15 : vector<8x1xf32>
    %17 = vector.broadcast %9 : vector<8x1xf32> to vector<8x32xf32>
    %18 = arith.subf %1, %17 : vector<8x32xf32>
    %cst_12 = arith.constant 9.99999993E-9 : f32
    %19 = vector.broadcast %cst_12 : f32 to vector<8x1xf32>
    %20 = arith.addf %16, %19 : vector<8x1xf32>
    %21 = math.rsqrt %20 : vector<8x1xf32>
    %22 = vector.broadcast %21 : vector<8x1xf32> to vector<8x32xf32>
    %23 = arith.mulf %18, %22 : vector<8x32xf32>
    %24 = vector.broadcast %4 : vector<1x32xf32> to vector<8x32xf32>
    %25 = arith.mulf %23, %24 : vector<8x32xf32>
    %26 = vector.broadcast %5 : vector<1x32xf32> to vector<8x32xf32>
    %27 = arith.addf %25, %26 : vector<8x32xf32>
    %c0_13 = arith.constant 0 : index
    %c0_14 = arith.constant 0 : index
    %28 = vector.load %arg5[%c0_13, %c0_14] : memref<32x32xbf16, #tpu.memory_space<vmem>>, vector<32x32xbf16>
    %29 = arith.truncf %27 : vector<8x32xf32> to vector<8x32xbf16>
    %cst_15 = arith.constant dense<0.000000e+00> : vector<8x32xf32>
    %30 = tpu.matmul %29, %28, %cst_15 {dimension_numbers = #tpu.dot_dimension_numbers<[1], [0], [0], [1], [0, 0, 1, 1], [], []>} : vector<8x32xbf16>, vector<32x32xbf16>, vector<8x32xf32> -> vector<8x32xf32>
    %c0_16 = arith.constant 0 : index
    %c0_17 = arith.constant 0 : index
    %31 = vector.load %arg6[%c0_16, %c0_17] : memref<1x32xf32, #tpu.memory_space<vmem>>, vector<1x32xf32>
    %32 = vector.broadcast %31 : vector<1x32xf32> to vector<8x32xf32>
    %33 = arith.addf %30, %32 : vector<8x32xf32>
    %c0_18 = arith.constant 0 : index
    %c0_19 = arith.constant 0 : index
    %34 = vector.load %arg7[%c0_18, %c0_19] : memref<32x64xbf16, #tpu.memory_space<vmem>>, vector<32x64xbf16>
    %35 = arith.truncf %1 : vector<8x32xf32> to vector<8x32xbf16>
    %cst_20 = arith.constant dense<0.000000e+00> : vector<8x64xf32>
    %36 = tpu.matmul %35, %34, %cst_20 {dimension_numbers = #tpu.dot_dimension_numbers<[1], [0], [0], [1], [0, 0, 1, 1], [], []>} : vector<8x32xbf16>, vector<32x64xbf16>, vector<8x64xf32> -> vector<8x64xf32>
    %c0_21 = arith.constant 0 : index
    %c0_22 = arith.constant 0 : index
    %37 = vector.load %arg8[%c0_21, %c0_22] : memref<1x64xf32, #tpu.memory_space<vmem>>, vector<1x64xf32>
    %38 = vector.broadcast %37 : vector<1x64xf32> to vector<8x64xf32>
    %39 = arith.addf %36, %38 : vector<8x64xf32>
    %40 = tpu.iota {dimensions = array<i32: 0>} : vector<8x8xi32>
    %41 = tpu.iota {dimensions = array<i32: 1>} : vector<8x8xi32>
    %42 = arith.cmpi sgt, %41, %40 : vector<8x8xi32>
    %cst_23 = arith.constant -1.000000e+09 : f32
    %cst_24 = arith.constant 0.000000e+00 : f32
    %43 = vector.broadcast %cst_23 : f32 to vector<8x8xf32>
    %44 = vector.broadcast %cst_24 : f32 to vector<8x8xf32>
    %45 = arith.select %42, %43, %44 : vector<8x8xi1>, vector<8x8xf32>
    %c0_25 = arith.constant 0 : index
    %c0_26 = arith.constant 0 : index
    %46 = vector.load %arg9[%c0_25, %c0_26] : memref<32x32xbf16, #tpu.memory_space<vmem>>, vector<32x32xbf16>
    %cst_27 = arith.constant 0.000000e+00 : f32
    %47 = vector.broadcast %cst_27 : f32 to vector<8x32xf32>
    %48 = vector.extract_strided_slice %33 {offsets = [0, 0], sizes = [8, 16], strides = [1, 1]} : vector<8x32xf32> to vector<8x16xf32>
    %49 = arith.truncf %48 : vector<8x16xf32> to vector<8x16xbf16>
    %50 = vector.extract_strided_slice %39 {offsets = [0, 0], sizes = [8, 16], strides = [1, 1]} : vector<8x64xf32> to vector<8x16xf32>
    %51 = arith.truncf %50 : vector<8x16xf32> to vector<8x16xbf16>
    %52 = vector.extract_strided_slice %39 {offsets = [0, 32], sizes = [8, 16], strides = [1, 1]} : vector<8x64xf32> to vector<8x16xf32>
    %53 = arith.truncf %52 : vector<8x16xf32> to vector<8x16xbf16>
    %cst_28 = arith.constant dense<0.000000e+00> : vector<8x8xf32>
    %54 = tpu.matmul %49, %51, %cst_28 {dimension_numbers = #tpu.dot_dimension_numbers<[1], [1], [0], [0], [0, 0, 1, 0], [], []>} : vector<8x16xbf16>, vector<8x16xbf16>, vector<8x8xf32> -> vector<8x8xf32>
    %55 = arith.addf %54, %45 : vector<8x8xf32>
    %cst_29 = arith.constant dense<0xFF800000> : vector<8xf32>
    %56 = vector.multi_reduction <maximumf>, %55, %cst_29 [1] : vector<8x8xf32> to vector<8xf32>
    %57 = vector.shape_cast %56 : vector<8xf32> to vector<8x1xf32>
    %58 = vector.broadcast %57 : vector<8x1xf32> to vector<8x8xf32>
    %59 = arith.subf %55, %58 : vector<8x8xf32>
    %60 = math.exp %59 : vector<8x8xf32>
    %cst_30 = arith.constant dense<0.000000e+00> : vector<8xf32>
    %61 = vector.multi_reduction <add>, %60, %cst_30 [1] : vector<8x8xf32> to vector<8xf32>
    %62 = vector.shape_cast %61 : vector<8xf32> to vector<8x1xf32>
    %63 = tpu.reciprocal %62 {approx = true} : vector<8x1xf32> -> vector<8x1xf32>
    %64 = vector.broadcast %63 : vector<8x1xf32> to vector<8x8xf32>
    %65 = arith.mulf %60, %64 : vector<8x8xf32>
    %66 = arith.truncf %65 : vector<8x8xf32> to vector<8x8xbf16>
    %cst_31 = arith.constant dense<0.000000e+00> : vector<8x16xf32>
    %67 = tpu.matmul %66, %53, %cst_31 {dimension_numbers = #tpu.dot_dimension_numbers<[1], [0], [0], [1], [0, 0, 1, 1], [], []>} : vector<8x8xbf16>, vector<8x16xbf16>, vector<8x16xf32> -> vector<8x16xf32>
    %68 = arith.truncf %67 : vector<8x16xf32> to vector<8x16xbf16>
    %69 = vector.extract_strided_slice %46 {offsets = [0, 0], sizes = [16, 32], strides = [1, 1]} : vector<32x32xbf16> to vector<16x32xbf16>
    %cst_32 = arith.constant dense<0.000000e+00> : vector<8x32xf32>
    %70 = tpu.matmul %68, %69, %cst_32 {dimension_numbers = #tpu.dot_dimension_numbers<[1], [0], [0], [1], [0, 0, 1, 1], [], []>} : vector<8x16xbf16>, vector<16x32xbf16>, vector<8x32xf32> -> vector<8x32xf32>
    %71 = arith.addf %47, %70 : vector<8x32xf32>
    %72 = vector.extract_strided_slice %33 {offsets = [0, 16], sizes = [8, 16], strides = [1, 1]} : vector<8x32xf32> to vector<8x16xf32>
    %73 = arith.truncf %72 : vector<8x16xf32> to vector<8x16xbf16>
    %74 = vector.extract_strided_slice %39 {offsets = [0, 16], sizes = [8, 16], strides = [1, 1]} : vector<8x64xf32> to vector<8x16xf32>
    %75 = arith.truncf %74 : vector<8x16xf32> to vector<8x16xbf16>
    %76 = vector.extract_strided_slice %39 {offsets = [0, 48], sizes = [8, 16], strides = [1, 1]} : vector<8x64xf32> to vector<8x16xf32>
    %77 = arith.truncf %76 : vector<8x16xf32> to vector<8x16xbf16>
    %cst_33 = arith.constant dense<0.000000e+00> : vector<8x8xf32>
    %78 = tpu.matmul %73, %75, %cst_33 {dimension_numbers = #tpu.dot_dimension_numbers<[1], [1], [0], [0], [0, 0, 1, 0], [], []>} : vector<8x16xbf16>, vector<8x16xbf16>, vector<8x8xf32> -> vector<8x8xf32>
    %79 = arith.addf %78, %45 : vector<8x8xf32>
    %cst_34 = arith.constant dense<0xFF800000> : vector<8xf32>
    %80 = vector.multi_reduction <maximumf>, %79, %cst_34 [1] : vector<8x8xf32> to vector<8xf32>
    %81 = vector.shape_cast %80 : vector<8xf32> to vector<8x1xf32>
    %82 = vector.broadcast %81 : vector<8x1xf32> to vector<8x8xf32>
    %83 = arith.subf %79, %82 : vector<8x8xf32>
    %84 = math.exp %83 : vector<8x8xf32>
    %cst_35 = arith.constant dense<0.000000e+00> : vector<8xf32>
    %85 = vector.multi_reduction <add>, %84, %cst_35 [1] : vector<8x8xf32> to vector<8xf32>
    %86 = vector.shape_cast %85 : vector<8xf32> to vector<8x1xf32>
    %87 = tpu.reciprocal %86 {approx = true} : vector<8x1xf32> -> vector<8x1xf32>
    %88 = vector.broadcast %87 : vector<8x1xf32> to vector<8x8xf32>
    %89 = arith.mulf %84, %88 : vector<8x8xf32>
    %90 = arith.truncf %89 : vector<8x8xf32> to vector<8x8xbf16>
    %cst_36 = arith.constant dense<0.000000e+00> : vector<8x16xf32>
    %91 = tpu.matmul %90, %77, %cst_36 {dimension_numbers = #tpu.dot_dimension_numbers<[1], [0], [0], [1], [0, 0, 1, 1], [], []>} : vector<8x8xbf16>, vector<8x16xbf16>, vector<8x16xf32> -> vector<8x16xf32>
    %92 = arith.truncf %91 : vector<8x16xf32> to vector<8x16xbf16>
    %93 = vector.extract_strided_slice %46 {offsets = [16, 0], sizes = [16, 32], strides = [1, 1]} : vector<32x32xbf16> to vector<16x32xbf16>
    %cst_37 = arith.constant dense<0.000000e+00> : vector<8x32xf32>
    %94 = tpu.matmul %92, %93, %cst_37 {dimension_numbers = #tpu.dot_dimension_numbers<[1], [0], [0], [1], [0, 0, 1, 1], [], []>} : vector<8x16xbf16>, vector<16x32xbf16>, vector<8x32xf32> -> vector<8x32xf32>
    %95 = arith.addf %71, %94 : vector<8x32xf32>
    %c0_38 = arith.constant 0 : index
    %c0_39 = arith.constant 0 : index
    %96 = vector.load %arg10[%c0_38, %c0_39] : memref<1x32xf32, #tpu.memory_space<vmem>>, vector<1x32xf32>
    %97 = vector.broadcast %96 : vector<1x32xf32> to vector<8x32xf32>
    %98 = arith.addf %95, %97 : vector<8x32xf32>
    %99 = arith.addf %27, %98 : vector<8x32xf32>
    %c0_40 = arith.constant 0 : index
    %c0_41 = arith.constant 0 : index
    %100 = vector.load %arg11[%c0_40, %c0_41] : memref<1x32xf32, #tpu.memory_space<vmem>>, vector<1x32xf32>
    %c0_42 = arith.constant 0 : index
    %c0_43 = arith.constant 0 : index
    %101 = vector.load %arg12[%c0_42, %c0_43] : memref<1x32xf32, #tpu.memory_space<vmem>>, vector<1x32xf32>
    %cst_44 = arith.constant dense<0.000000e+00> : vector<8xf32>
    %102 = vector.multi_reduction <add>, %99, %cst_44 [1] : vector<8x32xf32> to vector<8xf32>
    %103 = vector.shape_cast %102 : vector<8xf32> to vector<8x1xf32>
    %cst_45 = arith.constant 3.200000e+01 : f32
    %104 = vector.broadcast %cst_45 : f32 to vector<8x1xf32>
    %105 = arith.divf %103, %104 : vector<8x1xf32>
    %106 = vector.broadcast %105 : vector<8x1xf32> to vector<8x32xf32>
    %107 = arith.subf %99, %106 : vector<8x32xf32>
    %108 = arith.mulf %107, %107 : vector<8x32xf32>
    %cst_46 = arith.constant dense<0.000000e+00> : vector<8xf32>
    %109 = vector.multi_reduction <add>, %108, %cst_46 [1] : vector<8x32xf32> to vector<8xf32>
    %110 = vector.shape_cast %109 : vector<8xf32> to vector<8x1xf32>
    %cst_47 = arith.constant 3.200000e+01 : f32
    %111 = vector.broadcast %cst_47 : f32 to vector<8x1xf32>
    %112 = arith.divf %110, %111 : vector<8x1xf32>
    %113 = vector.broadcast %105 : vector<8x1xf32> to vector<8x32xf32>
    %114 = arith.subf %99, %113 : vector<8x32xf32>
    %cst_48 = arith.constant 9.99999993E-9 : f32
    %115 = vector.broadcast %cst_48 : f32 to vector<8x1xf32>
    %116 = arith.addf %112, %115 : vector<8x1xf32>
    %117 = math.rsqrt %116 : vector<8x1xf32>
    %118 = vector.broadcast %117 : vector<8x1xf32> to vector<8x32xf32>
    %119 = arith.mulf %114, %118 : vector<8x32xf32>
    %120 = vector.broadcast %100 : vector<1x32xf32> to vector<8x32xf32>
    %121 = arith.mulf %119, %120 : vector<8x32xf32>
    %122 = vector.broadcast %101 : vector<1x32xf32> to vector<8x32xf32>
    %123 = arith.addf %121, %122 : vector<8x32xf32>
    %c0_49 = arith.constant 0 : index
    %c0_50 = arith.constant 0 : index
    %124 = vector.load %arg13[%c0_49, %c0_50] : memref<32x32xbf16, #tpu.memory_space<vmem>>, vector<32x32xbf16>
    %125 = arith.truncf %123 : vector<8x32xf32> to vector<8x32xbf16>
    %cst_51 = arith.constant dense<0.000000e+00> : vector<8x32xf32>
    %126 = tpu.matmul %125, %124, %cst_51 {dimension_numbers = #tpu.dot_dimension_numbers<[1], [0], [0], [1], [0, 0, 1, 1], [], []>} : vector<8x32xbf16>, vector<32x32xbf16>, vector<8x32xf32> -> vector<8x32xf32>
    %c0_52 = arith.constant 0 : index
    %c0_53 = arith.constant 0 : index
    %127 = vector.load %arg14[%c0_52, %c0_53] : memref<1x32xf32, #tpu.memory_space<vmem>>, vector<1x32xf32>
    %128 = vector.broadcast %127 : vector<1x32xf32> to vector<8x32xf32>
    %129 = arith.addf %126, %128 : vector<8x32xf32>
    %cst_54 = arith.constant 0.000000e+00 : f32
    %130 = vector.broadcast %cst_54 : f32 to vector<8x32xf32>
    %131 = arith.maximumf %129, %130 : vector<8x32xf32>
    %c0_55 = arith.constant 0 : index
    %c0_56 = arith.constant 0 : index
    %132 = vector.load %arg15[%c0_55, %c0_56] : memref<32x32xbf16, #tpu.memory_space<vmem>>, vector<32x32xbf16>
    %133 = arith.truncf %131 : vector<8x32xf32> to vector<8x32xbf16>
    %cst_57 = arith.constant dense<0.000000e+00> : vector<8x32xf32>
    %134 = tpu.matmul %133, %132, %cst_57 {dimension_numbers = #tpu.dot_dimension_numbers<[1], [0], [0], [1], [0, 0, 1, 1], [], []>} : vector<8x32xbf16>, vector<32x32xbf16>, vector<8x32xf32> -> vector<8x32xf32>
    %c0_58 = arith.constant 0 : index
    %c0_59 = arith.constant 0 : index
    %135 = vector.load %arg16[%c0_58, %c0_59] : memref<1x32xf32, #tpu.memory_space<vmem>>, vector<1x32xf32>
    %136 = vector.broadcast %135 : vector<1x32xf32> to vector<8x32xf32>
    %137 = arith.addf %134, %136 : vector<8x32xf32>
    %138 = arith.addf %137, %123 : vector<8x32xf32>
    %139 = vector.broadcast %3 : vector<8x1xf32> to vector<8x32xf32>
    %140 = arith.mulf %138, %139 : vector<8x32xf32>
    %c0_60 = arith.constant 0 : index
    %c0_61 = arith.constant 0 : index
    %c0_62 = arith.constant 0 : index
    %141 = vector.load %arg17[%c0_60, %c0_61, %c0_62] : memref<1x8x32xf32, #tpu.memory_space<vmem>>, vector<1x8x32xf32>
    %142 = vector.shape_cast %141 : vector<1x8x32xf32> to vector<8x32xf32>
    %143 = vector.shape_cast %140 : vector<8x32xf32> to vector<1x8x32xf32>
    tpu.vector_store %arg17[%c0_60, %c0_61, %c0_62], %143 {strides = array<i32>} : memref<1x8x32xf32, #tpu.memory_space<vmem>>, vector<1x8x32xf32>,
    return
  }
  func.func @transform_0(%arg0: i32) -> (i32, i32, i32) {
    %c0_i32 = arith.constant 0 : i32
    %c0_i32_0 = arith.constant 0 : i32
    %c0_i32_1 = arith.constant 0 : i32
    return %arg0, %c0_i32, %c0_i32_0 : i32, i32, i32
  }
  func.func @transform_1(%arg0: i32) -> (i32, i32, i32) {
    %c0_i32 = arith.constant 0 : i32
    %c0_i32_0 = arith.constant 0 : i32
    %c0_i32_1 = arith.constant 0 : i32
    return %arg0, %c0_i32, %c0_i32_0 : i32, i32, i32
  }
  func.func @transform_2(%arg0: i32) -> (i32, i32) {
    %c0_i32 = arith.constant 0 : i32
    %c0_i32_0 = arith.constant 0 : i32
    %c0_i32_1 = arith.constant 0 : i32
    return %c0_i32, %c0_i32_0 : i32, i32
  }
  func.func @transform_3(%arg0: i32) -> (i32, i32) {
    %c0_i32 = arith.constant 0 : i32
    %c0_i32_0 = arith.constant 0 : i32
    %c0_i32_1 = arith.constant 0 : i32
    return %c0_i32, %c0_i32_0 : i32, i32
  }
  func.func @transform_4(%arg0: i32) -> (i32, i32) {
    %c0_i32 = arith.constant 0 : i32
    %c0_i32_0 = arith.constant 0 : i32
    %c0_i32_1 = arith.constant 0 : i32
    return %c0_i32, %c0_i32_0 : i32, i32
  }
  func.func @transform_5(%arg0: i32) -> (i32, i32) {
    %c0_i32 = arith.constant 0 : i32
    %c0_i32_0 = arith.constant 0 : i32
    %c0_i32_1 = arith.constant 0 : i32
    return %c0_i32, %c0_i32_0 : i32, i32
  }
  func.func @transform_6(%arg0: i32) -> (i32, i32) {
    %c0_i32 = arith.constant 0 : i32
    %c0_i32_0 = arith.constant 0 : i32
    %c0_i32_1 = arith.constant 0 : i32
    return %c0_i32, %c0_i32_0 : i32, i32
  }
  func.func @transform_7(%arg0: i32) -> (i32, i32) {
    %c0_i32 = arith.constant 0 : i32
    %c0_i32_0 = arith.constant 0 : i32
    %c0_i32_1 = arith.constant 0 : i32
    return %c0_i32, %c0_i32_0 : i32, i32
  }
  func.func @transform_8(%arg0: i32) -> (i32, i32) {
    %c0_i32 = arith.constant 0 : i32
    %c0_i32_0 = arith.constant 0 : i32
    %c0_i32_1 = arith.constant 0 : i32
    return %c0_i32, %c0_i32_0 : i32, i32
  }
  func.func @transform_9(%arg0: i32) -> (i32, i32) {
    %c0_i32 = arith.constant 0 : i32
    %c0_i32_0 = arith.constant 0 : i32
    %c0_i32_1 = arith.constant 0 : i32
    return %c0_i32, %c0_i32_0 : i32, i32
  }
  func.func @transform_10(%arg0: i32) -> (i32, i32) {
    %c0_i32 = arith.constant 0 : i32
    %c0_i32_0 = arith.constant 0 : i32
    %c0_i32_1 = arith.constant 0 : i32
    return %c0_i32, %c0_i32_0 : i32, i32
  }
  func.func @transform_11(%arg0: i32) -> (i32, i32) {
    %c0_i32 = arith.constant 0 : i32
    %c0_i32_0 = arith.constant 0 : i32
    %c0_i32_1 = arith.constant 0 : i32
    return %c0_i32, %c0_i32_0 : i32, i32
  }
  func.func @transform_12(%arg0: i32) -> (i32, i32) {
    %c0_i32 = arith.constant 0 : i32
    %c0_i32_0 = arith.constant 0 : i32
    %c0_i32_1 = arith.constant 0 : i32
    return %c0_i32, %c0_i32_0 : i32, i32
  }
  func.func @transform_13(%arg0: i32) -> (i32, i32) {
    %c0_i32 = arith.constant 0 : i32
    %c0_i32_0 = arith.constant 0 : i32
    %c0_i32_1 = arith.constant 0 : i32
    return %c0_i32, %c0_i32_0 : i32, i32
  }
  func.func @transform_14(%arg0: i32) -> (i32, i32) {
    %c0_i32 = arith.constant 0 : i32
    %c0_i32_0 = arith.constant 0 : i32
    %c0_i32_1 = arith.constant 0 : i32
    return %c0_i32, %c0_i32_0 : i32, i32
  }
  func.func @transform_15(%arg0: i32) -> (i32, i32) {
    %c0_i32 = arith.constant 0 : i32
    %c0_i32_0 = arith.constant 0 : i32
    %c0_i32_1 = arith.constant 0 : i32
    return %c0_i32, %c0_i32_0 : i32, i32
  }
  func.func @transform_16(%arg0: i32) -> (i32, i32, i32) {
    %c0_i32 = arith.constant 0 : i32
    %c0_i32_0 = arith.constant 0 : i32
    %c0_i32_1 = arith.constant 0 : i32
    return %arg0, %c0_i32, %c0_i32_0 : i32, i32, i32
  }
}

module attributes {stable_mosaic.version = 11 : i64} {
  func.func @_linear_kernel(%arg0: i32, %arg1: i32, %arg2: memref<16x32xf32, #tpu.memory_space<vmem>>, %arg3: memref<32x96xbf16, #tpu.memory_space<vmem>>, %arg4: memref<1x96xf32, #tpu.memory_space<vmem>>, %arg5: memref<16x96xf32, #tpu.memory_space<vmem>>) attributes {dimension_semantics = [#tpu.dimension_semantics<parallel>, #tpu.dimension_semantics<parallel>], iteration_bounds = array<i64: 1, 1>, scalar_prefetch = 0 : i64, scratch_operands = 0 : i64, tpu.core_type = #tpu.core_type<tc>, window_params = [{transform_indices = @transform_0, window_bounds = array<i64: 16, 32>}, {transform_indices = @transform_1, window_bounds = array<i64: 32, 96>}, {transform_indices = @transform_2, window_bounds = array<i64: 1, 96>}, {transform_indices = @transform_3, window_bounds = array<i64: 16, 96>}]} {
    %c0 = arith.constant 0 : index
    %c0_0 = arith.constant 0 : index
    %0 = vector.load %arg2[%c0, %c0_0] : memref<16x32xf32, #tpu.memory_space<vmem>>, vector<16x32xf32>
    %c0_1 = arith.constant 0 : index
    %c0_2 = arith.constant 0 : index
    %1 = vector.load %arg3[%c0_1, %c0_2] : memref<32x96xbf16, #tpu.memory_space<vmem>>, vector<32x96xbf16>
    %2 = arith.truncf %0 : vector<16x32xf32> to vector<16x32xbf16>
    %cst = arith.constant dense<0.000000e+00> : vector<16x96xf32>
    %3 = tpu.matmul %2, %1, %cst {dimension_numbers = #tpu.dot_dimension_numbers<[1], [0], [0], [1], [0, 0, 1, 1], [], []>} : vector<16x32xbf16>, vector<32x96xbf16>, vector<16x96xf32> -> vector<16x96xf32>
    %c0_3 = arith.constant 0 : index
    %c0_4 = arith.constant 0 : index
    %4 = vector.load %arg4[%c0_3, %c0_4] : memref<1x96xf32, #tpu.memory_space<vmem>>, vector<1x96xf32>
    %5 = vector.broadcast %4 : vector<1x96xf32> to vector<16x96xf32>
    %6 = arith.addf %3, %5 : vector<16x96xf32>
    %c0_5 = arith.constant 0 : index
    %c0_6 = arith.constant 0 : index
    %7 = vector.load %arg5[%c0_5, %c0_6] : memref<16x96xf32, #tpu.memory_space<vmem>>, vector<16x96xf32>
    tpu.vector_store %arg5[%c0_5, %c0_6], %6 {strides = array<i32>} : memref<16x96xf32, #tpu.memory_space<vmem>>, vector<16x96xf32>,
    return
  }
  func.func @transform_0(%arg0: i32, %arg1: i32) -> (i32, i32) {
    %c0_i32 = arith.constant 0 : i32
    %c0_i32_0 = arith.constant 0 : i32
    return %arg1, %c0_i32 : i32, i32
  }
  func.func @transform_1(%arg0: i32, %arg1: i32) -> (i32, i32) {
    %c0_i32 = arith.constant 0 : i32
    %c0_i32_0 = arith.constant 0 : i32
    return %c0_i32, %arg0 : i32, i32
  }
  func.func @transform_2(%arg0: i32, %arg1: i32) -> (i32, i32) {
    %c0_i32 = arith.constant 0 : i32
    %c0_i32_0 = arith.constant 0 : i32
    return %c0_i32, %arg0 : i32, i32
  }
  func.func @transform_3(%arg0: i32, %arg1: i32) -> (i32, i32) {
    %c0_i32 = arith.constant 0 : i32
    return %arg1, %arg0 : i32, i32
  }
}

module attributes {stable_mosaic.version = 11 : i64} {
  func.func @_gru_rec_kernel(%arg0: i32, %arg1: i32, %arg2: memref<2x8x96xf32, #tpu.memory_space<vmem>>, %arg3: memref<32x96xbf16, #tpu.memory_space<vmem>>, %arg4: memref<1x96xf32, #tpu.memory_space<vmem>>, %arg5: memref<2x8x32xf32, #tpu.memory_space<vmem>>, %arg6: memref<2x32xf32, #tpu.memory_space<vmem>>) attributes {dimension_semantics = [#tpu.dimension_semantics<parallel>, #tpu.dimension_semantics<arbitrary>], iteration_bounds = array<i64: 1, 1>, scalar_prefetch = 0 : i64, scratch_operands = 1 : i64, tpu.core_type = #tpu.core_type<tc>, window_params = [{transform_indices = @transform_0, window_bounds = array<i64: 2, 8, 96>}, {pipeline_mode = #tpu.pipeline_mode<synchronous>, transform_indices = @transform_1, window_bounds = array<i64: 32, 96>}, {pipeline_mode = #tpu.pipeline_mode<synchronous>, transform_indices = @transform_2, window_bounds = array<i64: 1, 96>}, {transform_indices = @transform_3, window_bounds = array<i64: 2, 8, 32>}]} {
    %c0_i32 = arith.constant 0 : i32
    %0 = arith.cmpi eq, %arg1, %c0_i32 : i32
    %1 = arith.extui %0 : i1 to i32
    %c0_i32_0 = arith.constant 0 : i32
    %2 = arith.cmpi ne, %1, %c0_i32_0 : i32
    scf.if %2 {
      %cst_108 = arith.constant 0.000000e+00 : f32
      %301 = vector.broadcast %cst_108 : f32 to vector<2x32xf32>
      %c0_109 = arith.constant 0 : index
      %c0_110 = arith.constant 0 : index
      %302 = vector.load %arg6[%c0_109, %c0_110] : memref<2x32xf32, #tpu.memory_space<vmem>>, vector<2x32xf32>
      tpu.vector_store %arg6[%c0_109, %c0_110], %301 {strides = array<i32>} : memref<2x32xf32, #tpu.memory_space<vmem>>, vector<2x32xf32>,
    } else {
    }
    %c0 = arith.constant 0 : index
    %c0_1 = arith.constant 0 : index
    %3 = vector.load %arg3[%c0, %c0_1] : memref<32x96xbf16, #tpu.memory_space<vmem>>, vector<32x96xbf16>
    %c0_2 = arith.constant 0 : index
    %c0_3 = arith.constant 0 : index
    %4 = vector.load %arg4[%c0_2, %c0_3] : memref<1x96xf32, #tpu.memory_space<vmem>>, vector<1x96xf32>
    %c0_4 = arith.constant 0 : index
    %c0_5 = arith.constant 0 : index
    %c0_6 = arith.constant 0 : index
    %5 = vector.load %arg2[%c0_4, %c0_5, %c0_6] : memref<2x8x96xf32, #tpu.memory_space<vmem>>, vector<2x1x96xf32>
    %6 = vector.shape_cast %5 : vector<2x1x96xf32> to vector<2x96xf32>
    %c0_7 = arith.constant 0 : index
    %c0_8 = arith.constant 0 : index
    %7 = vector.load %arg6[%c0_7, %c0_8] : memref<2x32xf32, #tpu.memory_space<vmem>>, vector<2x32xf32>
    %8 = arith.truncf %7 : vector<2x32xf32> to vector<2x32xbf16>
    %cst = arith.constant dense<0.000000e+00> : vector<2x96xf32>
    %9 = tpu.matmul %8, %3, %cst {dimension_numbers = #tpu.dot_dimension_numbers<[1], [0], [0], [1], [0, 0, 1, 1], [], []>} : vector<2x32xbf16>, vector<32x96xbf16>, vector<2x96xf32> -> vector<2x96xf32>
    %10 = vector.broadcast %4 : vector<1x96xf32> to vector<2x96xf32>
    %11 = arith.addf %9, %10 : vector<2x96xf32>
    %12 = vector.extract_strided_slice %6 {offsets = [0, 0], sizes = [2, 32], strides = [1, 1]} : vector<2x96xf32> to vector<2x32xf32>
    %13 = vector.extract_strided_slice %11 {offsets = [0, 0], sizes = [2, 32], strides = [1, 1]} : vector<2x96xf32> to vector<2x32xf32>
    %14 = arith.addf %12, %13 : vector<2x32xf32>
    %15 = arith.negf %14 : vector<2x32xf32>
    %16 = math.exp %15 : vector<2x32xf32>
    %cst_9 = arith.constant 1.000000e+00 : f32
    %17 = vector.broadcast %cst_9 : f32 to vector<2x32xf32>
    %18 = arith.addf %17, %16 : vector<2x32xf32>
    %19 = arith.divf %17, %18 : vector<2x32xf32>
    %20 = vector.extract_strided_slice %6 {offsets = [0, 32], sizes = [2, 32], strides = [1, 1]} : vector<2x96xf32> to vector<2x32xf32>
    %21 = vector.extract_strided_slice %11 {offsets = [0, 32], sizes = [2, 32], strides = [1, 1]} : vector<2x96xf32> to vector<2x32xf32>
    %22 = arith.addf %20, %21 : vector<2x32xf32>
    %23 = arith.negf %22 : vector<2x32xf32>
    %24 = math.exp %23 : vector<2x32xf32>
    %cst_10 = arith.constant 1.000000e+00 : f32
    %25 = vector.broadcast %cst_10 : f32 to vector<2x32xf32>
    %26 = arith.addf %25, %24 : vector<2x32xf32>
    %27 = arith.divf %25, %26 : vector<2x32xf32>
    %28 = vector.extract_strided_slice %6 {offsets = [0, 64], sizes = [2, 32], strides = [1, 1]} : vector<2x96xf32> to vector<2x32xf32>
    %29 = vector.extract_strided_slice %11 {offsets = [0, 64], sizes = [2, 32], strides = [1, 1]} : vector<2x96xf32> to vector<2x32xf32>
    %30 = arith.mulf %19, %29 : vector<2x32xf32>
    %31 = arith.addf %28, %30 : vector<2x32xf32>
    %32 = math.tanh %31 : vector<2x32xf32>
    %cst_11 = arith.constant 1.000000e+00 : f32
    %33 = vector.broadcast %cst_11 : f32 to vector<2x32xf32>
    %34 = arith.subf %33, %27 : vector<2x32xf32>
    %35 = arith.mulf %34, %32 : vector<2x32xf32>
    %36 = arith.mulf %27, %7 : vector<2x32xf32>
    %37 = arith.addf %35, %36 : vector<2x32xf32>
    %c0_12 = arith.constant 0 : index
    %c0_13 = arith.constant 0 : index
    %38 = vector.load %arg6[%c0_12, %c0_13] : memref<2x32xf32, #tpu.memory_space<vmem>>, vector<2x32xf32>
    tpu.vector_store %arg6[%c0_12, %c0_13], %37 {strides = array<i32>} : memref<2x32xf32, #tpu.memory_space<vmem>>, vector<2x32xf32>,
    %c0_14 = arith.constant 0 : index
    %c0_15 = arith.constant 0 : index
    %c0_16 = arith.constant 0 : index
    %39 = vector.load %arg5[%c0_14, %c0_15, %c0_16] : memref<2x8x32xf32, #tpu.memory_space<vmem>>, vector<2x1x32xf32>
    %40 = vector.shape_cast %39 : vector<2x1x32xf32> to vector<2x32xf32>
    %41 = vector.shape_cast %37 : vector<2x32xf32> to vector<2x1x32xf32>
    tpu.vector_store %arg5[%c0_14, %c0_15, %c0_16], %41 {strides = array<i32>} : memref<2x8x32xf32, #tpu.memory_space<vmem>>, vector<2x1x32xf32>,
    %c0_17 = arith.constant 0 : index
    %c1 = arith.constant 1 : index
    %c0_18 = arith.constant 0 : index
    %42 = vector.load %arg2[%c0_17, %c1, %c0_18] : memref<2x8x96xf32, #tpu.memory_space<vmem>>, vector<2x1x96xf32>
    %43 = vector.shape_cast %42 : vector<2x1x96xf32> to vector<2x96xf32>
    %c0_19 = arith.constant 0 : index
    %c0_20 = arith.constant 0 : index
    %44 = vector.load %arg6[%c0_19, %c0_20] : memref<2x32xf32, #tpu.memory_space<vmem>>, vector<2x32xf32>
    %45 = arith.truncf %44 : vector<2x32xf32> to vector<2x32xbf16>
    %cst_21 = arith.constant dense<0.000000e+00> : vector<2x96xf32>
    %46 = tpu.matmul %45, %3, %cst_21 {dimension_numbers = #tpu.dot_dimension_numbers<[1], [0], [0], [1], [0, 0, 1, 1], [], []>} : vector<2x32xbf16>, vector<32x96xbf16>, vector<2x96xf32> -> vector<2x96xf32>
    %47 = vector.broadcast %4 : vector<1x96xf32> to vector<2x96xf32>
    %48 = arith.addf %46, %47 : vector<2x96xf32>
    %49 = vector.extract_strided_slice %43 {offsets = [0, 0], sizes = [2, 32], strides = [1, 1]} : vector<2x96xf32> to vector<2x32xf32>
    %50 = vector.extract_strided_slice %48 {offsets = [0, 0], sizes = [2, 32], strides = [1, 1]} : vector<2x96xf32> to vector<2x32xf32>
    %51 = arith.addf %49, %50 : vector<2x32xf32>
    %52 = arith.negf %51 : vector<2x32xf32>
    %53 = math.exp %52 : vector<2x32xf32>
    %cst_22 = arith.constant 1.000000e+00 : f32
    %54 = vector.broadcast %cst_22 : f32 to vector<2x32xf32>
    %55 = arith.addf %54, %53 : vector<2x32xf32>
    %56 = arith.divf %54, %55 : vector<2x32xf32>
    %57 = vector.extract_strided_slice %43 {offsets = [0, 32], sizes = [2, 32], strides = [1, 1]} : vector<2x96xf32> to vector<2x32xf32>
    %58 = vector.extract_strided_slice %48 {offsets = [0, 32], sizes = [2, 32], strides = [1, 1]} : vector<2x96xf32> to vector<2x32xf32>
    %59 = arith.addf %57, %58 : vector<2x32xf32>
    %60 = arith.negf %59 : vector<2x32xf32>
    %61 = math.exp %60 : vector<2x32xf32>
    %cst_23 = arith.constant 1.000000e+00 : f32
    %62 = vector.broadcast %cst_23 : f32 to vector<2x32xf32>
    %63 = arith.addf %62, %61 : vector<2x32xf32>
    %64 = arith.divf %62, %63 : vector<2x32xf32>
    %65 = vector.extract_strided_slice %43 {offsets = [0, 64], sizes = [2, 32], strides = [1, 1]} : vector<2x96xf32> to vector<2x32xf32>
    %66 = vector.extract_strided_slice %48 {offsets = [0, 64], sizes = [2, 32], strides = [1, 1]} : vector<2x96xf32> to vector<2x32xf32>
    %67 = arith.mulf %56, %66 : vector<2x32xf32>
    %68 = arith.addf %65, %67 : vector<2x32xf32>
    %69 = math.tanh %68 : vector<2x32xf32>
    %cst_24 = arith.constant 1.000000e+00 : f32
    %70 = vector.broadcast %cst_24 : f32 to vector<2x32xf32>
    %71 = arith.subf %70, %64 : vector<2x32xf32>
    %72 = arith.mulf %71, %69 : vector<2x32xf32>
    %73 = arith.mulf %64, %44 : vector<2x32xf32>
    %74 = arith.addf %72, %73 : vector<2x32xf32>
    %c0_25 = arith.constant 0 : index
    %c0_26 = arith.constant 0 : index
    %75 = vector.load %arg6[%c0_25, %c0_26] : memref<2x32xf32, #tpu.memory_space<vmem>>, vector<2x32xf32>
    tpu.vector_store %arg6[%c0_25, %c0_26], %74 {strides = array<i32>} : memref<2x32xf32, #tpu.memory_space<vmem>>, vector<2x32xf32>,
    %c0_27 = arith.constant 0 : index
    %c1_28 = arith.constant 1 : index
    %c0_29 = arith.constant 0 : index
    %76 = vector.load %arg5[%c0_27, %c1_28, %c0_29] : memref<2x8x32xf32, #tpu.memory_space<vmem>>, vector<2x1x32xf32>
    %77 = vector.shape_cast %76 : vector<2x1x32xf32> to vector<2x32xf32>
    %78 = vector.shape_cast %74 : vector<2x32xf32> to vector<2x1x32xf32>
    tpu.vector_store %arg5[%c0_27, %c1_28, %c0_29], %78 {strides = array<i32>} : memref<2x8x32xf32, #tpu.memory_space<vmem>>, vector<2x1x32xf32>,
    %c0_30 = arith.constant 0 : index
    %c2 = arith.constant 2 : index
    %c0_31 = arith.constant 0 : index
    %79 = vector.load %arg2[%c0_30, %c2, %c0_31] : memref<2x8x96xf32, #tpu.memory_space<vmem>>, vector<2x1x96xf32>
    %80 = vector.shape_cast %79 : vector<2x1x96xf32> to vector<2x96xf32>
    %c0_32 = arith.constant 0 : index
    %c0_33 = arith.constant 0 : index
    %81 = vector.load %arg6[%c0_32, %c0_33] : memref<2x32xf32, #tpu.memory_space<vmem>>, vector<2x32xf32>
    %82 = arith.truncf %81 : vector<2x32xf32> to vector<2x32xbf16>
    %cst_34 = arith.constant dense<0.000000e+00> : vector<2x96xf32>
    %83 = tpu.matmul %82, %3, %cst_34 {dimension_numbers = #tpu.dot_dimension_numbers<[1], [0], [0], [1], [0, 0, 1, 1], [], []>} : vector<2x32xbf16>, vector<32x96xbf16>, vector<2x96xf32> -> vector<2x96xf32>
    %84 = vector.broadcast %4 : vector<1x96xf32> to vector<2x96xf32>
    %85 = arith.addf %83, %84 : vector<2x96xf32>
    %86 = vector.extract_strided_slice %80 {offsets = [0, 0], sizes = [2, 32], strides = [1, 1]} : vector<2x96xf32> to vector<2x32xf32>
    %87 = vector.extract_strided_slice %85 {offsets = [0, 0], sizes = [2, 32], strides = [1, 1]} : vector<2x96xf32> to vector<2x32xf32>
    %88 = arith.addf %86, %87 : vector<2x32xf32>
    %89 = arith.negf %88 : vector<2x32xf32>
    %90 = math.exp %89 : vector<2x32xf32>
    %cst_35 = arith.constant 1.000000e+00 : f32
    %91 = vector.broadcast %cst_35 : f32 to vector<2x32xf32>
    %92 = arith.addf %91, %90 : vector<2x32xf32>
    %93 = arith.divf %91, %92 : vector<2x32xf32>
    %94 = vector.extract_strided_slice %80 {offsets = [0, 32], sizes = [2, 32], strides = [1, 1]} : vector<2x96xf32> to vector<2x32xf32>
    %95 = vector.extract_strided_slice %85 {offsets = [0, 32], sizes = [2, 32], strides = [1, 1]} : vector<2x96xf32> to vector<2x32xf32>
    %96 = arith.addf %94, %95 : vector<2x32xf32>
    %97 = arith.negf %96 : vector<2x32xf32>
    %98 = math.exp %97 : vector<2x32xf32>
    %cst_36 = arith.constant 1.000000e+00 : f32
    %99 = vector.broadcast %cst_36 : f32 to vector<2x32xf32>
    %100 = arith.addf %99, %98 : vector<2x32xf32>
    %101 = arith.divf %99, %100 : vector<2x32xf32>
    %102 = vector.extract_strided_slice %80 {offsets = [0, 64], sizes = [2, 32], strides = [1, 1]} : vector<2x96xf32> to vector<2x32xf32>
    %103 = vector.extract_strided_slice %85 {offsets = [0, 64], sizes = [2, 32], strides = [1, 1]} : vector<2x96xf32> to vector<2x32xf32>
    %104 = arith.mulf %93, %103 : vector<2x32xf32>
    %105 = arith.addf %102, %104 : vector<2x32xf32>
    %106 = math.tanh %105 : vector<2x32xf32>
    %cst_37 = arith.constant 1.000000e+00 : f32
    %107 = vector.broadcast %cst_37 : f32 to vector<2x32xf32>
    %108 = arith.subf %107, %101 : vector<2x32xf32>
    %109 = arith.mulf %108, %106 : vector<2x32xf32>
    %110 = arith.mulf %101, %81 : vector<2x32xf32>
    %111 = arith.addf %109, %110 : vector<2x32xf32>
    %c0_38 = arith.constant 0 : index
    %c0_39 = arith.constant 0 : index
    %112 = vector.load %arg6[%c0_38, %c0_39] : memref<2x32xf32, #tpu.memory_space<vmem>>, vector<2x32xf32>
    tpu.vector_store %arg6[%c0_38, %c0_39], %111 {strides = array<i32>} : memref<2x32xf32, #tpu.memory_space<vmem>>, vector<2x32xf32>,
    %c0_40 = arith.constant 0 : index
    %c2_41 = arith.constant 2 : index
    %c0_42 = arith.constant 0 : index
    %113 = vector.load %arg5[%c0_40, %c2_41, %c0_42] : memref<2x8x32xf32, #tpu.memory_space<vmem>>, vector<2x1x32xf32>
    %114 = vector.shape_cast %113 : vector<2x1x32xf32> to vector<2x32xf32>
    %115 = vector.shape_cast %111 : vector<2x32xf32> to vector<2x1x32xf32>
    tpu.vector_store %arg5[%c0_40, %c2_41, %c0_42], %115 {strides = array<i32>} : memref<2x8x32xf32, #tpu.memory_space<vmem>>, vector<2x1x32xf32>,
    %c0_43 = arith.constant 0 : index
    %c3 = arith.constant 3 : index
    %c0_44 = arith.constant 0 : index
    %116 = vector.load %arg2[%c0_43, %c3, %c0_44] : memref<2x8x96xf32, #tpu.memory_space<vmem>>, vector<2x1x96xf32>
    %117 = vector.shape_cast %116 : vector<2x1x96xf32> to vector<2x96xf32>
    %c0_45 = arith.constant 0 : index
    %c0_46 = arith.constant 0 : index
    %118 = vector.load %arg6[%c0_45, %c0_46] : memref<2x32xf32, #tpu.memory_space<vmem>>, vector<2x32xf32>
    %119 = arith.truncf %118 : vector<2x32xf32> to vector<2x32xbf16>
    %cst_47 = arith.constant dense<0.000000e+00> : vector<2x96xf32>
    %120 = tpu.matmul %119, %3, %cst_47 {dimension_numbers = #tpu.dot_dimension_numbers<[1], [0], [0], [1], [0, 0, 1, 1], [], []>} : vector<2x32xbf16>, vector<32x96xbf16>, vector<2x96xf32> -> vector<2x96xf32>
    %121 = vector.broadcast %4 : vector<1x96xf32> to vector<2x96xf32>
    %122 = arith.addf %120, %121 : vector<2x96xf32>
    %123 = vector.extract_strided_slice %117 {offsets = [0, 0], sizes = [2, 32], strides = [1, 1]} : vector<2x96xf32> to vector<2x32xf32>
    %124 = vector.extract_strided_slice %122 {offsets = [0, 0], sizes = [2, 32], strides = [1, 1]} : vector<2x96xf32> to vector<2x32xf32>
    %125 = arith.addf %123, %124 : vector<2x32xf32>
    %126 = arith.negf %125 : vector<2x32xf32>
    %127 = math.exp %126 : vector<2x32xf32>
    %cst_48 = arith.constant 1.000000e+00 : f32
    %128 = vector.broadcast %cst_48 : f32 to vector<2x32xf32>
    %129 = arith.addf %128, %127 : vector<2x32xf32>
    %130 = arith.divf %128, %129 : vector<2x32xf32>
    %131 = vector.extract_strided_slice %117 {offsets = [0, 32], sizes = [2, 32], strides = [1, 1]} : vector<2x96xf32> to vector<2x32xf32>
    %132 = vector.extract_strided_slice %122 {offsets = [0, 32], sizes = [2, 32], strides = [1, 1]} : vector<2x96xf32> to vector<2x32xf32>
    %133 = arith.addf %131, %132 : vector<2x32xf32>
    %134 = arith.negf %133 : vector<2x32xf32>
    %135 = math.exp %134 : vector<2x32xf32>
    %cst_49 = arith.constant 1.000000e+00 : f32
    %136 = vector.broadcast %cst_49 : f32 to vector<2x32xf32>
    %137 = arith.addf %136, %135 : vector<2x32xf32>
    %138 = arith.divf %136, %137 : vector<2x32xf32>
    %139 = vector.extract_strided_slice %117 {offsets = [0, 64], sizes = [2, 32], strides = [1, 1]} : vector<2x96xf32> to vector<2x32xf32>
    %140 = vector.extract_strided_slice %122 {offsets = [0, 64], sizes = [2, 32], strides = [1, 1]} : vector<2x96xf32> to vector<2x32xf32>
    %141 = arith.mulf %130, %140 : vector<2x32xf32>
    %142 = arith.addf %139, %141 : vector<2x32xf32>
    %143 = math.tanh %142 : vector<2x32xf32>
    %cst_50 = arith.constant 1.000000e+00 : f32
    %144 = vector.broadcast %cst_50 : f32 to vector<2x32xf32>
    %145 = arith.subf %144, %138 : vector<2x32xf32>
    %146 = arith.mulf %145, %143 : vector<2x32xf32>
    %147 = arith.mulf %138, %118 : vector<2x32xf32>
    %148 = arith.addf %146, %147 : vector<2x32xf32>
    %c0_51 = arith.constant 0 : index
    %c0_52 = arith.constant 0 : index
    %149 = vector.load %arg6[%c0_51, %c0_52] : memref<2x32xf32, #tpu.memory_space<vmem>>, vector<2x32xf32>
    tpu.vector_store %arg6[%c0_51, %c0_52], %148 {strides = array<i32>} : memref<2x32xf32, #tpu.memory_space<vmem>>, vector<2x32xf32>,
    %c0_53 = arith.constant 0 : index
    %c3_54 = arith.constant 3 : index
    %c0_55 = arith.constant 0 : index
    %150 = vector.load %arg5[%c0_53, %c3_54, %c0_55] : memref<2x8x32xf32, #tpu.memory_space<vmem>>, vector<2x1x32xf32>
    %151 = vector.shape_cast %150 : vector<2x1x32xf32> to vector<2x32xf32>
    %152 = vector.shape_cast %148 : vector<2x32xf32> to vector<2x1x32xf32>
    tpu.vector_store %arg5[%c0_53, %c3_54, %c0_55], %152 {strides = array<i32>} : memref<2x8x32xf32, #tpu.memory_space<vmem>>, vector<2x1x32xf32>,
    %c0_56 = arith.constant 0 : index
    %c4 = arith.constant 4 : index
    %c0_57 = arith.constant 0 : index
    %153 = vector.load %arg2[%c0_56, %c4, %c0_57] : memref<2x8x96xf32, #tpu.memory_space<vmem>>, vector<2x1x96xf32>
    %154 = vector.shape_cast %153 : vector<2x1x96xf32> to vector<2x96xf32>
    %c0_58 = arith.constant 0 : index
    %c0_59 = arith.constant 0 : index
    %155 = vector.load %arg6[%c0_58, %c0_59] : memref<2x32xf32, #tpu.memory_space<vmem>>, vector<2x32xf32>
    %156 = arith.truncf %155 : vector<2x32xf32> to vector<2x32xbf16>
    %cst_60 = arith.constant dense<0.000000e+00> : vector<2x96xf32>
    %157 = tpu.matmul %156, %3, %cst_60 {dimension_numbers = #tpu.dot_dimension_numbers<[1], [0], [0], [1], [0, 0, 1, 1], [], []>} : vector<2x32xbf16>, vector<32x96xbf16>, vector<2x96xf32> -> vector<2x96xf32>
    %158 = vector.broadcast %4 : vector<1x96xf32> to vector<2x96xf32>
    %159 = arith.addf %157, %158 : vector<2x96xf32>
    %160 = vector.extract_strided_slice %154 {offsets = [0, 0], sizes = [2, 32], strides = [1, 1]} : vector<2x96xf32> to vector<2x32xf32>
    %161 = vector.extract_strided_slice %159 {offsets = [0, 0], sizes = [2, 32], strides = [1, 1]} : vector<2x96xf32> to vector<2x32xf32>
    %162 = arith.addf %160, %161 : vector<2x32xf32>
    %163 = arith.negf %162 : vector<2x32xf32>
    %164 = math.exp %163 : vector<2x32xf32>
    %cst_61 = arith.constant 1.000000e+00 : f32
    %165 = vector.broadcast %cst_61 : f32 to vector<2x32xf32>
    %166 = arith.addf %165, %164 : vector<2x32xf32>
    %167 = arith.divf %165, %166 : vector<2x32xf32>
    %168 = vector.extract_strided_slice %154 {offsets = [0, 32], sizes = [2, 32], strides = [1, 1]} : vector<2x96xf32> to vector<2x32xf32>
    %169 = vector.extract_strided_slice %159 {offsets = [0, 32], sizes = [2, 32], strides = [1, 1]} : vector<2x96xf32> to vector<2x32xf32>
    %170 = arith.addf %168, %169 : vector<2x32xf32>
    %171 = arith.negf %170 : vector<2x32xf32>
    %172 = math.exp %171 : vector<2x32xf32>
    %cst_62 = arith.constant 1.000000e+00 : f32
    %173 = vector.broadcast %cst_62 : f32 to vector<2x32xf32>
    %174 = arith.addf %173, %172 : vector<2x32xf32>
    %175 = arith.divf %173, %174 : vector<2x32xf32>
    %176 = vector.extract_strided_slice %154 {offsets = [0, 64], sizes = [2, 32], strides = [1, 1]} : vector<2x96xf32> to vector<2x32xf32>
    %177 = vector.extract_strided_slice %159 {offsets = [0, 64], sizes = [2, 32], strides = [1, 1]} : vector<2x96xf32> to vector<2x32xf32>
    %178 = arith.mulf %167, %177 : vector<2x32xf32>
    %179 = arith.addf %176, %178 : vector<2x32xf32>
    %180 = math.tanh %179 : vector<2x32xf32>
    %cst_63 = arith.constant 1.000000e+00 : f32
    %181 = vector.broadcast %cst_63 : f32 to vector<2x32xf32>
    %182 = arith.subf %181, %175 : vector<2x32xf32>
    %183 = arith.mulf %182, %180 : vector<2x32xf32>
    %184 = arith.mulf %175, %155 : vector<2x32xf32>
    %185 = arith.addf %183, %184 : vector<2x32xf32>
    %c0_64 = arith.constant 0 : index
    %c0_65 = arith.constant 0 : index
    %186 = vector.load %arg6[%c0_64, %c0_65] : memref<2x32xf32, #tpu.memory_space<vmem>>, vector<2x32xf32>
    tpu.vector_store %arg6[%c0_64, %c0_65], %185 {strides = array<i32>} : memref<2x32xf32, #tpu.memory_space<vmem>>, vector<2x32xf32>,
    %c0_66 = arith.constant 0 : index
    %c4_67 = arith.constant 4 : index
    %c0_68 = arith.constant 0 : index
    %187 = vector.load %arg5[%c0_66, %c4_67, %c0_68] : memref<2x8x32xf32, #tpu.memory_space<vmem>>, vector<2x1x32xf32>
    %188 = vector.shape_cast %187 : vector<2x1x32xf32> to vector<2x32xf32>
    %189 = vector.shape_cast %185 : vector<2x32xf32> to vector<2x1x32xf32>
    tpu.vector_store %arg5[%c0_66, %c4_67, %c0_68], %189 {strides = array<i32>} : memref<2x8x32xf32, #tpu.memory_space<vmem>>, vector<2x1x32xf32>,
    %c0_69 = arith.constant 0 : index
    %c5 = arith.constant 5 : index
    %c0_70 = arith.constant 0 : index
    %190 = vector.load %arg2[%c0_69, %c5, %c0_70] : memref<2x8x96xf32, #tpu.memory_space<vmem>>, vector<2x1x96xf32>
    %191 = vector.shape_cast %190 : vector<2x1x96xf32> to vector<2x96xf32>
    %c0_71 = arith.constant 0 : index
    %c0_72 = arith.constant 0 : index
    %192 = vector.load %arg6[%c0_71, %c0_72] : memref<2x32xf32, #tpu.memory_space<vmem>>, vector<2x32xf32>
    %193 = arith.truncf %192 : vector<2x32xf32> to vector<2x32xbf16>
    %cst_73 = arith.constant dense<0.000000e+00> : vector<2x96xf32>
    %194 = tpu.matmul %193, %3, %cst_73 {dimension_numbers = #tpu.dot_dimension_numbers<[1], [0], [0], [1], [0, 0, 1, 1], [], []>} : vector<2x32xbf16>, vector<32x96xbf16>, vector<2x96xf32> -> vector<2x96xf32>
    %195 = vector.broadcast %4 : vector<1x96xf32> to vector<2x96xf32>
    %196 = arith.addf %194, %195 : vector<2x96xf32>
    %197 = vector.extract_strided_slice %191 {offsets = [0, 0], sizes = [2, 32], strides = [1, 1]} : vector<2x96xf32> to vector<2x32xf32>
    %198 = vector.extract_strided_slice %196 {offsets = [0, 0], sizes = [2, 32], strides = [1, 1]} : vector<2x96xf32> to vector<2x32xf32>
    %199 = arith.addf %197, %198 : vector<2x32xf32>
    %200 = arith.negf %199 : vector<2x32xf32>
    %201 = math.exp %200 : vector<2x32xf32>
    %cst_74 = arith.constant 1.000000e+00 : f32
    %202 = vector.broadcast %cst_74 : f32 to vector<2x32xf32>
    %203 = arith.addf %202, %201 : vector<2x32xf32>
    %204 = arith.divf %202, %203 : vector<2x32xf32>
    %205 = vector.extract_strided_slice %191 {offsets = [0, 32], sizes = [2, 32], strides = [1, 1]} : vector<2x96xf32> to vector<2x32xf32>
    %206 = vector.extract_strided_slice %196 {offsets = [0, 32], sizes = [2, 32], strides = [1, 1]} : vector<2x96xf32> to vector<2x32xf32>
    %207 = arith.addf %205, %206 : vector<2x32xf32>
    %208 = arith.negf %207 : vector<2x32xf32>
    %209 = math.exp %208 : vector<2x32xf32>
    %cst_75 = arith.constant 1.000000e+00 : f32
    %210 = vector.broadcast %cst_75 : f32 to vector<2x32xf32>
    %211 = arith.addf %210, %209 : vector<2x32xf32>
    %212 = arith.divf %210, %211 : vector<2x32xf32>
    %213 = vector.extract_strided_slice %191 {offsets = [0, 64], sizes = [2, 32], strides = [1, 1]} : vector<2x96xf32> to vector<2x32xf32>
    %214 = vector.extract_strided_slice %196 {offsets = [0, 64], sizes = [2, 32], strides = [1, 1]} : vector<2x96xf32> to vector<2x32xf32>
    %215 = arith.mulf %204, %214 : vector<2x32xf32>
    %216 = arith.addf %213, %215 : vector<2x32xf32>
    %217 = math.tanh %216 : vector<2x32xf32>
    %cst_76 = arith.constant 1.000000e+00 : f32
    %218 = vector.broadcast %cst_76 : f32 to vector<2x32xf32>
    %219 = arith.subf %218, %212 : vector<2x32xf32>
    %220 = arith.mulf %219, %217 : vector<2x32xf32>
    %221 = arith.mulf %212, %192 : vector<2x32xf32>
    %222 = arith.addf %220, %221 : vector<2x32xf32>
    %c0_77 = arith.constant 0 : index
    %c0_78 = arith.constant 0 : index
    %223 = vector.load %arg6[%c0_77, %c0_78] : memref<2x32xf32, #tpu.memory_space<vmem>>, vector<2x32xf32>
    tpu.vector_store %arg6[%c0_77, %c0_78], %222 {strides = array<i32>} : memref<2x32xf32, #tpu.memory_space<vmem>>, vector<2x32xf32>,
    %c0_79 = arith.constant 0 : index
    %c5_80 = arith.constant 5 : index
    %c0_81 = arith.constant 0 : index
    %224 = vector.load %arg5[%c0_79, %c5_80, %c0_81] : memref<2x8x32xf32, #tpu.memory_space<vmem>>, vector<2x1x32xf32>
    %225 = vector.shape_cast %224 : vector<2x1x32xf32> to vector<2x32xf32>
    %226 = vector.shape_cast %222 : vector<2x32xf32> to vector<2x1x32xf32>
    tpu.vector_store %arg5[%c0_79, %c5_80, %c0_81], %226 {strides = array<i32>} : memref<2x8x32xf32, #tpu.memory_space<vmem>>, vector<2x1x32xf32>,
    %c0_82 = arith.constant 0 : index
    %c6 = arith.constant 6 : index
    %c0_83 = arith.constant 0 : index
    %227 = vector.load %arg2[%c0_82, %c6, %c0_83] : memref<2x8x96xf32, #tpu.memory_space<vmem>>, vector<2x1x96xf32>
    %228 = vector.shape_cast %227 : vector<2x1x96xf32> to vector<2x96xf32>
    %c0_84 = arith.constant 0 : index
    %c0_85 = arith.constant 0 : index
    %229 = vector.load %arg6[%c0_84, %c0_85] : memref<2x32xf32, #tpu.memory_space<vmem>>, vector<2x32xf32>
    %230 = arith.truncf %229 : vector<2x32xf32> to vector<2x32xbf16>
    %cst_86 = arith.constant dense<0.000000e+00> : vector<2x96xf32>
    %231 = tpu.matmul %230, %3, %cst_86 {dimension_numbers = #tpu.dot_dimension_numbers<[1], [0], [0], [1], [0, 0, 1, 1], [], []>} : vector<2x32xbf16>, vector<32x96xbf16>, vector<2x96xf32> -> vector<2x96xf32>
    %232 = vector.broadcast %4 : vector<1x96xf32> to vector<2x96xf32>
    %233 = arith.addf %231, %232 : vector<2x96xf32>
    %234 = vector.extract_strided_slice %228 {offsets = [0, 0], sizes = [2, 32], strides = [1, 1]} : vector<2x96xf32> to vector<2x32xf32>
    %235 = vector.extract_strided_slice %233 {offsets = [0, 0], sizes = [2, 32], strides = [1, 1]} : vector<2x96xf32> to vector<2x32xf32>
    %236 = arith.addf %234, %235 : vector<2x32xf32>
    %237 = arith.negf %236 : vector<2x32xf32>
    %238 = math.exp %237 : vector<2x32xf32>
    %cst_87 = arith.constant 1.000000e+00 : f32
    %239 = vector.broadcast %cst_87 : f32 to vector<2x32xf32>
    %240 = arith.addf %239, %238 : vector<2x32xf32>
    %241 = arith.divf %239, %240 : vector<2x32xf32>
    %242 = vector.extract_strided_slice %228 {offsets = [0, 32], sizes = [2, 32], strides = [1, 1]} : vector<2x96xf32> to vector<2x32xf32>
    %243 = vector.extract_strided_slice %233 {offsets = [0, 32], sizes = [2, 32], strides = [1, 1]} : vector<2x96xf32> to vector<2x32xf32>
    %244 = arith.addf %242, %243 : vector<2x32xf32>
    %245 = arith.negf %244 : vector<2x32xf32>
    %246 = math.exp %245 : vector<2x32xf32>
    %cst_88 = arith.constant 1.000000e+00 : f32
    %247 = vector.broadcast %cst_88 : f32 to vector<2x32xf32>
    %248 = arith.addf %247, %246 : vector<2x32xf32>
    %249 = arith.divf %247, %248 : vector<2x32xf32>
    %250 = vector.extract_strided_slice %228 {offsets = [0, 64], sizes = [2, 32], strides = [1, 1]} : vector<2x96xf32> to vector<2x32xf32>
    %251 = vector.extract_strided_slice %233 {offsets = [0, 64], sizes = [2, 32], strides = [1, 1]} : vector<2x96xf32> to vector<2x32xf32>
    %252 = arith.mulf %241, %251 : vector<2x32xf32>
    %253 = arith.addf %250, %252 : vector<2x32xf32>
    %254 = math.tanh %253 : vector<2x32xf32>
    %cst_89 = arith.constant 1.000000e+00 : f32
    %255 = vector.broadcast %cst_89 : f32 to vector<2x32xf32>
    %256 = arith.subf %255, %249 : vector<2x32xf32>
    %257 = arith.mulf %256, %254 : vector<2x32xf32>
    %258 = arith.mulf %249, %229 : vector<2x32xf32>
    %259 = arith.addf %257, %258 : vector<2x32xf32>
    %c0_90 = arith.constant 0 : index
    %c0_91 = arith.constant 0 : index
    %260 = vector.load %arg6[%c0_90, %c0_91] : memref<2x32xf32, #tpu.memory_space<vmem>>, vector<2x32xf32>
    tpu.vector_store %arg6[%c0_90, %c0_91], %259 {strides = array<i32>} : memref<2x32xf32, #tpu.memory_space<vmem>>, vector<2x32xf32>,
    %c0_92 = arith.constant 0 : index
    %c6_93 = arith.constant 6 : index
    %c0_94 = arith.constant 0 : index
    %261 = vector.load %arg5[%c0_92, %c6_93, %c0_94] : memref<2x8x32xf32, #tpu.memory_space<vmem>>, vector<2x1x32xf32>
    %262 = vector.shape_cast %261 : vector<2x1x32xf32> to vector<2x32xf32>
    %263 = vector.shape_cast %259 : vector<2x32xf32> to vector<2x1x32xf32>
    tpu.vector_store %arg5[%c0_92, %c6_93, %c0_94], %263 {strides = array<i32>} : memref<2x8x32xf32, #tpu.memory_space<vmem>>, vector<2x1x32xf32>,
    %c0_95 = arith.constant 0 : index
    %c7 = arith.constant 7 : index
    %c0_96 = arith.constant 0 : index
    %264 = vector.load %arg2[%c0_95, %c7, %c0_96] : memref<2x8x96xf32, #tpu.memory_space<vmem>>, vector<2x1x96xf32>
    %265 = vector.shape_cast %264 : vector<2x1x96xf32> to vector<2x96xf32>
    %c0_97 = arith.constant 0 : index
    %c0_98 = arith.constant 0 : index
    %266 = vector.load %arg6[%c0_97, %c0_98] : memref<2x32xf32, #tpu.memory_space<vmem>>, vector<2x32xf32>
    %267 = arith.truncf %266 : vector<2x32xf32> to vector<2x32xbf16>
    %cst_99 = arith.constant dense<0.000000e+00> : vector<2x96xf32>
    %268 = tpu.matmul %267, %3, %cst_99 {dimension_numbers = #tpu.dot_dimension_numbers<[1], [0], [0], [1], [0, 0, 1, 1], [], []>} : vector<2x32xbf16>, vector<32x96xbf16>, vector<2x96xf32> -> vector<2x96xf32>
    %269 = vector.broadcast %4 : vector<1x96xf32> to vector<2x96xf32>
    %270 = arith.addf %268, %269 : vector<2x96xf32>
    %271 = vector.extract_strided_slice %265 {offsets = [0, 0], sizes = [2, 32], strides = [1, 1]} : vector<2x96xf32> to vector<2x32xf32>
    %272 = vector.extract_strided_slice %270 {offsets = [0, 0], sizes = [2, 32], strides = [1, 1]} : vector<2x96xf32> to vector<2x32xf32>
    %273 = arith.addf %271, %272 : vector<2x32xf32>
    %274 = arith.negf %273 : vector<2x32xf32>
    %275 = math.exp %274 : vector<2x32xf32>
    %cst_100 = arith.constant 1.000000e+00 : f32
    %276 = vector.broadcast %cst_100 : f32 to vector<2x32xf32>
    %277 = arith.addf %276, %275 : vector<2x32xf32>
    %278 = arith.divf %276, %277 : vector<2x32xf32>
    %279 = vector.extract_strided_slice %265 {offsets = [0, 32], sizes = [2, 32], strides = [1, 1]} : vector<2x96xf32> to vector<2x32xf32>
    %280 = vector.extract_strided_slice %270 {offsets = [0, 32], sizes = [2, 32], strides = [1, 1]} : vector<2x96xf32> to vector<2x32xf32>
    %281 = arith.addf %279, %280 : vector<2x32xf32>
    %282 = arith.negf %281 : vector<2x32xf32>
    %283 = math.exp %282 : vector<2x32xf32>
    %cst_101 = arith.constant 1.000000e+00 : f32
    %284 = vector.broadcast %cst_101 : f32 to vector<2x32xf32>
    %285 = arith.addf %284, %283 : vector<2x32xf32>
    %286 = arith.divf %284, %285 : vector<2x32xf32>
    %287 = vector.extract_strided_slice %265 {offsets = [0, 64], sizes = [2, 32], strides = [1, 1]} : vector<2x96xf32> to vector<2x32xf32>
    %288 = vector.extract_strided_slice %270 {offsets = [0, 64], sizes = [2, 32], strides = [1, 1]} : vector<2x96xf32> to vector<2x32xf32>
    %289 = arith.mulf %278, %288 : vector<2x32xf32>
    %290 = arith.addf %287, %289 : vector<2x32xf32>
    %291 = math.tanh %290 : vector<2x32xf32>
    %cst_102 = arith.constant 1.000000e+00 : f32
    %292 = vector.broadcast %cst_102 : f32 to vector<2x32xf32>
    %293 = arith.subf %292, %286 : vector<2x32xf32>
    %294 = arith.mulf %293, %291 : vector<2x32xf32>
    %295 = arith.mulf %286, %266 : vector<2x32xf32>
    %296 = arith.addf %294, %295 : vector<2x32xf32>
    %c0_103 = arith.constant 0 : index
    %c0_104 = arith.constant 0 : index
    %297 = vector.load %arg6[%c0_103, %c0_104] : memref<2x32xf32, #tpu.memory_space<vmem>>, vector<2x32xf32>
    tpu.vector_store %arg6[%c0_103, %c0_104], %296 {strides = array<i32>} : memref<2x32xf32, #tpu.memory_space<vmem>>, vector<2x32xf32>,
    %c0_105 = arith.constant 0 : index
    %c7_106 = arith.constant 7 : index
    %c0_107 = arith.constant 0 : index
    %298 = vector.load %arg5[%c0_105, %c7_106, %c0_107] : memref<2x8x32xf32, #tpu.memory_space<vmem>>, vector<2x1x32xf32>
    %299 = vector.shape_cast %298 : vector<2x1x32xf32> to vector<2x32xf32>
    %300 = vector.shape_cast %296 : vector<2x32xf32> to vector<2x1x32xf32>
    tpu.vector_store %arg5[%c0_105, %c7_106, %c0_107], %300 {strides = array<i32>} : memref<2x8x32xf32, #tpu.memory_space<vmem>>, vector<2x1x32xf32>,
    return
  }
  func.func @transform_0(%arg0: i32, %arg1: i32) -> (i32, i32, i32) {
    %c0_i32 = arith.constant 0 : i32
    %c0_i32_0 = arith.constant 0 : i32
    return %arg0, %arg1, %c0_i32 : i32, i32, i32
  }
  func.func @transform_1(%arg0: i32, %arg1: i32) -> (i32, i32) {
    %c0_i32 = arith.constant 0 : i32
    %c0_i32_0 = arith.constant 0 : i32
    %c0_i32_1 = arith.constant 0 : i32
    return %c0_i32, %c0_i32_0 : i32, i32
  }
  func.func @transform_2(%arg0: i32, %arg1: i32) -> (i32, i32) {
    %c0_i32 = arith.constant 0 : i32
    %c0_i32_0 = arith.constant 0 : i32
    %c0_i32_1 = arith.constant 0 : i32
    return %c0_i32, %c0_i32_0 : i32, i32
  }
  func.func @transform_3(%arg0: i32, %arg1: i32) -> (i32, i32, i32) {
    %c0_i32 = arith.constant 0 : i32
    %c0_i32_0 = arith.constant 0 : i32
    return %arg0, %arg1, %c0_i32 : i32, i32, i32
  }
}

module attributes {stable_mosaic.version = 11 : i64} {
  func.func @_linear_kernel(%arg0: i32, %arg1: i32, %arg2: memref<16x32xf32, #tpu.memory_space<vmem>>, %arg3: memref<32x5xbf16, #tpu.memory_space<vmem>>, %arg4: memref<1x5xf32, #tpu.memory_space<vmem>>, %arg5: memref<16x5xf32, #tpu.memory_space<vmem>>) attributes {dimension_semantics = [#tpu.dimension_semantics<parallel>, #tpu.dimension_semantics<parallel>], iteration_bounds = array<i64: 1, 1>, scalar_prefetch = 0 : i64, scratch_operands = 0 : i64, tpu.core_type = #tpu.core_type<tc>, window_params = [{transform_indices = @transform_0, window_bounds = array<i64: 16, 32>}, {transform_indices = @transform_1, window_bounds = array<i64: 32, 5>}, {transform_indices = @transform_2, window_bounds = array<i64: 1, 5>}, {transform_indices = @transform_3, window_bounds = array<i64: 16, 5>}]} {
    %c0 = arith.constant 0 : index
    %c0_0 = arith.constant 0 : index
    %0 = vector.load %arg2[%c0, %c0_0] : memref<16x32xf32, #tpu.memory_space<vmem>>, vector<16x32xf32>
    %c0_1 = arith.constant 0 : index
    %c0_2 = arith.constant 0 : index
    %1 = vector.load %arg3[%c0_1, %c0_2] : memref<32x5xbf16, #tpu.memory_space<vmem>>, vector<32x5xbf16>
    %2 = arith.truncf %0 : vector<16x32xf32> to vector<16x32xbf16>
    %cst = arith.constant dense<0.000000e+00> : vector<16x5xf32>
    %3 = tpu.matmul %2, %1, %cst {dimension_numbers = #tpu.dot_dimension_numbers<[1], [0], [0], [1], [0, 0, 1, 1], [], []>} : vector<16x32xbf16>, vector<32x5xbf16>, vector<16x5xf32> -> vector<16x5xf32>
    %c0_3 = arith.constant 0 : index
    %c0_4 = arith.constant 0 : index
    %4 = vector.load %arg4[%c0_3, %c0_4] : memref<1x5xf32, #tpu.memory_space<vmem>>, vector<1x5xf32>
    %5 = vector.broadcast %4 : vector<1x5xf32> to vector<16x5xf32>
    %6 = arith.addf %3, %5 : vector<16x5xf32>
    %c0_5 = arith.constant 0 : index
    %c0_6 = arith.constant 0 : index
    %7 = vector.load %arg5[%c0_5, %c0_6] : memref<16x5xf32, #tpu.memory_space<vmem>>, vector<16x5xf32>
    tpu.vector_store %arg5[%c0_5, %c0_6], %6 {strides = array<i32>} : memref<16x5xf32, #tpu.memory_space<vmem>>, vector<16x5xf32>,
    return
  }
  func.func @transform_0(%arg0: i32, %arg1: i32) -> (i32, i32) {
    %c0_i32 = arith.constant 0 : i32
    %c0_i32_0 = arith.constant 0 : i32
    return %arg1, %c0_i32 : i32, i32
  }
  func.func @transform_1(%arg0: i32, %arg1: i32) -> (i32, i32) {
    %c0_i32 = arith.constant 0 : i32
    %c0_i32_0 = arith.constant 0 : i32
    return %c0_i32, %arg0 : i32, i32
  }
  func.func @transform_2(%arg0: i32, %arg1: i32) -> (i32, i32) {
    %c0_i32 = arith.constant 0 : i32
    %c0_i32_0 = arith.constant 0 : i32
    return %c0_i32, %arg0 : i32, i32
  }
  func.func @transform_3(%arg0: i32, %arg1: i32) -> (i32, i32) {
    %c0_i32 = arith.constant 0 : i32
    return %arg1, %arg0 : i32, i32
  }
}

module attributes {stable_mosaic.version = 11 : i64} {
  func.func @_combine_kernel(%arg0: i32, %arg1: memref<1x8x32xf32, #tpu.memory_space<vmem>>, %arg2: memref<1x8x32xf32, #tpu.memory_space<vmem>>, %arg3: memref<1x8x24xf32, #tpu.memory_space<vmem>>, %arg4: memref<1x1x16xf32, #tpu.memory_space<vmem>>, %arg5: memref<1x32xf32, #tpu.memory_space<vmem>>, %arg6: memref<1x32xf32, #tpu.memory_space<vmem>>, %arg7: memref<24x32xbf16, #tpu.memory_space<vmem>>, %arg8: memref<1x32xf32, #tpu.memory_space<vmem>>, %arg9: memref<1x32xf32, #tpu.memory_space<vmem>>, %arg10: memref<1x32xf32, #tpu.memory_space<vmem>>, %arg11: memref<16x32xbf16, #tpu.memory_space<vmem>>, %arg12: memref<1x32xf32, #tpu.memory_space<vmem>>, %arg13: memref<1x32xf32, #tpu.memory_space<vmem>>, %arg14: memref<1x32xf32, #tpu.memory_space<vmem>>, %arg15: memref<1x8x32xf32, #tpu.memory_space<vmem>>) attributes {dimension_semantics = [#tpu.dimension_semantics<parallel>], iteration_bounds = array<i64: 2>, scalar_prefetch = 0 : i64, scratch_operands = 0 : i64, tpu.core_type = #tpu.core_type<tc>, window_params = [{transform_indices = @transform_0, window_bounds = array<i64: 1, 8, 32>}, {transform_indices = @transform_1, window_bounds = array<i64: 1, 8, 32>}, {transform_indices = @transform_2, window_bounds = array<i64: 1, 8, 24>}, {transform_indices = @transform_3, window_bounds = array<i64: 1, 1, 16>}, {pipeline_mode = #tpu.pipeline_mode<synchronous>, transform_indices = @transform_4, window_bounds = array<i64: 1, 32>}, {pipeline_mode = #tpu.pipeline_mode<synchronous>, transform_indices = @transform_5, window_bounds = array<i64: 1, 32>}, {pipeline_mode = #tpu.pipeline_mode<synchronous>, transform_indices = @transform_6, window_bounds = array<i64: 24, 32>}, {pipeline_mode = #tpu.pipeline_mode<synchronous>, transform_indices = @transform_7, window_bounds = array<i64: 1, 32>}, {pipeline_mode = #tpu.pipeline_mode<synchronous>, transform_indices = @transform_8, window_bounds = array<i64: 1, 32>}, {pipeline_mode = #tpu.pipeline_mode<synchronous>, transform_indices = @transform_9, window_bounds = array<i64: 1, 32>}, {pipeline_mode = #tpu.pipeline_mode<synchronous>, transform_indices = @transform_10, window_bounds = array<i64: 16, 32>}, {pipeline_mode = #tpu.pipeline_mode<synchronous>, transform_indices = @transform_11, window_bounds = array<i64: 1, 32>}, {pipeline_mode = #tpu.pipeline_mode<synchronous>, transform_indices = @transform_12, window_bounds = array<i64: 1, 32>}, {pipeline_mode = #tpu.pipeline_mode<synchronous>, transform_indices = @transform_13, window_bounds = array<i64: 1, 32>}, {transform_indices = @transform_14, window_bounds = array<i64: 1, 8, 32>}]} {
    %c0 = arith.constant 0 : index
    %c0_0 = arith.constant 0 : index
    %c0_1 = arith.constant 0 : index
    %0 = vector.load %arg1[%c0, %c0_0, %c0_1] : memref<1x8x32xf32, #tpu.memory_space<vmem>>, vector<1x8x32xf32>
    %1 = vector.shape_cast %0 : vector<1x8x32xf32> to vector<8x32xf32>
    %c0_2 = arith.constant 0 : index
    %c0_3 = arith.constant 0 : index
    %2 = vector.load %arg5[%c0_2, %c0_3] : memref<1x32xf32, #tpu.memory_space<vmem>>, vector<1x32xf32>
    %c0_4 = arith.constant 0 : index
    %c0_5 = arith.constant 0 : index
    %3 = vector.load %arg6[%c0_4, %c0_5] : memref<1x32xf32, #tpu.memory_space<vmem>>, vector<1x32xf32>
    %cst = arith.constant dense<0.000000e+00> : vector<8xf32>
    %4 = vector.multi_reduction <add>, %1, %cst [1] : vector<8x32xf32> to vector<8xf32>
    %5 = vector.shape_cast %4 : vector<8xf32> to vector<8x1xf32>
    %cst_6 = arith.constant 3.200000e+01 : f32
    %6 = vector.broadcast %cst_6 : f32 to vector<8x1xf32>
    %7 = arith.divf %5, %6 : vector<8x1xf32>
    %8 = vector.broadcast %7 : vector<8x1xf32> to vector<8x32xf32>
    %9 = arith.subf %1, %8 : vector<8x32xf32>
    %10 = arith.mulf %9, %9 : vector<8x32xf32>
    %cst_7 = arith.constant dense<0.000000e+00> : vector<8xf32>
    %11 = vector.multi_reduction <add>, %10, %cst_7 [1] : vector<8x32xf32> to vector<8xf32>
    %12 = vector.shape_cast %11 : vector<8xf32> to vector<8x1xf32>
    %cst_8 = arith.constant 3.200000e+01 : f32
    %13 = vector.broadcast %cst_8 : f32 to vector<8x1xf32>
    %14 = arith.divf %12, %13 : vector<8x1xf32>
    %15 = vector.broadcast %7 : vector<8x1xf32> to vector<8x32xf32>
    %16 = arith.subf %1, %15 : vector<8x32xf32>
    %cst_9 = arith.constant 9.99999993E-9 : f32
    %17 = vector.broadcast %cst_9 : f32 to vector<8x1xf32>
    %18 = arith.addf %14, %17 : vector<8x1xf32>
    %19 = math.rsqrt %18 : vector<8x1xf32>
    %20 = vector.broadcast %19 : vector<8x1xf32> to vector<8x32xf32>
    %21 = arith.mulf %16, %20 : vector<8x32xf32>
    %22 = vector.broadcast %2 : vector<1x32xf32> to vector<8x32xf32>
    %23 = arith.mulf %21, %22 : vector<8x32xf32>
    %24 = vector.broadcast %3 : vector<1x32xf32> to vector<8x32xf32>
    %25 = arith.addf %23, %24 : vector<8x32xf32>
    %c0_10 = arith.constant 0 : index
    %c0_11 = arith.constant 0 : index
    %c0_12 = arith.constant 0 : index
    %26 = vector.load %arg2[%c0_10, %c0_11, %c0_12] : memref<1x8x32xf32, #tpu.memory_space<vmem>>, vector<1x8x32xf32>
    %27 = vector.shape_cast %26 : vector<1x8x32xf32> to vector<8x32xf32>
    %c0_13 = arith.constant 0 : index
    %c0_14 = arith.constant 0 : index
    %28 = vector.load %arg5[%c0_13, %c0_14] : memref<1x32xf32, #tpu.memory_space<vmem>>, vector<1x32xf32>
    %c0_15 = arith.constant 0 : index
    %c0_16 = arith.constant 0 : index
    %29 = vector.load %arg6[%c0_15, %c0_16] : memref<1x32xf32, #tpu.memory_space<vmem>>, vector<1x32xf32>
    %cst_17 = arith.constant dense<0.000000e+00> : vector<8xf32>
    %30 = vector.multi_reduction <add>, %27, %cst_17 [1] : vector<8x32xf32> to vector<8xf32>
    %31 = vector.shape_cast %30 : vector<8xf32> to vector<8x1xf32>
    %cst_18 = arith.constant 3.200000e+01 : f32
    %32 = vector.broadcast %cst_18 : f32 to vector<8x1xf32>
    %33 = arith.divf %31, %32 : vector<8x1xf32>
    %34 = vector.broadcast %33 : vector<8x1xf32> to vector<8x32xf32>
    %35 = arith.subf %27, %34 : vector<8x32xf32>
    %36 = arith.mulf %35, %35 : vector<8x32xf32>
    %cst_19 = arith.constant dense<0.000000e+00> : vector<8xf32>
    %37 = vector.multi_reduction <add>, %36, %cst_19 [1] : vector<8x32xf32> to vector<8xf32>
    %38 = vector.shape_cast %37 : vector<8xf32> to vector<8x1xf32>
    %cst_20 = arith.constant 3.200000e+01 : f32
    %39 = vector.broadcast %cst_20 : f32 to vector<8x1xf32>
    %40 = arith.divf %38, %39 : vector<8x1xf32>
    %41 = vector.broadcast %33 : vector<8x1xf32> to vector<8x32xf32>
    %42 = arith.subf %27, %41 : vector<8x32xf32>
    %cst_21 = arith.constant 9.99999993E-9 : f32
    %43 = vector.broadcast %cst_21 : f32 to vector<8x1xf32>
    %44 = arith.addf %40, %43 : vector<8x1xf32>
    %45 = math.rsqrt %44 : vector<8x1xf32>
    %46 = vector.broadcast %45 : vector<8x1xf32> to vector<8x32xf32>
    %47 = arith.mulf %42, %46 : vector<8x32xf32>
    %48 = vector.broadcast %28 : vector<1x32xf32> to vector<8x32xf32>
    %49 = arith.mulf %47, %48 : vector<8x32xf32>
    %50 = vector.broadcast %29 : vector<1x32xf32> to vector<8x32xf32>
    %51 = arith.addf %49, %50 : vector<8x32xf32>
    %c0_22 = arith.constant 0 : index
    %c0_23 = arith.constant 0 : index
    %c0_24 = arith.constant 0 : index
    %52 = vector.load %arg3[%c0_22, %c0_23, %c0_24] : memref<1x8x24xf32, #tpu.memory_space<vmem>>, vector<1x8x24xf32>
    %53 = vector.shape_cast %52 : vector<1x8x24xf32> to vector<8x24xf32>
    %c0_25 = arith.constant 0 : index
    %c0_26 = arith.constant 0 : index
    %54 = vector.load %arg7[%c0_25, %c0_26] : memref<24x32xbf16, #tpu.memory_space<vmem>>, vector<24x32xbf16>
    %55 = arith.truncf %53 : vector<8x24xf32> to vector<8x24xbf16>
    %cst_27 = arith.constant dense<0.000000e+00> : vector<8x32xf32>
    %56 = tpu.matmul %55, %54, %cst_27 {dimension_numbers = #tpu.dot_dimension_numbers<[1], [0], [0], [1], [0, 0, 1, 1], [], []>} : vector<8x24xbf16>, vector<24x32xbf16>, vector<8x32xf32> -> vector<8x32xf32>
    %c0_28 = arith.constant 0 : index
    %c0_29 = arith.constant 0 : index
    %57 = vector.load %arg8[%c0_28, %c0_29] : memref<1x32xf32, #tpu.memory_space<vmem>>, vector<1x32xf32>
    %58 = vector.broadcast %57 : vector<1x32xf32> to vector<8x32xf32>
    %59 = arith.addf %56, %58 : vector<8x32xf32>
    %c0_30 = arith.constant 0 : index
    %c0_31 = arith.constant 0 : index
    %60 = vector.load %arg9[%c0_30, %c0_31] : memref<1x32xf32, #tpu.memory_space<vmem>>, vector<1x32xf32>
    %c0_32 = arith.constant 0 : index
    %c0_33 = arith.constant 0 : index
    %61 = vector.load %arg10[%c0_32, %c0_33] : memref<1x32xf32, #tpu.memory_space<vmem>>, vector<1x32xf32>
    %cst_34 = arith.constant dense<0.000000e+00> : vector<8xf32>
    %62 = vector.multi_reduction <add>, %59, %cst_34 [1] : vector<8x32xf32> to vector<8xf32>
    %63 = vector.shape_cast %62 : vector<8xf32> to vector<8x1xf32>
    %cst_35 = arith.constant 3.200000e+01 : f32
    %64 = vector.broadcast %cst_35 : f32 to vector<8x1xf32>
    %65 = arith.divf %63, %64 : vector<8x1xf32>
    %66 = vector.broadcast %65 : vector<8x1xf32> to vector<8x32xf32>
    %67 = arith.subf %59, %66 : vector<8x32xf32>
    %68 = arith.mulf %67, %67 : vector<8x32xf32>
    %cst_36 = arith.constant dense<0.000000e+00> : vector<8xf32>
    %69 = vector.multi_reduction <add>, %68, %cst_36 [1] : vector<8x32xf32> to vector<8xf32>
    %70 = vector.shape_cast %69 : vector<8xf32> to vector<8x1xf32>
    %cst_37 = arith.constant 3.200000e+01 : f32
    %71 = vector.broadcast %cst_37 : f32 to vector<8x1xf32>
    %72 = arith.divf %70, %71 : vector<8x1xf32>
    %73 = vector.broadcast %65 : vector<8x1xf32> to vector<8x32xf32>
    %74 = arith.subf %59, %73 : vector<8x32xf32>
    %cst_38 = arith.constant 9.99999993E-9 : f32
    %75 = vector.broadcast %cst_38 : f32 to vector<8x1xf32>
    %76 = arith.addf %72, %75 : vector<8x1xf32>
    %77 = math.rsqrt %76 : vector<8x1xf32>
    %78 = vector.broadcast %77 : vector<8x1xf32> to vector<8x32xf32>
    %79 = arith.mulf %74, %78 : vector<8x32xf32>
    %80 = vector.broadcast %60 : vector<1x32xf32> to vector<8x32xf32>
    %81 = arith.mulf %79, %80 : vector<8x32xf32>
    %82 = vector.broadcast %61 : vector<1x32xf32> to vector<8x32xf32>
    %83 = arith.addf %81, %82 : vector<8x32xf32>
    %c0_39 = arith.constant 0 : index
    %c0_40 = arith.constant 0 : index
    %c0_41 = arith.constant 0 : index
    %84 = vector.load %arg4[%c0_39, %c0_40, %c0_41] : memref<1x1x16xf32, #tpu.memory_space<vmem>>, vector<1x1x16xf32>
    %85 = vector.shape_cast %84 : vector<1x1x16xf32> to vector<1x16xf32>
    %c0_42 = arith.constant 0 : index
    %c0_43 = arith.constant 0 : index
    %86 = vector.load %arg11[%c0_42, %c0_43] : memref<16x32xbf16, #tpu.memory_space<vmem>>, vector<16x32xbf16>
    %87 = arith.truncf %85 : vector<1x16xf32> to vector<1x16xbf16>
    %cst_44 = arith.constant dense<0.000000e+00> : vector<1x32xf32>
    %88 = tpu.matmul %87, %86, %cst_44 {dimension_numbers = #tpu.dot_dimension_numbers<[1], [0], [0], [1], [0, 0, 1, 1], [], []>} : vector<1x16xbf16>, vector<16x32xbf16>, vector<1x32xf32> -> vector<1x32xf32>
    %c0_45 = arith.constant 0 : index
    %c0_46 = arith.constant 0 : index
    %89 = vector.load %arg12[%c0_45, %c0_46] : memref<1x32xf32, #tpu.memory_space<vmem>>, vector<1x32xf32>
    %90 = arith.addf %88, %89 : vector<1x32xf32>
    %c0_47 = arith.constant 0 : index
    %c0_48 = arith.constant 0 : index
    %91 = vector.load %arg13[%c0_47, %c0_48] : memref<1x32xf32, #tpu.memory_space<vmem>>, vector<1x32xf32>
    %c0_49 = arith.constant 0 : index
    %c0_50 = arith.constant 0 : index
    %92 = vector.load %arg14[%c0_49, %c0_50] : memref<1x32xf32, #tpu.memory_space<vmem>>, vector<1x32xf32>
    %cst_51 = arith.constant dense<0.000000e+00> : vector<1xf32>
    %93 = vector.multi_reduction <add>, %90, %cst_51 [1] : vector<1x32xf32> to vector<1xf32>
    %94 = vector.shape_cast %93 : vector<1xf32> to vector<1x1xf32>
    %cst_52 = arith.constant 3.200000e+01 : f32
    %95 = vector.broadcast %cst_52 : f32 to vector<1x1xf32>
    %96 = arith.divf %94, %95 : vector<1x1xf32>
    %97 = vector.broadcast %96 : vector<1x1xf32> to vector<1x32xf32>
    %98 = arith.subf %90, %97 : vector<1x32xf32>
    %99 = arith.mulf %98, %98 : vector<1x32xf32>
    %cst_53 = arith.constant dense<0.000000e+00> : vector<1xf32>
    %100 = vector.multi_reduction <add>, %99, %cst_53 [1] : vector<1x32xf32> to vector<1xf32>
    %101 = vector.shape_cast %100 : vector<1xf32> to vector<1x1xf32>
    %cst_54 = arith.constant 3.200000e+01 : f32
    %102 = vector.broadcast %cst_54 : f32 to vector<1x1xf32>
    %103 = arith.divf %101, %102 : vector<1x1xf32>
    %104 = vector.broadcast %96 : vector<1x1xf32> to vector<1x32xf32>
    %105 = arith.subf %90, %104 : vector<1x32xf32>
    %cst_55 = arith.constant 9.99999993E-9 : f32
    %106 = vector.broadcast %cst_55 : f32 to vector<1x1xf32>
    %107 = arith.addf %103, %106 : vector<1x1xf32>
    %108 = math.rsqrt %107 : vector<1x1xf32>
    %109 = vector.broadcast %108 : vector<1x1xf32> to vector<1x32xf32>
    %110 = arith.mulf %105, %109 : vector<1x32xf32>
    %111 = arith.mulf %110, %91 : vector<1x32xf32>
    %112 = arith.addf %111, %92 : vector<1x32xf32>
    %113 = arith.addf %25, %51 : vector<8x32xf32>
    %114 = arith.addf %113, %83 : vector<8x32xf32>
    %115 = vector.broadcast %112 : vector<1x32xf32> to vector<8x32xf32>
    %116 = arith.addf %114, %115 : vector<8x32xf32>
    %c0_56 = arith.constant 0 : index
    %c0_57 = arith.constant 0 : index
    %c0_58 = arith.constant 0 : index
    %117 = vector.load %arg15[%c0_56, %c0_57, %c0_58] : memref<1x8x32xf32, #tpu.memory_space<vmem>>, vector<1x8x32xf32>
    %118 = vector.shape_cast %117 : vector<1x8x32xf32> to vector<8x32xf32>
    %119 = vector.shape_cast %116 : vector<8x32xf32> to vector<1x8x32xf32>
    tpu.vector_store %arg15[%c0_56, %c0_57, %c0_58], %119 {strides = array<i32>} : memref<1x8x32xf32, #tpu.memory_space<vmem>>, vector<1x8x32xf32>,
    return
  }
  func.func @transform_0(%arg0: i32) -> (i32, i32, i32) {
    %c0_i32 = arith.constant 0 : i32
    %c0_i32_0 = arith.constant 0 : i32
    %c0_i32_1 = arith.constant 0 : i32
    return %arg0, %c0_i32, %c0_i32_0 : i32, i32, i32
  }
  func.func @transform_1(%arg0: i32) -> (i32, i32, i32) {
    %c0_i32 = arith.constant 0 : i32
    %c0_i32_0 = arith.constant 0 : i32
    %c0_i32_1 = arith.constant 0 : i32
    return %arg0, %c0_i32, %c0_i32_0 : i32, i32, i32
  }
  func.func @transform_2(%arg0: i32) -> (i32, i32, i32) {
    %c0_i32 = arith.constant 0 : i32
    %c0_i32_0 = arith.constant 0 : i32
    %c0_i32_1 = arith.constant 0 : i32
    return %arg0, %c0_i32, %c0_i32_0 : i32, i32, i32
  }
  func.func @transform_3(%arg0: i32) -> (i32, i32, i32) {
    %c0_i32 = arith.constant 0 : i32
    %c0_i32_0 = arith.constant 0 : i32
    %c0_i32_1 = arith.constant 0 : i32
    return %arg0, %c0_i32, %c0_i32_0 : i32, i32, i32
  }
  func.func @transform_4(%arg0: i32) -> (i32, i32) {
    %c0_i32 = arith.constant 0 : i32
    %c0_i32_0 = arith.constant 0 : i32
    %c0_i32_1 = arith.constant 0 : i32
    return %c0_i32, %c0_i32_0 : i32, i32
  }
  func.func @transform_5(%arg0: i32) -> (i32, i32) {
    %c0_i32 = arith.constant 0 : i32
    %c0_i32_0 = arith.constant 0 : i32
    %c0_i32_1 = arith.constant 0 : i32
    return %c0_i32, %c0_i32_0 : i32, i32
  }
  func.func @transform_6(%arg0: i32) -> (i32, i32) {
    %c0_i32 = arith.constant 0 : i32
    %c0_i32_0 = arith.constant 0 : i32
    %c0_i32_1 = arith.constant 0 : i32
    return %c0_i32, %c0_i32_0 : i32, i32
  }
  func.func @transform_7(%arg0: i32) -> (i32, i32) {
    %c0_i32 = arith.constant 0 : i32
    %c0_i32_0 = arith.constant 0 : i32
    %c0_i32_1 = arith.constant 0 : i32
    return %c0_i32, %c0_i32_0 : i32, i32
  }
  func.func @transform_8(%arg0: i32) -> (i32, i32) {
    %c0_i32 = arith.constant 0 : i32
    %c0_i32_0 = arith.constant 0 : i32
    %c0_i32_1 = arith.constant 0 : i32
    return %c0_i32, %c0_i32_0 : i32, i32
  }
  func.func @transform_9(%arg0: i32) -> (i32, i32) {
    %c0_i32 = arith.constant 0 : i32
    %c0_i32_0 = arith.constant 0 : i32
    %c0_i32_1 = arith.constant 0 : i32
    return %c0_i32, %c0_i32_0 : i32, i32
  }
  func.func @transform_10(%arg0: i32) -> (i32, i32) {
    %c0_i32 = arith.constant 0 : i32
    %c0_i32_0 = arith.constant 0 : i32
    %c0_i32_1 = arith.constant 0 : i32
    return %c0_i32, %c0_i32_0 : i32, i32
  }
  func.func @transform_11(%arg0: i32) -> (i32, i32) {
    %c0_i32 = arith.constant 0 : i32
    %c0_i32_0 = arith.constant 0 : i32
    %c0_i32_1 = arith.constant 0 : i32
    return %c0_i32, %c0_i32_0 : i32, i32
  }
  func.func @transform_12(%arg0: i32) -> (i32, i32) {
    %c0_i32 = arith.constant 0 : i32
    %c0_i32_0 = arith.constant 0 : i32
    %c0_i32_1 = arith.constant 0 : i32
    return %c0_i32, %c0_i32_0 : i32, i32
  }
  func.func @transform_13(%arg0: i32) -> (i32, i32) {
    %c0_i32 = arith.constant 0 : i32
    %c0_i32_0 = arith.constant 0 : i32
    %c0_i32_1 = arith.constant 0 : i32
    return %c0_i32, %c0_i32_0 : i32, i32
  }
  func.func @transform_14(%arg0: i32) -> (i32, i32, i32) {
    %c0_i32 = arith.constant 0 : i32
    %c0_i32_0 = arith.constant 0 : i32
    %c0_i32_1 = arith.constant 0 : i32
    return %arg0, %c0_i32, %c0_i32_0 : i32, i32, i32
  }
}

module attributes {stable_mosaic.version = 11 : i64} {
  func.func @_linear_kernel(%arg0: i32, %arg1: i32, %arg2: memref<16x32xf32, #tpu.memory_space<vmem>>, %arg3: memref<32x20xbf16, #tpu.memory_space<vmem>>, %arg4: memref<1x20xf32, #tpu.memory_space<vmem>>, %arg5: memref<16x20xf32, #tpu.memory_space<vmem>>) attributes {dimension_semantics = [#tpu.dimension_semantics<parallel>, #tpu.dimension_semantics<parallel>], iteration_bounds = array<i64: 1, 1>, scalar_prefetch = 0 : i64, scratch_operands = 0 : i64, tpu.core_type = #tpu.core_type<tc>, window_params = [{transform_indices = @transform_0, window_bounds = array<i64: 16, 32>}, {transform_indices = @transform_1, window_bounds = array<i64: 32, 20>}, {transform_indices = @transform_2, window_bounds = array<i64: 1, 20>}, {transform_indices = @transform_3, window_bounds = array<i64: 16, 20>}]} {
    %c0 = arith.constant 0 : index
    %c0_0 = arith.constant 0 : index
    %0 = vector.load %arg2[%c0, %c0_0] : memref<16x32xf32, #tpu.memory_space<vmem>>, vector<16x32xf32>
    %c0_1 = arith.constant 0 : index
    %c0_2 = arith.constant 0 : index
    %1 = vector.load %arg3[%c0_1, %c0_2] : memref<32x20xbf16, #tpu.memory_space<vmem>>, vector<32x20xbf16>
    %2 = arith.truncf %0 : vector<16x32xf32> to vector<16x32xbf16>
    %cst = arith.constant dense<0.000000e+00> : vector<16x20xf32>
    %3 = tpu.matmul %2, %1, %cst {dimension_numbers = #tpu.dot_dimension_numbers<[1], [0], [0], [1], [0, 0, 1, 1], [], []>} : vector<16x32xbf16>, vector<32x20xbf16>, vector<16x20xf32> -> vector<16x20xf32>
    %c0_3 = arith.constant 0 : index
    %c0_4 = arith.constant 0 : index
    %4 = vector.load %arg4[%c0_3, %c0_4] : memref<1x20xf32, #tpu.memory_space<vmem>>, vector<1x20xf32>
    %5 = vector.broadcast %4 : vector<1x20xf32> to vector<16x20xf32>
    %6 = arith.addf %3, %5 : vector<16x20xf32>
    %c0_5 = arith.constant 0 : index
    %c0_6 = arith.constant 0 : index
    %7 = vector.load %arg5[%c0_5, %c0_6] : memref<16x20xf32, #tpu.memory_space<vmem>>, vector<16x20xf32>
    tpu.vector_store %arg5[%c0_5, %c0_6], %6 {strides = array<i32>} : memref<16x20xf32, #tpu.memory_space<vmem>>, vector<16x20xf32>,
    return
  }
  func.func @transform_0(%arg0: i32, %arg1: i32) -> (i32, i32) {
    %c0_i32 = arith.constant 0 : i32
    %c0_i32_0 = arith.constant 0 : i32
    return %arg1, %c0_i32 : i32, i32
  }
  func.func @transform_1(%arg0: i32, %arg1: i32) -> (i32, i32) {
    %c0_i32 = arith.constant 0 : i32
    %c0_i32_0 = arith.constant 0 : i32
    return %c0_i32, %arg0 : i32, i32
  }
  func.func @transform_2(%arg0: i32, %arg1: i32) -> (i32, i32) {
    %c0_i32 = arith.constant 0 : i32
    %c0_i32_0 = arith.constant 0 : i32
    return %c0_i32, %arg0 : i32, i32
  }
  func.func @transform_3(%arg0: i32, %arg1: i32) -> (i32, i32) {
    %c0_i32 = arith.constant 0 : i32
    return %arg1, %arg0 : i32, i32
  }
}

</mosaic_0001>

<llo_original>
// kernel: sstp_forward.7
$region0: #{sstp_forward.7}
  #allocation0 [shape = 'u32[]', space=smem, size = 0x4, offset = 0x4, fixed_abs, tag = 'smem constant byte address 0x4 - core index']
  #allocation1 [shape = 'u32[72,128]{1,0:T(1,128)}', space=vmem, size = 0x9000, scoped, tag = 'internal scratch']
  %s0 = inlined_call_operand.vmem [shape: f32[16,32], index: 0, kind: input, shape index: {}]
  %s1 = inlined_call_operand.vmem [shape: bf16[32,96], index: 1, kind: input, shape index: {}]
  %s2 = inlined_call_operand.vmem [shape: f32[1,96], index: 2, kind: input, shape index: {}]
  %s3 = inlined_call_operand.vmem [shape: f32[16,96], index: 3, kind: output, shape index: {}]
  %s4 = sld [smem:[#allocation0]]
  $region22: #{sstp_forward.7} parent=0
    _
  %s6 = ssub.s32 1, %s4
  %s7 = scalar_select 0, %s6, %s4
  // Predicated region
  $region2: #{sstp_forward.7} parent=0 // pred_check
    _
  $region3: #{sstp_forward.7} parent=0 // pred_check_branch
    %9 = sbr.rel (0) target = $region5
  $region4: #{sstp_forward.7} parent=0 // pred_region
    _
  $region5: #{sstp_forward.7} parent=0 // pred_fallthru
    _
  // Predicated region
  $region6: #{sstp_forward.7} parent=0 // pred_check
    _
  $region7: #{sstp_forward.7} parent=0 // pred_check_branch
    %11 = sbr.rel (0) target = $region9
  $region8: #{sstp_forward.7} parent=0 // pred_region
    _
  $region9: #{sstp_forward.7} parent=0 // pred_fallthru
    _
  // Predicated region
  $region10: #{sstp_forward.7} parent=0 // pred_check
    _
  $region11: #{sstp_forward.7} parent=0 // pred_check_branch
    %13 = sbr.rel (0) target = $region13
  $region12: #{sstp_forward.7} parent=0 // pred_region
    _
  $region13: #{sstp_forward.7} parent=0 // pred_fallthru
    _
  %v15 = vld [vmem:[%s0] sm:$0xff]
  %v16 = vld [vmem:[%s0 + $0x8] sm:$0xff]
  %v17 = vld [vmem:[%s1] sm:$0xf]
  %v18 = vld [vmem:[%s1 + $0x4] sm:$0xf]
  %v19 = vld [vmem:[%s1 + $0x8] sm:$0xf]
  %v20 = vld [vmem:[%s1 + $0xc] sm:$0xf]
  %v21 = vpack.c.bf16 %v16, %v15
  %v22 = vld [vmem:[%s2] sm:$0x1]
  %v24 = vperm.slane %v22, 0
  %v30 = vunpack.c.l.b16 %v17
  %v31 = vunpack.c.l.b16 %v18
  %v32 = vunpack.c.l.b16 %v19
  %v33 = vunpack.c.l.b16 %v20
  %v34 = vpack.c.b16 %v31, %v30
  %v35 = vpack.c.b16 %v33, %v32
  %vm38 = vcmask 261120
  %v40 = vsel %vm38, %v21, 0
  %42 = vmatpush.bf16.msra.mxu0 0
  %43 = vmatpush.bf16.msra.mxu0 0
  %44 = vmatpush.bf16.msra.mxu0 0
  %45 = vmatpush.bf16.msra.mxu0 0
  %46 = vmatpush.bf16.msra.mxu0 0
  %47 = vmatpush.bf16.msra.mxu0 0
  %48 = vmatpush.bf16.msra.mxu0 %v35
  %49 = vmatpush.bf16.msra.mxu0 %v34
  %50 = vmatmul.bf16.gmra.mxu0 %v40
  %v51 = vpop.f32.mrf.mxu0
  %v52 = vadd.f32 %v24, %v51
  %v53 = vpop.f32.mrf.mxu0
  %v54 = vadd.f32 %v24, %v53
  %55 = vdwg.mxu0
  %vm56 = vcmask 785408
  %57 = vst.msk [vmem:[%s3] sm:$0xff] %vm56, %v52
  %58 = vst.msk [vmem:[%s3 + $0x8] sm:$0xff] %vm56, %v54
  // Predicated region
  $region14: #{sstp_forward.7} parent=0 // pred_check
    _
  $region15: #{sstp_forward.7} parent=0 // pred_check_branch
    %60 = sbr.rel (0) target = $region17
  $region16: #{sstp_forward.7} parent=0 // pred_region
    _
  $region17: #{sstp_forward.7} parent=0 // pred_fallthru
    _
  // Predicated region
  $region18: #{sstp_forward.7} parent=0 // pred_check
    _
  $region19: #{sstp_forward.7} parent=0 // pred_check_branch
    %62 = sbr.rel (0) target = $region21
  $region20: #{sstp_forward.7} parent=0 // pred_region
    _
  $region21: #{sstp_forward.7} parent=0 // pred_fallthru
    _

// kernel: sstp_forward.9
$region0: #{sstp_forward.9}
  #allocation0 [shape = 'u32[]', space=smem, size = 0x4, offset = 0x4, fixed_abs, tag = 'smem constant byte address 0x4 - core index']
  #allocation1 [shape = 'u32[72,128]{1,0:T(1,128)}', space=vmem, size = 0x9000, scoped, tag = 'internal scratch']
  %s0 = inlined_call_operand.vmem [shape: f32[2,8,32], index: 0, kind: input, shape index: {}]
  %s1 = inlined_call_operand.vmem [shape: f32[2,8,1], index: 1, kind: input, shape index: {}]
  %s2 = inlined_call_operand.vmem [shape: f32[1,32], index: 2, kind: input, shape index: {}]
  %s3 = inlined_call_operand.vmem [shape: f32[1,32], index: 3, kind: input, shape index: {}]
  %s4 = inlined_call_operand.vmem [shape: bf16[32,32], index: 4, kind: input, shape index: {}]
  %s5 = inlined_call_operand.vmem [shape: f32[1,32], index: 5, kind: input, shape index: {}]
  %s6 = inlined_call_operand.vmem [shape: bf16[32,64], index: 6, kind: input, shape index: {}]
  %s7 = inlined_call_operand.vmem [shape: f32[1,64], index: 7, kind: input, shape index: {}]
  %s8 = inlined_call_operand.vmem [shape: bf16[32,32], index: 8, kind: input, shape index: {}]
  %s9 = inlined_call_operand.vmem [shape: f32[1,32], index: 9, kind: input, shape index: {}]
  %s10 = inlined_call_operand.vmem [shape: f32[1,32], index: 10, kind: input, shape index: {}]
  %s11 = inlined_call_operand.vmem [shape: f32[1,32], index: 11, kind: input, shape index: {}]
  %s12 = inlined_call_operand.vmem [shape: bf16[32,32], index: 12, kind: input, shape index: {}]
  %s13 = inlined_call_operand.vmem [shape: f32[1,32], index: 13, kind: input, shape index: {}]
  %s14 = inlined_call_operand.vmem [shape: bf16[32,32], index: 14, kind: input, shape index: {}]
  %s15 = inlined_call_operand.vmem [shape: f32[1,32], index: 15, kind: input, shape index: {}]
  %s16 = inlined_call_operand.vmem [shape: f32[2,8,32], index: 16, kind: output, shape index: {}]
  %s17 = sld [smem:[#allocation0]]
  $region97: #{sstp_forward.9} parent=0
    _
  %s19 = ssub.s32 1, %s17
  %s20 = scalar_select 0, %s19, %s17
  loop: start=0, step=1, limit=4
  $region2: #{sstp_forward.9} parent=0 // loop_pre_header
    _
  $region3: #{sstp_forward.9} parent=0 // loop_header
    %s22 = sphi 0, %s26
    %p23 = scmp.ge.s32.totalorder %s22, 4
    %s32 = sphi 0, %s34
    %s35 = sphi 0, %s32
    %s36 = sphi 0, %s35
    %s52 = sphi 0, %s36
    %s58 = sphi 0, %s60
    %s61 = sphi 0, %s58
    %s62 = sphi 0, %s61
    %s78 = sphi 0, %s62
    %s82 = sphi 0, %s82
    %s84 = sphi 0, %s82
    %s85 = sphi 0, %s84
    %s99 = sphi 0, %s85
    %s103 = sphi 0, %s103
    %s105 = sphi 0, %s103
    %s106 = sphi 0, %s105
    %s120 = sphi 0, %s106
    %s124 = sphi 0, %s124
    %s126 = sphi 0, %s124
    %s127 = sphi 0, %s126
    %s141 = sphi 0, %s127
    %s145 = sphi 0, %s145
    %s147 = sphi 0, %s145
    %s148 = sphi 0, %s147
    %s162 = sphi 0, %s148
    %s166 = sphi 0, %s166
    %s168 = sphi 0, %s166
    %s169 = sphi 0, %s168
    %s183 = sphi 0, %s169
    %s187 = sphi 0, %s187
    %s189 = sphi 0, %s187
    %s190 = sphi 0, %s189
    %s204 = sphi 0, %s190
    %s208 = sphi 0, %s208
    %s210 = sphi 0, %s208
    %s211 = sphi 0, %s210
    %s225 = sphi 0, %s211
    %s229 = sphi 0, %s229
    %s231 = sphi 0, %s229
    %s232 = sphi 0, %s231
    %s246 = sphi 0, %s232
    %s250 = sphi 0, %s250
    %s252 = sphi 0, %s250
    %s253 = sphi 0, %s252
    %s267 = sphi 0, %s253
    %s271 = sphi 0, %s271
    %s273 = sphi 0, %s271
    %s274 = sphi 0, %s273
    %s288 = sphi 0, %s274
    %s292 = sphi 0, %s292
    %s294 = sphi 0, %s292
    %s295 = sphi 0, %s294
    %s309 = sphi 0, %s295
    %s313 = sphi 0, %s313
    %s315 = sphi 0, %s313
    %s316 = sphi 0, %s315
    %s330 = sphi 0, %s316
    %s334 = sphi 0, %s334
    %s336 = sphi 0, %s334
    %s337 = sphi 0, %s336
    %s351 = sphi 0, %s337
    %s355 = sphi 0, %s355
    %s357 = sphi 0, %s355
    %s358 = sphi 0, %s357
    %s372 = sphi 0, %s358
    %s378 = sphi 0, %s380
    %s381 = sphi 0, %s378
    %s382 = sphi 0, %s381
    %s398 = sphi 0, %s382
  $region4: #{sstp_forward.9} parent=0 // loop_header_branch
    %25 = sbr.rel (%p23) target = $region8
  $region5: #{sstp_forward.9} parent=0 // loop_body
    %s27 = ssub.s32 %s22, 1
    %s28 = ssub.s32 %s22, 2
    %s29 = sadd.s32 %s22, 1
    %s30 = ssub.s32 %s22, %s29
    %p31 = scmp.eq.s32.totalorder %s30, 0
    %s33 = sadd.s32 %s32, 1
    %s34 = scalar_select %p31, %s32, %s33
    %p37 = pneg %p31
    %p38 = scmp.eq.s32.totalorder %s22, 1
    %p39 = por %p37, %p38
    %p40 = scmp.ne.s32.totalorder %s32, %s35
    %p41 = scmp.eq.s32.totalorder %s22, 0
    %p42 = por %p40, %p41
    %p43 = scmp.ne.s32.totalorder %s32, %s35
    %p44 = scmp.eq.s32.totalorder %s27, 1
    %p45 = por %p43, %p44
    %p46 = scmp.ne.s32.totalorder %s35, %s36
    %p47 = scmp.eq.s32.totalorder %s27, 0
    %p48 = por %p46, %p47
    %p49 = scmp.ne.s32.totalorder %s35, %s36
    %p50 = scmp.eq.s32.totalorder %s28, 1
    %p51 = por %p49, %p50
    %p53 = scmp.ne.s32.totalorder %s36, %s52
    %p54 = scmp.eq.s32.totalorder %s28, 0
    %p55 = por %p53, %p54
    %s56 = ssub.s32 %s22, %s29
    %p57 = scmp.eq.s32.totalorder %s56, 0
    %s59 = sadd.s32 %s58, 1
    %s60 = scalar_select %p57, %s58, %s59
    %p63 = pneg %p57
    %p64 = scmp.eq.s32.totalorder %s22, 1
    %p65 = por %p63, %p64
    %p66 = scmp.ne.s32.totalorder %s58, %s61
    %p67 = scmp.eq.s32.totalorder %s22, 0
    %p68 = por %p66, %p67
    %p69 = scmp.ne.s32.totalorder %s58, %s61
    %p70 = scmp.eq.s32.totalorder %s27, 1
    %p71 = por %p69, %p70
    %p72 = scmp.ne.s32.totalorder %s61, %s62
    %p73 = scmp.eq.s32.totalorder %s27, 0
    %p74 = por %p72, %p73
    %p75 = scmp.ne.s32.totalorder %s61, %s62
    %p76 = scmp.eq.s32.totalorder %s28, 1
    %p77 = por %p75, %p76
    %p79 = scmp.ne.s32.totalorder %s62, %s78
    %p80 = scmp.eq.s32.totalorder %s28, 0
    %p81 = por %p79, %p80
    %s83 = sadd.s32 %s82, 1
    %p86 = scmp.eq.s32.totalorder %s22, 1
    %p87 = scmp.ne.s32.totalorder %s82, %s84
    %p88 = scmp.eq.s32.totalorder %s22, 0
    %p89 = por %p87, %p88
    %p90 = scmp.ne.s32.totalorder %s82, %s84
    %p91 = scmp.eq.s32.totalorder %s27, 1
    %p92 = por %p90, %p91
    %p93 = scmp.ne.s32.totalorder %s84, %s85
    %p94 = scmp.eq.s32.totalorder %s27, 0
    %p95 = por %p93, %p94
    %p96 = scmp.ne.s32.totalorder %s84, %s85
    %p97 = scmp.eq.s32.totalorder %s28, 1
    %p98 = por %p96, %p97
    %p100 = scmp.ne.s32.totalorder %s85, %s99
    %p101 = scmp.eq.s32.totalorder %s28, 0
    %p102 = por %p100, %p101
    %s104 = sadd.s32 %s103, 1
    %p107 = scmp.eq.s32.totalorder %s22, 1
    %p108 = scmp.ne.s32.totalorder %s103, %s105
    %p109 = scmp.eq.s32.totalorder %s22, 0
    %p110 = por %p108, %p109
    %p111 = scmp.ne.s32.totalorder %s103, %s105
    %p112 = scmp.eq.s32.totalorder %s27, 1
    %p113 = por %p111, %p112
    %p114 = scmp.ne.s32.totalorder %s105, %s106
    %p115 = scmp.eq.s32.totalorder %s27, 0
    %p116 = por %p114, %p115
    %p117 = scmp.ne.s32.totalorder %s105, %s106
    %p118 = scmp.eq.s32.totalorder %s28, 1
    %p119 = por %p117, %p118
    %p121 = scmp.ne.s32.totalorder %s106, %s120
    %p122 = scmp.eq.s32.totalorder %s28, 0
    %p123 = por %p121, %p122
    %s125 = sadd.s32 %s124, 1
    %p128 = scmp.eq.s32.totalorder %s22, 1
    %p129 = scmp.ne.s32.totalorder %s124, %s126
    %p130 = scmp.eq.s32.totalorder %s22, 0
    %p131 = por %p129, %p130
    %p132 = scmp.ne.s32.totalorder %s124, %s126
    %p133 = scmp.eq.s32.totalorder %s27, 1
    %p134 = por %p132, %p133
    %p135 = scmp.ne.s32.totalorder %s126, %s127
    %p136 = scmp.eq.s32.totalorder %s27, 0
    %p137 = por %p135, %p136
    %p138 = scmp.ne.s32.totalorder %s126, %s127
    %p139 = scmp.eq.s32.totalorder %s28, 1
    %p140 = por %p138, %p139
    %p142 = scmp.ne.s32.totalorder %s127, %s141
    %p143 = scmp.eq.s32.totalorder %s28, 0
    %p144 = por %p142, %p143
    %s146 = sadd.s32 %s145, 1
    %p149 = scmp.eq.s32.totalorder %s22, 1
    %p150 = scmp.ne.s32.totalorder %s145, %s147
    %p151 = scmp.eq.s32.totalorder %s22, 0
    %p152 = por %p150, %p151
    %p153 = scmp.ne.s32.totalorder %s145, %s147
    %p154 = scmp.eq.s32.totalorder %s27, 1
    %p155 = por %p153, %p154
    %p156 = scmp.ne.s32.totalorder %s147, %s148
    %p157 = scmp.eq.s32.totalorder %s27, 0
    %p158 = por %p156, %p157
    %p159 = scmp.ne.s32.totalorder %s147, %s148
    %p160 = scmp.eq.s32.totalorder %s28, 1
    %p161 = por %p159, %p160
    %p163 = scmp.ne.s32.totalorder %s148, %s162
    %p164 = scmp.eq.s32.totalorder %s28, 0
    %p165 = por %p163, %p164
    %s167 = sadd.s32 %s166, 1
    %p170 = scmp.eq.s32.totalorder %s22, 1
    %p171 = scmp.ne.s32.totalorder %s166, %s168
    %p172 = scmp.eq.s32.totalorder %s22, 0
    %p173 = por %p171, %p172
    %p174 = scmp.ne.s32.totalorder %s166, %s168
    %p175 = scmp.eq.s32.totalorder %s27, 1
    %p176 = por %p174, %p175
    %p177 = scmp.ne.s32.totalorder %s168, %s169
    %p178 = scmp.eq.s32.totalorder %s27, 0
    %p179 = por %p177, %p178
    %p180 = scmp.ne.s32.totalorder %s168, %s169
    %p181 = scmp.eq.s32.totalorder %s28, 1
    %p182 = por %p180, %p181
    %p184 = scmp.ne.s32.totalorder %s169, %s183
    %p185 = scmp.eq.s32.totalorder %s28, 0
    %p186 = por %p184, %p185
    %s188 = sadd.s32 %s187, 1
    %p191 = scmp.eq.s32.totalorder %s22, 1
    %p192 = scmp.ne.s32.totalorder %s187, %s189
    %p193 = scmp.eq.s32.totalorder %s22, 0
    %p194 = por %p192, %p193
    %p195 = scmp.ne.s32.totalorder %s187, %s189
    %p196 = scmp.eq.s32.totalorder %s27, 1
    %p197 = por %p195, %p196
    %p198 = scmp.ne.s32.totalorder %s189, %s190
    %p199 = scmp.eq.s32.totalorder %s27, 0
    %p200 = por %p198, %p199
    %p201 = scmp.ne.s32.totalorder %s189, %s190
    %p202 = scmp.eq.s32.totalorder %s28, 1
    %p203 = por %p201, %p202
    %p205 = scmp.ne.s32.totalorder %s190, %s204
    %p206 = scmp.eq.s32.totalorder %s28, 0
    %p207 = por %p205, %p206
    %s209 = sadd.s32 %s208, 1
    %p212 = scmp.eq.s32.totalorder %s22, 1
    %p213 = scmp.ne.s32.totalorder %s208, %s210
    %p214 = scmp.eq.s32.totalorder %s22, 0
    %p215 = por %p213, %p214
    %p216 = scmp.ne.s32.totalorder %s208, %s210
    %p217 = scmp.eq.s32.totalorder %s27, 1
    %p218 = por %p216, %p217
    %p219 = scmp.ne.s32.totalorder %s210, %s211
    %p220 = scmp.eq.s32.totalorder %s27, 0
    %p221 = por %p219, %p220
    %p222 = scmp.ne.s32.totalorder %s210, %s211
    %p223 = scmp.eq.s32.totalorder %s28, 1
    %p224 = por %p222, %p223
    %p226 = scmp.ne.s32.totalorder %s211, %s225
    %p227 = scmp.eq.s32.totalorder %s28, 0
    %p228 = por %p226, %p227
    %s230 = sadd.s32 %s229, 1
    %p233 = scmp.eq.s32.totalorder %s22, 1
    %p234 = scmp.ne.s32.totalorder %s229, %s231
    %p235 = scmp.eq.s32.totalorder %s22, 0
    %p236 = por %p234, %p235
    %p237 = scmp.ne.s32.totalorder %s229, %s231
    %p238 = scmp.eq.s32.totalorder %s27, 1
    %p239 = por %p237, %p238
    %p240 = scmp.ne.s32.totalorder %s231, %s232
    %p241 = scmp.eq.s32.totalorder %s27, 0
    %p242 = por %p240, %p241
    %p243 = scmp.ne.s32.totalorder %s231, %s232
    %p244 = scmp.eq.s32.totalorder %s28, 1
    %p245 = por %p243, %p244
    %p247 = scmp.ne.s32.totalorder %s232, %s246
    %p248 = scmp.eq.s32.totalorder %s28, 0
    %p249 = por %p247, %p248
    %s251 = sadd.s32 %s250, 1
    %p254 = scmp.eq.s32.totalorder %s22, 1
    %p255 = scmp.ne.s32.totalorder %s250, %s252
    %p256 = scmp.eq.s32.totalorder %s22, 0
    %p257 = por %p255, %p256
    %p258 = scmp.ne.s32.totalorder %s250, %s252
    %p259 = scmp.eq.s32.totalorder %s27, 1
    %p260 = por %p258, %p259
    %p261 = scmp.ne.s32.totalorder %s252, %s253
    %p262 = scmp.eq.s32.totalorder %s27, 0
    %p263 = por %p261, %p262
    %p264 = scmp.ne.s32.totalorder %s252, %s253
    %p265 = scmp.eq.s32.totalorder %s28, 1
    %p266 = por %p264, %p265
    %p268 = scmp.ne.s32.totalorder %s253, %s267
    %p269 = scmp.eq.s32.totalorder %s28, 0
    %p270 = por %p268, %p269
    %s272 = sadd.s32 %s271, 1
    %p275 = scmp.eq.s32.totalorder %s22, 1
    %p276 = scmp.ne.s32.totalorder %s271, %s273
    %p277 = scmp.eq.s32.totalorder %s22, 0
    %p278 = por %p276, %p277
    %p279 = scmp.ne.s32.totalorder %s271, %s273
    %p280 = scmp.eq.s32.totalorder %s27, 1
    %p281 = por %p279, %p280
    %p282 = scmp.ne.s32.totalorder %s273, %s274
    %p283 = scmp.eq.s32.totalorder %s27, 0
    %p284 = por %p282, %p283
    %p285 = scmp.ne.s32.totalorder %s273, %s274
    %p286 = scmp.eq.s32.totalorder %s28, 1
    %p287 = por %p285, %p286
    %p289 = scmp.ne.s32.totalorder %s274, %s288
    %p290 = scmp.eq.s32.totalorder %s28, 0
    %p291 = por %p289, %p290
    %s293 = sadd.s32 %s292, 1
    %p296 = scmp.eq.s32.totalorder %s22, 1
    %p297 = scmp.ne.s32.totalorder %s292, %s294
    %p298 = scmp.eq.s32.totalorder %s22, 0
    %p299 = por %p297, %p298
    %p300 = scmp.ne.s32.totalorder %s292, %s294
    %p301 = scmp.eq.s32.totalorder %s27, 1
    %p302 = por %p300, %p301
    %p303 = scmp.ne.s32.totalorder %s294, %s295
    %p304 = scmp.eq.s32.totalorder %s27, 0
    %p305 = por %p303, %p304
    %p306 = scmp.ne.s32.totalorder %s294, %s295
    %p307 = scmp.eq.s32.totalorder %s28, 1
    %p308 = por %p306, %p307
    %p310 = scmp.ne.s32.totalorder %s295, %s309
    %p311 = scmp.eq.s32.totalorder %s28, 0
    %p312 = por %p310, %p311
    %s314 = sadd.s32 %s313, 1
    %p317 = scmp.eq.s32.totalorder %s22, 1
    %p318 = scmp.ne.s32.totalorder %s313, %s315
    %p319 = scmp.eq.s32.totalorder %s22, 0
    %p320 = por %p318, %p319
    %p321 = scmp.ne.s32.totalorder %s313, %s315
    %p322 = scmp.eq.s32.totalorder %s27, 1
    %p323 = por %p321, %p322
    %p324 = scmp.ne.s32.totalorder %s315, %s316
    %p325 = scmp.eq.s32.totalorder %s27, 0
    %p326 = por %p324, %p325
    %p327 = scmp.ne.s32.totalorder %s315, %s316
    %p328 = scmp.eq.s32.totalorder %s28, 1
    %p329 = por %p327, %p328
    %p331 = scmp.ne.s32.totalorder %s316, %s330
    %p332 = scmp.eq.s32.totalorder %s28, 0
    %p333 = por %p331, %p332
    %s335 = sadd.s32 %s334, 1
    %p338 = scmp.eq.s32.totalorder %s22, 1
    %p339 = scmp.ne.s32.totalorder %s334, %s336
    %p340 = scmp.eq.s32.totalorder %s22, 0
    %p341 = por %p339, %p340
    %p342 = scmp.ne.s32.totalorder %s334, %s336
    %p343 = scmp.eq.s32.totalorder %s27, 1
    %p344 = por %p342, %p343
    %p345 = scmp.ne.s32.totalorder %s336, %s337
    %p346 = scmp.eq.s32.totalorder %s27, 0
    %p347 = por %p345, %p346
    %p348 = scmp.ne.s32.totalorder %s336, %s337
    %p349 = scmp.eq.s32.totalorder %s28, 1
    %p350 = por %p348, %p349
    %p352 = scmp.ne.s32.totalorder %s337, %s351
    %p353 = scmp.eq.s32.totalorder %s28, 0
    %p354 = por %p352, %p353
    %s356 = sadd.s32 %s355, 1
    %p359 = scmp.eq.s32.totalorder %s22, 1
    %p360 = scmp.ne.s32.totalorder %s355, %s357
    %p361 = scmp.eq.s32.totalorder %s22, 0
    %p362 = por %p360, %p361
    %p363 = scmp.ne.s32.totalorder %s355, %s357
    %p364 = scmp.eq.s32.totalorder %s27, 1
    %p365 = por %p363, %p364
    %p366 = scmp.ne.s32.totalorder %s357, %s358
    %p367 = scmp.eq.s32.totalorder %s27, 0
    %p368 = por %p366, %p367
    %p369 = scmp.ne.s32.totalorder %s357, %s358
    %p370 = scmp.eq.s32.totalorder %s28, 1
    %p371 = por %p369, %p370
    %p373 = scmp.ne.s32.totalorder %s358, %s372
    %p374 = scmp.eq.s32.totalorder %s28, 0
    %p375 = por %p373, %p374
    %s376 = ssub.s32 %s22, %s29
    %p377 = scmp.eq.s32.totalorder %s376, 0
    %s379 = sadd.s32 %s378, 1
    %s380 = scalar_select %p377, %s378, %s379
    %p383 = pneg %p377
    %p384 = scmp.eq.s32.totalorder %s22, 1
    %p385 = por %p383, %p384
    %p386 = scmp.ne.s32.totalorder %s378, %s381
    %p387 = scmp.eq.s32.totalorder %s22, 0
    %p388 = por %p386, %p387
    %p389 = scmp.ne.s32.totalorder %s378, %s381
    %p390 = scmp.eq.s32.totalorder %s27, 1
    %p391 = por %p389, %p390
    %p392 = scmp.ne.s32.totalorder %s381, %s382
    %p393 = scmp.eq.s32.totalorder %s27, 0
    %p394 = por %p392, %p393
    %p395 = scmp.ne.s32.totalorder %s381, %s382
    %p396 = scmp.eq.s32.totalorder %s28, 1
    %p397 = por %p395, %p396
    %p399 = scmp.ne.s32.totalorder %s382, %s398
    %p400 = scmp.eq.s32.totalorder %s28, 0
    %p401 = por %p399, %p400
    %p402 = scmp.le.s32.totalorder 1, %s22
    %p403 = scmp.lt.s32.totalorder %s22, 3
    %p404 = pnand %p402, %p403
    %p405 = pneg %p404
    // Predicated region
    $region9: #{sstp_forward.9} parent=5 // pred_check
      _
    $region10: #{sstp_forward.9} parent=5 // pred_check_branch
      %407 = sbr.rel (%p404) target = $region12
    $region11: #{sstp_forward.9} parent=5 // pred_region
      %s408 = ssub.s32 %s22, 1
      // Predicated region
      $region13: #{sstp_forward.9} parent=11 // pred_check
        %p409 = pneg %p95
      $region14: #{sstp_forward.9} parent=11 // pred_check_branch
        %411 = sbr.rel (%p409) target = $region16
      $region15: #{sstp_forward.9} parent=11 // pred_region
        _
      $region16: #{sstp_forward.9} parent=11 // pred_fallthru
        _
      // Predicated region
      $region17: #{sstp_forward.9} parent=11 // pred_check
        %p412 = pneg %p116
      $region18: #{sstp_forward.9} parent=11 // pred_check_branch
        %414 = sbr.rel (%p412) target = $region20
      $region19: #{sstp_forward.9} parent=11 // pred_region
        _
      $region20: #{sstp_forward.9} parent=11 // pred_fallthru
        _
      // Predicated region
      $region21: #{sstp_forward.9} parent=11 // pred_check
        %p415 = pneg %p137
      $region22: #{sstp_forward.9} parent=11 // pred_check_branch
        %417 = sbr.rel (%p415) target = $region24
      $region23: #{sstp_forward.9} parent=11 // pred_region
        _
      $region24: #{sstp_forward.9} parent=11 // pred_fallthru
        _
      // Predicated region
      $region25: #{sstp_forward.9} parent=11 // pred_check
        %p418 = pneg %p158
      $region26: #{sstp_forward.9} parent=11 // pred_check_branch
        %420 = sbr.rel (%p418) target = $region28
      $region27: #{sstp_forward.9} parent=11 // pred_region
        _
      $region28: #{sstp_forward.9} parent=11 // pred_fallthru
        _
      // Predicated region
      $region29: #{sstp_forward.9} parent=11 // pred_check
        %p421 = pneg %p179
      $region30: #{sstp_forward.9} parent=11 // pred_check_branch
        %423 = sbr.rel (%p421) target = $region32
      $region31: #{sstp_forward.9} parent=11 // pred_region
        _
      $region32: #{sstp_forward.9} parent=11 // pred_fallthru
        _
      // Predicated region
      $region33: #{sstp_forward.9} parent=11 // pred_check
        %p424 = pneg %p200
      $region34: #{sstp_forward.9} parent=11 // pred_check_branch
        %426 = sbr.rel (%p424) target = $region36
      $region35: #{sstp_forward.9} parent=11 // pred_region
        _
      $region36: #{sstp_forward.9} parent=11 // pred_fallthru
        _
      // Predicated region
      $region37: #{sstp_forward.9} parent=11 // pred_check
        %p427 = pneg %p221
      $region38: #{sstp_forward.9} parent=11 // pred_check_branch
        %429 = sbr.rel (%p427) target = $region40
      $region39: #{sstp_forward.9} parent=11 // pred_region
        _
      $region40: #{sstp_forward.9} parent=11 // pred_fallthru
        _
      // Predicated region
      $region41: #{sstp_forward.9} parent=11 // pred_check
        %p430 = pneg %p242
      $region42: #{sstp_forward.9} parent=11 // pred_check_branch
        %432 = sbr.rel (%p430) target = $region44
      $region43: #{sstp_forward.9} parent=11 // pred_region
        _
      $region44: #{sstp_forward.9} parent=11 // pred_fallthru
        _
      // Predicated region
      $region45: #{sstp_forward.9} parent=11 // pred_check
        %p433 = pneg %p263
      $region46: #{sstp_forward.9} parent=11 // pred_check_branch
        %435 = sbr.rel (%p433) target = $region48
      $region47: #{sstp_forward.9} parent=11 // pred_region
        _
      $region48: #{sstp_forward.9} parent=11 // pred_fallthru
        _
      // Predicated region
      $region49: #{sstp_forward.9} parent=11 // pred_check
        %p436 = pneg %p284
      $region50: #{sstp_forward.9} parent=11 // pred_check_branch
        %438 = sbr.rel (%p436) target = $region52
      $region51: #{sstp_forward.9} parent=11 // pred_region
        _
      $region52: #{sstp_forward.9} parent=11 // pred_fallthru
        _
      // Predicated region
      $region53: #{sstp_forward.9} parent=11 // pred_check
        %p439 = pneg %p305
      $region54: #{sstp_forward.9} parent=11 // pred_check_branch
        %441 = sbr.rel (%p439) target = $region56
      $region55: #{sstp_forward.9} parent=11 // pred_region
        _
      $region56: #{sstp_forward.9} parent=11 // pred_fallthru
        _
      // Predicated region
      $region57: #{sstp_forward.9} parent=11 // pred_check
        %p442 = pneg %p326
      $region58: #{sstp_forward.9} parent=11 // pred_check_branch
        %444 = sbr.rel (%p442) target = $region60
      $region59: #{sstp_forward.9} parent=11 // pred_region
        _
      $region60: #{sstp_forward.9} parent=11 // pred_fallthru
        _
      // Predicated region
      $region61: #{sstp_forward.9} parent=11 // pred_check
        %p445 = pneg %p347
      $region62: #{sstp_forward.9} parent=11 // pred_check_branch
        %447 = sbr.rel (%p445) target = $region64
      $region63: #{sstp_forward.9} parent=11 // pred_region
        _
      $region64: #{sstp_forward.9} parent=11 // pred_fallthru
        _
      // Predicated region
      $region65: #{sstp_forward.9} parent=11 // pred_check
        %p448 = pneg %p368
      $region66: #{sstp_forward.9} parent=11 // pred_check_branch
        %450 = sbr.rel (%p448) target = $region68
      $region67: #{sstp_forward.9} parent=11 // pred_region
        _
      $region68: #{sstp_forward.9} parent=11 // pred_fallthru
        _
    $region12: #{sstp_forward.9} parent=5 // pred_fallthru
      _
    %p451 = scmp.lt.s32.totalorder %s22, 2
    // Predicated region
    $region69: #{sstp_forward.9} parent=5 // pred_check
      %p452 = pneg %p451
    $region70: #{sstp_forward.9} parent=5 // pred_check_branch
      %454 = sbr.rel (%p452) target = $region72
    $region71: #{sstp_forward.9} parent=5 // pred_region
      // Predicated region
      $region73: #{sstp_forward.9} parent=71 // pred_check
        %p455 = pneg %p42
      $region74: #{sstp_forward.9} parent=71 // pred_check_branch
        %457 = sbr.rel (%p455) target = $region76
      $region75: #{sstp_forward.9} parent=71 // pred_region
        %p458 = scmp.lt.s32.totalorder %s22, 1
        %s459 = scalar_select %p458, %s22, 1
        %s460 = smul.addr %s459, 8
        %s461 = scalar_lea.vmem %s0, %s460
      $region76: #{sstp_forward.9} parent=71 // pred_fallthru
        _
      // Predicated region
      $region77: #{sstp_forward.9} parent=71 // pred_check
        %p462 = pneg %p68
      $region78: #{sstp_forward.9} parent=71 // pred_check_branch
        %464 = sbr.rel (%p462) target = $region80
      $region79: #{sstp_forward.9} parent=71 // pred_region
        %p465 = scmp.lt.s32.totalorder %s22, 1
        %s466 = scalar_select %p465, %s22, 1
        %s467 = smul.addr %s466, 8
        %s468 = scalar_lea.vmem %s1, %s467
      $region80: #{sstp_forward.9} parent=71 // pred_fallthru
        _
    $region72: #{sstp_forward.9} parent=5 // pred_fallthru
      _
    %p469 = scmp.le.s32.totalorder 1, %s22
    %p470 = scmp.lt.s32.totalorder %s22, 3
    %p471 = pnand %p469, %p470
    %p472 = pneg %p471
    // Predicated region
    $region81: #{sstp_forward.9} parent=5 // pred_check
      _
    $region82: #{sstp_forward.9} parent=5 // pred_check_branch
      %474 = sbr.rel (%p471) target = $region84
    $region83: #{sstp_forward.9} parent=5 // pred_region
      %s475 = ssub.s32 %s22, 1
      %p476 = scmp.lt.s32.totalorder %s27, 1
      %s477 = scalar_select %p476, %s27, 1
      %s478 = smul.addr %s477, 8
      %s479 = scalar_lea.vmem %s0, %s478
      %p480 = pneg %p48
      %p481 = pneg %p45
      %p482 = scmp.lt.s32.totalorder %s27, 1
      %s483 = scalar_select %p482, %s27, 1
      %s484 = smul.addr %s483, 8
      %s485 = scalar_lea.vmem %s1, %s484
      %p486 = pneg %p74
      %p487 = pneg %p71
      %p488 = pneg %p95
      %p489 = pneg %p92
      %p490 = pneg %p116
      %p491 = pneg %p113
      %p492 = pneg %p137
      %p493 = pneg %p134
      %p494 = pneg %p158
      %p495 = pneg %p155
      %p496 = pneg %p179
      %p497 = pneg %p176
      %p498 = pneg %p200
      %p499 = pneg %p197
      %p500 = pneg %p221
      %p501 = pneg %p218
      %p502 = pneg %p242
      %p503 = pneg %p239
      %p504 = pneg %p263
      %p505 = pneg %p260
      %p506 = pneg %p284
      %p507 = pneg %p281
      %p508 = pneg %p305
      %p509 = pneg %p302
      %p510 = pneg %p326
      %p511 = pneg %p323
      %p512 = pneg %p347
      %p513 = pneg %p344
      %p514 = pneg %p368
      %p515 = pneg %p365
      %p516 = pneg %p394
      %p517 = pneg %p391
      %p518 = scmp.lt.s32.totalorder %s27, 1
      %s519 = scalar_select %p518, %s27, 1
      %s520 = smul.addr %s519, 8
      %s521 = scalar_lea.vmem %s16, %s520
      %p522 = scmp.lt.s32.totalorder %s27, 1
      %s523 = scalar_select %p522, %s27, 1
      %s524 = smul.addr %s523, 8
      %s525 = scalar_lea.vmem %s0, %s524
      %p526 = scmp.lt.s32.totalorder %s27, 1
      %s527 = scalar_select %p526, %s27, 1
      %s528 = smul.addr %s527, 8
      %s529 = scalar_lea.vmem %s1, %s528
      %p530 = scmp.lt.s32.totalorder %s27, 1
      %s531 = scalar_select %p530, %s27, 1
      %s532 = smul.addr %s531, 8
      %s533 = scalar_lea.vmem %s16, %s532
      %v535 = vld [vmem:[%s525] sm:$0xff]
      %v536 = vld [vmem:[%s529] sm:$0xff]
      %v537 = vld [vmem:[%s2] sm:$0x1]
      %v538 = vld [vmem:[%s3] sm:$0x1]
      %vm539 = vcmask 261120
      %v540 = vsel %vm539, %v535, 0.0
      %541 = vadd.xlane.f32.xlu0 %v540
      %v542 = vpop.xlane.xlu0 %541
      %v543 = vrcp.pop 32.0
      %v544 = vmul.f32 32.0, %v543
      %v545 = vsub.f32 1.0, %v544
      %v546 = vmul.f32 %v543, %v545
      %v547 = vadd.f32 %v543, %v546
      %vm548 = vweird.f32 %v543
      %v549 = vsel %vm548, %v543, %v547
      %v550 = vmul.f32 %v542, %v549
      %v551 = vsub.f32 %v535, %v550
      %v552 = vmul.f32 %v551, %v551
      %v553 = vsel %vm539, %v552, 0.0
      %554 = vadd.xlane.f32.xlu0 %v553
      %v555 = vpop.xlane.xlu0 %554
      %v556 = vmul.f32 %v555, %v549
      %v557 = vadd.f32 %v556, 1e-08
      %v558 = vrsqrt.pop %v557
      %v559 = vmul.f32 %v558, %v557
      %v560 = vmul.f32 %v559, %v558
      %v561 = vmul.f32 0.5, %v560
      %v562 = vsub.f32 1.5, %v561
      %v563 = vmul.f32 %v558, %v562
      %vm564 = vweird.f32 %v557
      %vm565 = vweird.f32 %v558
      %vm566 = vmor %vm564, %vm565
      %v567 = vsel %vm566, %v558, %v563
      %v568 = vmul.f32 %v551, %v567
      %v570 = vperm.slane %v537, 0
      %v572 = vmul.f32 %v568, %v570
      %v574 = vperm.slane %v538, 0
      %v576 = vadd.f32 %v572, %v574
      %v577 = vld [vmem:[%s4] sm:$0xf]
      %v578 = vld [vmem:[%s4 + $0x4] sm:$0xf]
      %v579 = vld [vmem:[%s4 + $0x8] sm:$0xf]
      %v580 = vld [vmem:[%s4 + $0xc] sm:$0xf]
      %v581 = vpack.c.bf16 %v576, %v576
      %v582 = vld [vmem:[%s5] sm:$0x1]
      %v584 = vperm.slane %v582, 0
      %v590 = vunpack.c.l.b16 %v577
      %v591 = vunpack.c.l.b16 %v578
      %v592 = vunpack.c.l.b16 %v579
      %v593 = vunpack.c.l.b16 %v580
      %v594 = vpack.c.b16 %v591, %v590
      %v595 = vpack.c.b16 %v593, %v592
      %v599 = vsel %vm539, %v581, 0
      %601 = vmatpush.bf16.msra.mxu0 0
      %602 = vmatpush.bf16.msra.mxu0 0
      %603 = vmatpush.bf16.msra.mxu0 0
      %604 = vmatpush.bf16.msra.mxu0 0
      %605 = vmatpush.bf16.msra.mxu0 0
      %606 = vmatpush.bf16.msra.mxu0 0
      %607 = vmatpush.bf16.msra.mxu0 %v595
      %608 = vmatpush.bf16.msra.mxu0 %v594
      %609 = vmatmul.bf16.gmra.mxu0 %v599
      %v610 = vpop.f32.mrf.mxu0
      %v611 = vadd.f32 %v584, %v610
      %v612 = vpop.f32.mrf.mxu0
      %613 = vdwg.mxu0
      %v614 = vld [vmem:[%s6] sm:$0xf]
      %v615 = vld [vmem:[%s6 + $0x4] sm:$0xf]
      %v616 = vld [vmem:[%s6 + $0x8] sm:$0xf]
      %v617 = vld [vmem:[%s6 + $0xc] sm:$0xf]
      %v618 = vpack.c.bf16 %v535, %v535
      %v619 = vld [vmem:[%s7] sm:$0x1]
      %v621 = vperm.slane %v619, 0
      %v627 = vunpack.c.l.b16 %v614
      %v628 = vunpack.c.l.b16 %v615
      %v629 = vunpack.c.l.b16 %v616
      %v630 = vunpack.c.l.b16 %v617
      %v631 = vpack.c.b16 %v628, %v627
      %v632 = vpack.c.b16 %v630, %v629
      %v636 = vsel %vm539, %v618, 0
      %638 = vmatpush.bf16.msra.mxu0 0
      %639 = vmatpush.bf16.msra.mxu0 0
      %640 = vmatpush.bf16.msra.mxu0 0
      %641 = vmatpush.bf16.msra.mxu0 0
      %642 = vmatpush.bf16.msra.mxu0 0
      %643 = vmatpush.bf16.msra.mxu0 0
      %644 = vmatpush.bf16.msra.mxu0 %v632
      %645 = vmatpush.bf16.msra.mxu0 %v631
      %646 = vmatmul.bf16.gmra.mxu0 %v636
      %v647 = vpop.f32.mrf.mxu0
      %v648 = vadd.f32 %v621, %v647
      %v649 = vpop.f32.mrf.mxu0
      %650 = vdwg.mxu0
      %v651 = vlaneseq
      %v652 = vshrl.u32 %v651, 7
      %v653 = vlaneseq
      %v654 = vand.u32 %v653, 127
      %vm655 = vcmp.gt.s32.totalorder %v654, %v652
      %v656 = vsel %vm655, -1e+09, 0.0
      %v657 = vld [vmem:[%s8] sm:$0xf]
      %v658 = vld [vmem:[%s8 + $0x4] sm:$0xf]
      %v659 = vld [vmem:[%s8 + $0x8] sm:$0xf]
      %v660 = vld [vmem:[%s8 + $0xc] sm:$0xf]
      %v661 = vpack.c.bf16 %v611, %v611
      %v662 = vpack.c.bf16 %v648, %v648
      %vm663 = vcmask 130048
      %v665 = vsel %vm663, %v661, 0
      %v668 = vsel %vm663, %v662, 0
      %670 = vmatpush.bf16.xpose.msra.mxu0 0
      %671 = vmatpush.bf16.xpose.msra.mxu0 0
      %672 = vmatpush.bf16.xpose.msra.mxu0 0
      %673 = vmatpush.bf16.xpose.msra.mxu0 0
      %674 = vmatpush.bf16.xpose.msra.mxu0 0
      %675 = vmatpush.bf16.xpose.msra.mxu0 0
      %676 = vmatpush.bf16.xpose.msra.mxu0 0
      %677 = vmatpush.bf16.xpose.msra.mxu0 %v668
      %678 = vmatmul.bf16.gmra.mxu0 %v665
      %v679 = vpop.f32.mrf.mxu0
      %v680 = vadd.f32 %v656, %v679
      %v681 = vpop.f32.mrf.mxu0
      %682 = vdwg.mxu0
      %vm683 = vcmask 64512
      %v684 = vsel %vm683, %v680, -inf
      %685 = vmax.xlane.f32.xlu0 %v684
      %v686 = vpop.xlane.xlu0 %685
      %v687 = vsub.f32 %v680, %v686
      %v688 = vmul.f32 %v687, 1.442695
      %v689 = vpow.pop %v688
      %v690 = vsel %vm683, %v689, 0.0
      %691 = vadd.xlane.f32.xlu0 %v690
      %v692 = vpop.xlane.xlu0 %691
      %v693 = vrcp.pop %v692
      %v694 = vmul.f32 %v689, %v693
      %v695 = vpack.c.bf16 %v694, %v694
      %697 = vrot.lane.b32.xlu0 %v662, 96
      %v698 = vpop.permute.xlu0 %697
      %v700 = vsel %vm683, %v695, 0
      %vm702 = vcmask 1043456
      %v704 = vsel %vm702, %v698, 0
      %706 = vmatpush.bf16.msra.mxu0 0
      %707 = vmatpush.bf16.msra.mxu0 0
      %708 = vmatpush.bf16.msra.mxu0 0
      %709 = vmatpush.bf16.msra.mxu0 0
      %710 = vmatpush.bf16.msra.mxu0 0
      %711 = vmatpush.bf16.msra.mxu0 0
      %712 = vmatpush.bf16.msra.mxu0 0
      %713 = vmatpush.bf16.msra.mxu0 %v704
      %714 = vmatmul.bf16.gmra.mxu0 %v700
      %v715 = vpop.f32.mrf.mxu0
      %v716 = vadd.f32 0.0, %v715
      %v717 = vpop.f32.mrf.mxu0
      %718 = vdwg.mxu0
      %v719 = vpack.c.bf16 %v716, %v716
      %721 = vrot.lane.b32.xlu0 %v661, 112
      %v722 = vpop.permute.xlu0 %721
      %723 = vrot.lane.b32.xlu0 %v662, 112
      %v724 = vpop.permute.xlu0 %723
      %v726 = vsel %vm663, %v722, 0
      %v729 = vsel %vm663, %v724, 0
      %731 = vmatpush.bf16.xpose.msra.mxu0 0
      %732 = vmatpush.bf16.xpose.msra.mxu0 0
      %733 = vmatpush.bf16.xpose.msra.mxu0 0
      %734 = vmatpush.bf16.xpose.msra.mxu0 0
      %735 = vmatpush.bf16.xpose.msra.mxu0 0
      %736 = vmatpush.bf16.xpose.msra.mxu0 0
      %737 = vmatpush.bf16.xpose.msra.mxu0 0
      %738 = vmatpush.bf16.xpose.msra.mxu0 %v729
      %739 = vmatmul.bf16.gmra.mxu0 %v726
      %v740 = vpop.f32.mrf.mxu0
      %v741 = vadd.f32 %v656, %v740
      %v742 = vpop.f32.mrf.mxu0
      %743 = vdwg.mxu0
      %v744 = vsel %vm683, %v741, -inf
      %745 = vmax.xlane.f32.xlu0 %v744
      %v746 = vpop.xlane.xlu0 %745
      %v747 = vsub.f32 %v741, %v746
      %v748 = vmul.f32 %v747, 1.442695
      %v749 = vpow.pop %v748
      %v750 = vsel %vm683, %v749, 0.0
      %751 = vadd.xlane.f32.xlu0 %v750
      %v752 = vpop.xlane.xlu0 %751
      %v753 = vrcp.pop %v752
      %v754 = vmul.f32 %v749, %v753
      %v755 = vpack.c.bf16 %v754, %v754
      %756 = vrot.lane.b32.xlu0 %v662, 80
      %v757 = vpop.permute.xlu0 %756
      %v759 = vsel %vm683, %v755, 0
      %v762 = vsel %vm702, %v757, 0
      %764 = vmatpush.bf16.msra.mxu0 0
      %765 = vmatpush.bf16.msra.mxu0 0
      %766 = vmatpush.bf16.msra.mxu0 0
      %767 = vmatpush.bf16.msra.mxu0 0
      %768 = vmatpush.bf16.msra.mxu0 0
      %769 = vmatpush.bf16.msra.mxu0 0
      %770 = vmatpush.bf16.msra.mxu0 0
      %771 = vmatpush.bf16.msra.mxu0 %v762
      %772 = vmatmul.bf16.gmra.mxu0 %v759
      %v773 = vpop.f32.mrf.mxu0
      %v774 = vadd.f32 0.0, %v773
      %v775 = vpop.f32.mrf.mxu0
      %776 = vdwg.mxu0
      %v777 = vpack.c.bf16 %v774, %v774
      %v780 = vunpack.c.l.b16 %v659
      %v781 = vunpack.c.l.b16 %v660
      %v782 = vpack.c.b16 %v781, %v780
      %v785 = vsel %vm663, %v777, 0
      %787 = vmatpush.bf16.msra.mxu0 0
      %788 = vmatpush.bf16.msra.mxu0 0
      %789 = vmatpush.bf16.msra.mxu0 0
      %790 = vmatpush.bf16.msra.mxu0 0
      %791 = vmatpush.bf16.msra.mxu0 0
      %792 = vmatpush.bf16.msra.mxu0 0
      %793 = vmatpush.bf16.msra.mxu0 0
      %794 = vmatpush.bf16.msra.mxu0 %v782
      %795 = vmatmul.bf16.gmra.mxu0 %v785
      %v796 = vpop.f32.mrf.mxu0
      %v797 = vadd.f32 0.0, %v796
      %v798 = vpop.f32.mrf.mxu0
      %799 = vdwg.mxu0
      %v802 = vunpack.c.l.b16 %v657
      %v803 = vunpack.c.l.b16 %v658
      %v804 = vpack.c.b16 %v803, %v802
      %v807 = vsel %vm663, %v719, 0
      %809 = vmatpush.bf16.msra.mxu0 0
      %810 = vmatpush.bf16.msra.mxu0 0
      %811 = vmatpush.bf16.msra.mxu0 0
      %812 = vmatpush.bf16.msra.mxu0 0
      %813 = vmatpush.bf16.msra.mxu0 0
      %814 = vmatpush.bf16.msra.mxu0 0
      %815 = vmatpush.bf16.msra.mxu0 0
      %816 = vmatpush.bf16.msra.mxu0 %v804
      %817 = vmatmul.bf16.gmra.mxu0 %v807
      %v818 = vpop.f32.mrf.mxu0
      %v819 = vadd.f32 %v797, %v818
      %v820 = vpop.f32.mrf.mxu0
      %821 = vdwg.mxu0
      %v822 = vld [vmem:[%s9] sm:$0x1]
      %v824 = vperm.slane %v822, 0
      %v826 = vadd.f32 %v819, %v824
      %v827 = vadd.f32 %v576, %v826
      %v828 = vld [vmem:[%s10] sm:$0x1]
      %v829 = vld [vmem:[%s11] sm:$0x1]
      %v830 = vsel %vm539, %v827, 0.0
      %831 = vadd.xlane.f32.xlu0 %v830
      %v832 = vpop.xlane.xlu0 %831
      %v833 = vmul.f32 %v832, %v549
      %v834 = vsub.f32 %v827, %v833
      %v835 = vmul.f32 %v834, %v834
      %v836 = vsel %vm539, %v835, 0.0
      %837 = vadd.xlane.f32.xlu0 %v836
      %v838 = vpop.xlane.xlu0 %837
      %v839 = vmul.f32 %v838, %v549
      %v840 = vadd.f32 %v839, 1e-08
      %v841 = vrsqrt.pop %v840
      %v842 = vmul.f32 %v841, %v840
      %v843 = vmul.f32 %v842, %v841
      %v844 = vmul.f32 0.5, %v843
      %v845 = vsub.f32 1.5, %v844
      %v846 = vmul.f32 %v841, %v845
      %vm847 = vweird.f32 %v840
      %vm848 = vweird.f32 %v841
      %vm849 = vmor %vm847, %vm848
      %v850 = vsel %vm849, %v841, %v846
      %v851 = vmul.f32 %v834, %v850
      %v853 = vperm.slane %v828, 0
      %v855 = vmul.f32 %v851, %v853
      %v857 = vperm.slane %v829, 0
      %v859 = vadd.f32 %v855, %v857
      %v860 = vld [vmem:[%s12] sm:$0xf]
      %v861 = vld [vmem:[%s12 + $0x4] sm:$0xf]
      %v862 = vld [vmem:[%s12 + $0x8] sm:$0xf]
      %v863 = vld [vmem:[%s12 + $0xc] sm:$0xf]
      %v864 = vpack.c.bf16 %v859, %v859
      %v865 = vld [vmem:[%s13] sm:$0x1]
      %v867 = vperm.slane %v865, 0
      %v873 = vunpack.c.l.b16 %v860
      %v874 = vunpack.c.l.b16 %v861
      %v875 = vunpack.c.l.b16 %v862
      %v876 = vunpack.c.l.b16 %v863
      %v877 = vpack.c.b16 %v874, %v873
      %v878 = vpack.c.b16 %v876, %v875
      %v882 = vsel %vm539, %v864, 0
      %884 = vmatpush.bf16.msra.mxu0 0
      %885 = vmatpush.bf16.msra.mxu0 0
      %886 = vmatpush.bf16.msra.mxu0 0
      %887 = vmatpush.bf16.msra.mxu0 0
      %888 = vmatpush.bf16.msra.mxu0 0
      %889 = vmatpush.bf16.msra.mxu0 0
      %890 = vmatpush.bf16.msra.mxu0 %v878
      %891 = vmatpush.bf16.msra.mxu0 %v877
      %892 = vmatmul.bf16.gmra.mxu0 %v882
      %v893 = vpop.f32.mrf.mxu0
      %v894 = vadd.f32 %v867, %v893
      %v895 = vpop.f32.mrf.mxu0
      %896 = vdwg.mxu0
      %v897 = vmax.f32 %v894, 0.0
      %v898 = vld [vmem:[%s14] sm:$0xf]
      %v899 = vld [vmem:[%s14 + $0x4] sm:$0xf]
      %v900 = vld [vmem:[%s14 + $0x8] sm:$0xf]
      %v901 = vld [vmem:[%s14 + $0xc] sm:$0xf]
      %v902 = vpack.c.bf16 %v897, %v897
      %v903 = vld [vmem:[%s15] sm:$0x1]
      %v905 = vperm.slane %v903, 0
      %v911 = vunpack.c.l.b16 %v898
      %v912 = vunpack.c.l.b16 %v899
      %v913 = vunpack.c.l.b16 %v900
      %v914 = vunpack.c.l.b16 %v901
      %v915 = vpack.c.b16 %v912, %v911
      %v916 = vpack.c.b16 %v914, %v913
      %v920 = vsel %vm539, %v902, 0
      %922 = vmatpush.bf16.msra.mxu0 0
      %923 = vmatpush.bf16.msra.mxu0 0
      %924 = vmatpush.bf16.msra.mxu0 0
      %925 = vmatpush.bf16.msra.mxu0 0
      %926 = vmatpush.bf16.msra.mxu0 0
      %927 = vmatpush.bf16.msra.mxu0 0
      %928 = vmatpush.bf16.msra.mxu0 %v916
      %929 = vmatpush.bf16.msra.mxu0 %v915
      %930 = vmatmul.bf16.gmra.mxu0 %v920
      %v931 = vpop.f32.mrf.mxu0
      %v932 = vadd.f32 %v905, %v931
      %v933 = vpop.f32.mrf.mxu0
      %934 = vdwg.mxu0
      %v935 = vadd.f32 %v932, %v859
      %937 = vset.pattern.permute.xlu0 0
      %938 = vperm.xlu0 %937, %v536
      %v939 = vpop.permute.xlu0 %938
      %v941 = vmul.f32 %v935, %v939
      %942 = vst.msk [vmem:[%s533] sm:$0xff] %vm539, %v941
      %p943 = scmp.lt.s32.totalorder %s27, 1
      %s944 = scalar_select %p943, %s27, 1
      %s945 = smul.addr %s944, 8
      %s946 = scalar_lea.vmem %s16, %s945
      // Predicated region
      $region85: #{sstp_forward.9} parent=83 // pred_check
        %p947 = pneg %p391
      $region86: #{sstp_forward.9} parent=83 // pred_check_branch
        %949 = sbr.rel (%p947) target = $region88
      $region87: #{sstp_forward.9} parent=83 // pred_region
        _
      $region88: #{sstp_forward.9} parent=83 // pred_fallthru
        _
    $region84: #{sstp_forward.9} parent=5 // pred_fallthru
      _
    %p950 = scmp.le.s32.totalorder 2, %s22
    // Predicated region
    $region89: #{sstp_forward.9} parent=5 // pred_check
      %p951 = pneg %p950
    $region90: #{sstp_forward.9} parent=5 // pred_check_branch
      %953 = sbr.rel (%p951) target = $region92
    $region91: #{sstp_forward.9} parent=5 // pred_region
      %s954 = ssub.s32 %s22, 2
      // Predicated region
      $region93: #{sstp_forward.9} parent=91 // pred_check
        %p955 = pneg %p397
      $region94: #{sstp_forward.9} parent=91 // pred_check_branch
        %957 = sbr.rel (%p955) target = $region96
      $region95: #{sstp_forward.9} parent=91 // pred_region
        %p958 = scmp.lt.s32.totalorder %s28, 1
        %s959 = scalar_select %p958, %s28, 1
        %s960 = smul.addr %s959, 8
        %s961 = scalar_lea.vmem %s16, %s960
      $region96: #{sstp_forward.9} parent=91 // pred_fallthru
        _
    $region92: #{sstp_forward.9} parent=5 // pred_fallthru
      _
  $region6: #{sstp_forward.9} parent=0 // loop_footer
    %s26 = sadd.s32 1, %s22
  $region7: #{sstp_forward.9} parent=0 // loop_footer_branch
    %21 = sbr.rel target = $region3
  $region8: #{sstp_forward.9} parent=0 // loop_exit
    _

// kernel: sstp_forward.8
$region0: #{sstp_forward.8}
  #allocation0 [shape = 'u32[]', space=smem, size = 0x4, offset = 0x4, fixed_abs, tag = 'smem constant byte address 0x4 - core index']
  #allocation1 [shape = 'u32[72,128]{1,0:T(1,128)}', space=vmem, size = 0x9000, scoped, tag = 'internal scratch']
  #allocation2 [shape = 'f32[2,32]{1,0:T(2,128)}', space=vmem, size = 0x400, scoped, tag = 'scratch operand']
  %s0 = inlined_call_operand.vmem [shape: f32[2,8,96], index: 0, kind: input, shape index: {}]
  %s1 = inlined_call_operand.vmem [shape: bf16[32,96], index: 1, kind: input, shape index: {}]
  %s2 = inlined_call_operand.vmem [shape: f32[1,96], index: 2, kind: input, shape index: {}]
  %s3 = inlined_call_operand.vmem [shape: f32[2,8,32], index: 3, kind: output, shape index: {}]
  %s4 = sld [smem:[#allocation0]]
  $region26: #{sstp_forward.8} parent=0
    _
  %s6 = ssub.s32 1, %s4
  %s7 = scalar_select 0, %s6, %s4
  // Predicated region
  $region2: #{sstp_forward.8} parent=0 // pred_check
    _
  $region3: #{sstp_forward.8} parent=0 // pred_check_branch
    %9 = sbr.rel (0) target = $region5
  $region4: #{sstp_forward.8} parent=0 // pred_region
    _
  $region5: #{sstp_forward.8} parent=0 // pred_fallthru
    _
  // Predicated region
  $region6: #{sstp_forward.8} parent=0 // pred_check
    _
  $region7: #{sstp_forward.8} parent=0 // pred_check_branch
    %11 = sbr.rel (0) target = $region9
  $region8: #{sstp_forward.8} parent=0 // pred_region
    _
  $region9: #{sstp_forward.8} parent=0 // pred_fallthru
    _
  // Predicated region
  $region10: #{sstp_forward.8} parent=0 // pred_check
    _
  $region11: #{sstp_forward.8} parent=0 // pred_check_branch
    %13 = sbr.rel (0) target = $region13
  $region12: #{sstp_forward.8} parent=0 // pred_region
    _
  $region13: #{sstp_forward.8} parent=0 // pred_fallthru
    _
  %p15 = scmp.eq.s32.totalorder 0, 0
  // Predicated region
  $region14: #{sstp_forward.8} parent=0 // pred_check
    %p16 = pneg %p15
  $region15: #{sstp_forward.8} parent=0 // pred_check_branch
    %18 = sbr.rel (%p16) target = $region17
  $region16: #{sstp_forward.8} parent=0 // pred_region
    %vm19 = vcmask 254976
    %20 = vst.msk [vmem:[#allocation2] sm:$0x3] %vm19, 0.0
  $region17: #{sstp_forward.8} parent=0 // pred_fallthru
    _
  %v21 = vld [vmem:[%s1] sm:$0xf]
  %v22 = vld [vmem:[%s1 + $0x4] sm:$0xf]
  %v23 = vld [vmem:[%s1 + $0x8] sm:$0xf]
  %v24 = vld [vmem:[%s1 + $0xc] sm:$0xf]
  %v25 = vld [vmem:[%s2] sm:$0x1]
  %v26 = vld [vmem:[%s0] sm:$0x1]
  %v27 = vld [vmem:[%s0 + $0x8] sm:$0x1]
  %v28 = vld [vmem:[#allocation2] sm:$0x3]
  %v29 = vpack.c.bf16 %v28, %v28
  %v31 = vperm.slane %v25, 0
  %v37 = vunpack.c.l.b16 %v21
  %v38 = vunpack.c.l.b16 %v22
  %v39 = vunpack.c.l.b16 %v23
  %v40 = vunpack.c.l.b16 %v24
  %v41 = vpack.c.b16 %v38, %v37
  %v42 = vpack.c.b16 %v40, %v39
  %vm45 = vcmask 261120
  %v47 = vsel %vm45, %v29, 0
  %49 = vmatpush.bf16.msra.mxu0 0
  %50 = vmatpush.bf16.msra.mxu0 0
  %51 = vmatpush.bf16.msra.mxu0 0
  %52 = vmatpush.bf16.msra.mxu0 0
  %53 = vmatpush.bf16.msra.mxu0 0
  %54 = vmatpush.bf16.msra.mxu0 0
  %55 = vmatpush.bf16.msra.mxu0 %v42
  %56 = vmatpush.bf16.msra.mxu0 %v41
  %57 = vmatmul.bf16.gmra.mxu0 %v47
  %v58 = vpop.f32.mrf.mxu0
  %v59 = vadd.f32 %v31, %v58
  %v60 = vpop.f32.mrf.mxu0
  %61 = vdwg.mxu0
  %v63 = vrot.slane %v59, 1
  %v66 = vadd.f32 %v26, %v59
  %v67 = vadd.f32 %v27, %v63
  %v68 = vxor.u32 %v66, 2147483648
  %v69 = vxor.u32 %v67, 2147483648
  %v70 = vmul.f32 %v68, 1.442695
  %v71 = vpow.pop %v70
  %v72 = vmul.f32 %v69, 1.442695
  %v73 = vpow.pop %v72
  %v74 = vadd.f32 %v71, 1.0
  %v75 = vadd.f32 %v73, 1.0
  %v76 = vrcp.pop %v74
  %v77 = vmul.f32 %v74, %v76
  %v78 = vsub.f32 1.0, %v77
  %v79 = vmul.f32 %v76, %v78
  %v80 = vadd.f32 %v76, %v79
  %vm81 = vweird.f32 %v74
  %vm82 = vweird.f32 %v76
  %vm83 = vmor %vm81, %vm82
  %v84 = vsel %vm83, %v76, %v80
  %v85 = vand.u32 2147483647, %v74
  %vm86 = vcmp.eq.f32.partialorder %v85, 8.507059e+37
  %v87 = vand.u32 %v74, 2147483648
  %v88 = vor.u32 1.1754944e-38, %v87
  %v89 = vsel %vm86, %v88, %v84
  %v90 = vmul.f32 1.0, %v89
  %v91 = vrcp.pop %v75
  %v92 = vmul.f32 %v75, %v91
  %v93 = vsub.f32 1.0, %v92
  %v94 = vmul.f32 %v91, %v93
  %v95 = vadd.f32 %v91, %v94
  %vm96 = vweird.f32 %v75
  %vm97 = vweird.f32 %v91
  %vm98 = vmor %vm96, %vm97
  %v99 = vsel %vm98, %v91, %v95
  %v100 = vand.u32 2147483647, %v75
  %vm101 = vcmp.eq.f32.partialorder %v100, 8.507059e+37
  %v102 = vand.u32 %v75, 2147483648
  %v103 = vor.u32 1.1754944e-38, %v102
  %v104 = vsel %vm101, %v103, %v99
  %v105 = vmul.f32 1.0, %v104
  %106 = vrot.lane.b32.xlu0 %v59, 64
  %v107 = vpop.permute.xlu0 %106
  %108 = vrot.lane.b32.xlu0 %v63, 64
  %v109 = vpop.permute.xlu0 %108
  %v112 = vmul.f32 %v90, %v107
  %v113 = vmul.f32 %v105, %v109
  %116 = vrot.lane.b32.xlu0 %v112, 64
  %v117 = vpop.permute.xlu0 %116
  %118 = vrot.lane.b32.xlu0 %v113, 64
  %v119 = vpop.permute.xlu0 %118
  %v122 = vadd.f32 %v26, %v117
  %v123 = vadd.f32 %v27, %v119
  %v124 = vtanh.pop %v122
  %v125 = vtanh.pop %v123
  %v126 = vsub.f32 1.0, %v90
  %v127 = vsub.f32 1.0, %v105
  %130 = vrot.lane.b32.xlu0 %v124, 96
  %v131 = vpop.permute.xlu0 %130
  %132 = vrot.lane.b32.xlu0 %v125, 96
  %v133 = vpop.permute.xlu0 %132
  %v136 = vmul.f32 %v126, %v131
  %v137 = vmul.f32 %v127, %v133
  %v139 = vrot.slane %v28, 1
  %140 = vrot.lane.b32.xlu0 %v28, 32
  %v141 = vpop.permute.xlu0 %140
  %142 = vrot.lane.b32.xlu0 %v139, 32
  %v143 = vpop.permute.xlu0 %142
  %v146 = vmul.f32 %v90, %v141
  %v147 = vmul.f32 %v105, %v143
  %v148 = vadd.f32 %v136, %v146
  %v149 = vadd.f32 %v137, %v147
  %v152 = vrot.slane %v149, 7
  %vm153 = vcmask 1041409
  %v154 = vsel %vm153, %v152, %v148
  %155 = vrot.lane.b32.xlu0 %v154, 96
  %v156 = vpop.permute.xlu0 %155
  %vm158 = vcmask 254976
  %159 = vst.msk [vmem:[#allocation2] sm:$0x3] %vm158, %v156
  %160 = vrot.lane.b32.xlu0 %v148, 96
  %v161 = vpop.permute.xlu0 %160
  %162 = vrot.lane.b32.xlu0 %v149, 96
  %v163 = vpop.permute.xlu0 %162
  %vm166 = vcmask 253952
  %167 = vst.msk [vmem:[%s3] sm:$0x1] %vm166, %v161
  %168 = vst.msk [vmem:[%s3 + $0x8] sm:$0x1] %vm166, %v163
  %v169 = vld [vmem:[%s0 + $0x1] sm:$0x1]
  %v170 = vld [vmem:[%s0 + $0x9] sm:$0x1]
  %v171 = vld [vmem:[#allocation2] sm:$0x3]
  %v172 = vpack.c.bf16 %v171, %v171
  %v174 = vsel %vm45, %v172, 0
  %176 = vmatpush.bf16.msra.mxu0 0
  %177 = vmatpush.bf16.msra.mxu0 0
  %178 = vmatpush.bf16.msra.mxu0 0
  %179 = vmatpush.bf16.msra.mxu0 0
  %180 = vmatpush.bf16.msra.mxu0 0
  %181 = vmatpush.bf16.msra.mxu0 0
  %182 = vmatpush.bf16.msra.mxu0 %v42
  %183 = vmatpush.bf16.msra.mxu0 %v41
  %184 = vmatmul.bf16.gmra.mxu0 %v174
  %v185 = vpop.f32.mrf.mxu0
  %v186 = vadd.f32 %v31, %v185
  %v187 = vpop.f32.mrf.mxu0
  %188 = vdwg.mxu0
  %v190 = vrot.slane %v186, 1
  %v193 = vadd.f32 %v169, %v186
  %v194 = vadd.f32 %v170, %v190
  %v195 = vxor.u32 %v193, 2147483648
  %v196 = vxor.u32 %v194, 2147483648
  %v197 = vmul.f32 %v195, 1.442695
  %v198 = vpow.pop %v197
  %v199 = vmul.f32 %v196, 1.442695
  %v200 = vpow.pop %v199
  %v201 = vadd.f32 %v198, 1.0
  %v202 = vadd.f32 %v200, 1.0
  %v203 = vrcp.pop %v201
  %v204 = vmul.f32 %v201, %v203
  %v205 = vsub.f32 1.0, %v204
  %v206 = vmul.f32 %v203, %v205
  %v207 = vadd.f32 %v203, %v206
  %vm208 = vweird.f32 %v201
  %vm209 = vweird.f32 %v203
  %vm210 = vmor %vm208, %vm209
  %v211 = vsel %vm210, %v203, %v207
  %v212 = vand.u32 2147483647, %v201
  %vm213 = vcmp.eq.f32.partialorder %v212, 8.507059e+37
  %v214 = vand.u32 %v201, 2147483648
  %v215 = vor.u32 1.1754944e-38, %v214
  %v216 = vsel %vm213, %v215, %v211
  %v217 = vmul.f32 1.0, %v216
  %v218 = vrcp.pop %v202
  %v219 = vmul.f32 %v202, %v218
  %v220 = vsub.f32 1.0, %v219
  %v221 = vmul.f32 %v218, %v220
  %v222 = vadd.f32 %v218, %v221
  %vm223 = vweird.f32 %v202
  %vm224 = vweird.f32 %v218
  %vm225 = vmor %vm223, %vm224
  %v226 = vsel %vm225, %v218, %v222
  %v227 = vand.u32 2147483647, %v202
  %vm228 = vcmp.eq.f32.partialorder %v227, 8.507059e+37
  %v229 = vand.u32 %v202, 2147483648
  %v230 = vor.u32 1.1754944e-38, %v229
  %v231 = vsel %vm228, %v230, %v226
  %v232 = vmul.f32 1.0, %v231
  %233 = vrot.lane.b32.xlu0 %v186, 64
  %v234 = vpop.permute.xlu0 %233
  %235 = vrot.lane.b32.xlu0 %v190, 64
  %v236 = vpop.permute.xlu0 %235
  %v239 = vmul.f32 %v217, %v234
  %v240 = vmul.f32 %v232, %v236
  %243 = vrot.lane.b32.xlu0 %v239, 64
  %v244 = vpop.permute.xlu0 %243
  %245 = vrot.lane.b32.xlu0 %v240, 64
  %v246 = vpop.permute.xlu0 %245
  %v249 = vadd.f32 %v169, %v244
  %v250 = vadd.f32 %v170, %v246
  %v251 = vtanh.pop %v249
  %v252 = vtanh.pop %v250
  %v253 = vsub.f32 1.0, %v217
  %v254 = vsub.f32 1.0, %v232
  %257 = vrot.lane.b32.xlu0 %v251, 96
  %v258 = vpop.permute.xlu0 %257
  %259 = vrot.lane.b32.xlu0 %v252, 96
  %v260 = vpop.permute.xlu0 %259
  %v263 = vmul.f32 %v253, %v258
  %v264 = vmul.f32 %v254, %v260
  %v266 = vrot.slane %v171, 1
  %267 = vrot.lane.b32.xlu0 %v171, 32
  %v268 = vpop.permute.xlu0 %267
  %269 = vrot.lane.b32.xlu0 %v266, 32
  %v270 = vpop.permute.xlu0 %269
  %v273 = vmul.f32 %v217, %v268
  %v274 = vmul.f32 %v232, %v270
  %v275 = vadd.f32 %v263, %v273
  %v276 = vadd.f32 %v264, %v274
  %v279 = vrot.slane %v276, 7
  %v280 = vsel %vm153, %v279, %v275
  %281 = vrot.lane.b32.xlu0 %v280, 96
  %v282 = vpop.permute.xlu0 %281
  %284 = vst.msk [vmem:[#allocation2] sm:$0x3] %vm158, %v282
  %285 = vrot.lane.b32.xlu0 %v275, 96
  %v286 = vpop.permute.xlu0 %285
  %287 = vrot.lane.b32.xlu0 %v276, 96
  %v288 = vpop.permute.xlu0 %287
  %291 = vst.msk [vmem:[%s3 + $0x1] sm:$0x1] %vm166, %v286
  %292 = vst.msk [vmem:[%s3 + $0x9] sm:$0x1] %vm166, %v288
  %v293 = vld [vmem:[%s0 + $0x2] sm:$0x1]
  %v294 = vld [vmem:[%s0 + $0xa] sm:$0x1]
  %v295 = vld [vmem:[#allocation2] sm:$0x3]
  %v296 = vpack.c.bf16 %v295, %v295
  %v298 = vsel %vm45, %v296, 0
  %300 = vmatpush.bf16.msra.mxu0 0
  %301 = vmatpush.bf16.msra.mxu0 0
  %302 = vmatpush.bf16.msra.mxu0 0
  %303 = vmatpush.bf16.msra.mxu0 0
  %304 = vmatpush.bf16.msra.mxu0 0
  %305 = vmatpush.bf16.msra.mxu0 0
  %306 = vmatpush.bf16.msra.mxu0 %v42
  %307 = vmatpush.bf16.msra.mxu0 %v41
  %308 = vmatmul.bf16.gmra.mxu0 %v298
  %v309 = vpop.f32.mrf.mxu0
  %v310 = vadd.f32 %v31, %v309
  %v311 = vpop.f32.mrf.mxu0
  %312 = vdwg.mxu0
  %v314 = vrot.slane %v310, 1
  %v317 = vadd.f32 %v293, %v310
  %v318 = vadd.f32 %v294, %v314
  %v319 = vxor.u32 %v317, 2147483648
  %v320 = vxor.u32 %v318, 2147483648
  %v321 = vmul.f32 %v319, 1.442695
  %v322 = vpow.pop %v321
  %v323 = vmul.f32 %v320, 1.442695
  %v324 = vpow.pop %v323
  %v325 = vadd.f32 %v322, 1.0
  %v326 = vadd.f32 %v324, 1.0
  %v327 = vrcp.pop %v325
  %v328 = vmul.f32 %v325, %v327
  %v329 = vsub.f32 1.0, %v328
  %v330 = vmul.f32 %v327, %v329
  %v331 = vadd.f32 %v327, %v330
  %vm332 = vweird.f32 %v325
  %vm333 = vweird.f32 %v327
  %vm334 = vmor %vm332, %vm333
  %v335 = vsel %vm334, %v327, %v331
  %v336 = vand.u32 2147483647, %v325
  %vm337 = vcmp.eq.f32.partialorder %v336, 8.507059e+37
  %v338 = vand.u32 %v325, 2147483648
  %v339 = vor.u32 1.1754944e-38, %v338
  %v340 = vsel %vm337, %v339, %v335
  %v341 = vmul.f32 1.0, %v340
  %v342 = vrcp.pop %v326
  %v343 = vmul.f32 %v326, %v342
  %v344 = vsub.f32 1.0, %v343
  %v345 = vmul.f32 %v342, %v344
  %v346 = vadd.f32 %v342, %v345
  %vm347 = vweird.f32 %v326
  %vm348 = vweird.f32 %v342
  %vm349 = vmor %vm347, %vm348
  %v350 = vsel %vm349, %v342, %v346
  %v351 = vand.u32 2147483647, %v326
  %vm352 = vcmp.eq.f32.partialorder %v351, 8.507059e+37
  %v353 = vand.u32 %v326, 2147483648
  %v354 = vor.u32 1.1754944e-38, %v353
  %v355 = vsel %vm352, %v354, %v350
  %v356 = vmul.f32 1.0, %v355
  %357 = vrot.lane.b32.xlu0 %v310, 64
  %v358 = vpop.permute.xlu0 %357
  %359 = vrot.lane.b32.xlu0 %v314, 64
  %v360 = vpop.permute.xlu0 %359
  %v363 = vmul.f32 %v341, %v358
  %v364 = vmul.f32 %v356, %v360
  %367 = vrot.lane.b32.xlu0 %v363, 64
  %v368 = vpop.permute.xlu0 %367
  %369 = vrot.lane.b32.xlu0 %v364, 64
  %v370 = vpop.permute.xlu0 %369
  %v373 = vadd.f32 %v293, %v368
  %v374 = vadd.f32 %v294, %v370
  %v375 = vtanh.pop %v373
  %v376 = vtanh.pop %v374
  %v377 = vsub.f32 1.0, %v341
  %v378 = vsub.f32 1.0, %v356
  %381 = vrot.lane.b32.xlu0 %v375, 96
  %v382 = vpop.permute.xlu0 %381
  %383 = vrot.lane.b32.xlu0 %v376, 96
  %v384 = vpop.permute.xlu0 %383
  %v387 = vmul.f32 %v377, %v382
  %v388 = vmul.f32 %v378, %v384
  %v390 = vrot.slane %v295, 1
  %391 = vrot.lane.b32.xlu0 %v295, 32
  %v392 = vpop.permute.xlu0 %391
  %393 = vrot.lane.b32.xlu0 %v390, 32
  %v394 = vpop.permute.xlu0 %393
  %v397 = vmul.f32 %v341, %v392
  %v398 = vmul.f32 %v356, %v394
  %v399 = vadd.f32 %v387, %v397
  %v400 = vadd.f32 %v388, %v398
  %v403 = vrot.slane %v400, 7
  %v404 = vsel %vm153, %v403, %v399
  %405 = vrot.lane.b32.xlu0 %v404, 96
  %v406 = vpop.permute.xlu0 %405
  %408 = vst.msk [vmem:[#allocation2] sm:$0x3] %vm158, %v406
  %409 = vrot.lane.b32.xlu0 %v399, 96
  %v410 = vpop.permute.xlu0 %409
  %411 = vrot.lane.b32.xlu0 %v400, 96
  %v412 = vpop.permute.xlu0 %411
  %415 = vst.msk [vmem:[%s3 + $0x2] sm:$0x1] %vm166, %v410
  %416 = vst.msk [vmem:[%s3 + $0xa] sm:$0x1] %vm166, %v412
  %v417 = vld [vmem:[%s0 + $0x3] sm:$0x1]
  %v418 = vld [vmem:[%s0 + $0xb] sm:$0x1]
  %v419 = vld [vmem:[#allocation2] sm:$0x3]
  %v420 = vpack.c.bf16 %v419, %v419
  %v422 = vsel %vm45, %v420, 0
  %424 = vmatpush.bf16.msra.mxu0 0
  %425 = vmatpush.bf16.msra.mxu0 0
  %426 = vmatpush.bf16.msra.mxu0 0
  %427 = vmatpush.bf16.msra.mxu0 0
  %428 = vmatpush.bf16.msra.mxu0 0
  %429 = vmatpush.bf16.msra.mxu0 0
  %430 = vmatpush.bf16.msra.mxu0 %v42
  %431 = vmatpush.bf16.msra.mxu0 %v41
  %432 = vmatmul.bf16.gmra.mxu0 %v422
  %v433 = vpop.f32.mrf.mxu0
  %v434 = vadd.f32 %v31, %v433
  %v435 = vpop.f32.mrf.mxu0
  %436 = vdwg.mxu0
  %v438 = vrot.slane %v434, 1
  %v441 = vadd.f32 %v417, %v434
  %v442 = vadd.f32 %v418, %v438
  %v443 = vxor.u32 %v441, 2147483648
  %v444 = vxor.u32 %v442, 2147483648
  %v445 = vmul.f32 %v443, 1.442695
  %v446 = vpow.pop %v445
  %v447 = vmul.f32 %v444, 1.442695
  %v448 = vpow.pop %v447
  %v449 = vadd.f32 %v446, 1.0
  %v450 = vadd.f32 %v448, 1.0
  %v451 = vrcp.pop %v449
  %v452 = vmul.f32 %v449, %v451
  %v453 = vsub.f32 1.0, %v452
  %v454 = vmul.f32 %v451, %v453
  %v455 = vadd.f32 %v451, %v454
  %vm456 = vweird.f32 %v449
  %vm457 = vweird.f32 %v451
  %vm458 = vmor %vm456, %vm457
  %v459 = vsel %vm458, %v451, %v455
  %v460 = vand.u32 2147483647, %v449
  %vm461 = vcmp.eq.f32.partialorder %v460, 8.507059e+37
  %v462 = vand.u32 %v449, 2147483648
  %v463 = vor.u32 1.1754944e-38, %v462
  %v464 = vsel %vm461, %v463, %v459
  %v465 = vmul.f32 1.0, %v464
  %v466 = vrcp.pop %v450
  %v467 = vmul.f32 %v450, %v466
  %v468 = vsub.f32 1.0, %v467
  %v469 = vmul.f32 %v466, %v468
  %v470 = vadd.f32 %v466, %v469
  %vm471 = vweird.f32 %v450
  %vm472 = vweird.f32 %v466
  %vm473 = vmor %vm471, %vm472
  %v474 = vsel %vm473, %v466, %v470
  %v475 = vand.u32 2147483647, %v450
  %vm476 = vcmp.eq.f32.partialorder %v475, 8.507059e+37
  %v477 = vand.u32 %v450, 2147483648
  %v478 = vor.u32 1.1754944e-38, %v477
  %v479 = vsel %vm476, %v478, %v474
  %v480 = vmul.f32 1.0, %v479
  %481 = vrot.lane.b32.xlu0 %v434, 64
  %v482 = vpop.permute.xlu0 %481
  %483 = vrot.lane.b32.xlu0 %v438, 64
  %v484 = vpop.permute.xlu0 %483
  %v487 = vmul.f32 %v465, %v482
  %v488 = vmul.f32 %v480, %v484
  %491 = vrot.lane.b32.xlu0 %v487, 64
  %v492 = vpop.permute.xlu0 %491
  %493 = vrot.lane.b32.xlu0 %v488, 64
  %v494 = vpop.permute.xlu0 %493
  %v497 = vadd.f32 %v417, %v492
  %v498 = vadd.f32 %v418, %v494
  %v499 = vtanh.pop %v497
  %v500 = vtanh.pop %v498
  %v501 = vsub.f32 1.0, %v465
  %v502 = vsub.f32 1.0, %v480
  %505 = vrot.lane.b32.xlu0 %v499, 96
  %v506 = vpop.permute.xlu0 %505
  %507 = vrot.lane.b32.xlu0 %v500, 96
  %v508 = vpop.permute.xlu0 %507
  %v511 = vmul.f32 %v501, %v506
  %v512 = vmul.f32 %v502, %v508
  %v514 = vrot.slane %v419, 1
  %515 = vrot.lane.b32.xlu0 %v419, 32
  %v516 = vpop.permute.xlu0 %515
  %517 = vrot.lane.b32.xlu0 %v514, 32
  %v518 = vpop.permute.xlu0 %517
  %v521 = vmul.f32 %v465, %v516
  %v522 = vmul.f32 %v480, %v518
  %v523 = vadd.f32 %v511, %v521
  %v524 = vadd.f32 %v512, %v522
  %v527 = vrot.slane %v524, 7
  %v528 = vsel %vm153, %v527, %v523
  %529 = vrot.lane.b32.xlu0 %v528, 96
  %v530 = vpop.permute.xlu0 %529
  %532 = vst.msk [vmem:[#allocation2] sm:$0x3] %vm158, %v530
  %533 = vrot.lane.b32.xlu0 %v523, 96
  %v534 = vpop.permute.xlu0 %533
  %535 = vrot.lane.b32.xlu0 %v524, 96
  %v536 = vpop.permute.xlu0 %535
  %539 = vst.msk [vmem:[%s3 + $0x3] sm:$0x1] %vm166, %v534
  %540 = vst.msk [vmem:[%s3 + $0xb] sm:$0x1] %vm166, %v536
  %v541 = vld [vmem:[%s0 + $0x4] sm:$0x1]
  %v542 = vld [vmem:[%s0 + $0xc] sm:$0x1]
  %v543 = vld [vmem:[#allocation2] sm:$0x3]
  %v544 = vpack.c.bf16 %v543, %v543
  %v546 = vsel %vm45, %v544, 0
  %548 = vmatpush.bf16.msra.mxu0 0
  %549 = vmatpush.bf16.msra.mxu0 0
  %550 = vmatpush.bf16.msra.mxu0 0
  %551 = vmatpush.bf16.msra.mxu0 0
  %552 = vmatpush.bf16.msra.mxu0 0
  %553 = vmatpush.bf16.msra.mxu0 0
  %554 = vmatpush.bf16.msra.mxu0 %v42
  %555 = vmatpush.bf16.msra.mxu0 %v41
  %556 = vmatmul.bf16.gmra.mxu0 %v546
  %v557 = vpop.f32.mrf.mxu0
  %v558 = vadd.f32 %v31, %v557
  %v559 = vpop.f32.mrf.mxu0
  %560 = vdwg.mxu0
  %v562 = vrot.slane %v558, 1
  %v565 = vadd.f32 %v541, %v558
  %v566 = vadd.f32 %v542, %v562
  %v567 = vxor.u32 %v565, 2147483648
  %v568 = vxor.u32 %v566, 2147483648
  %v569 = vmul.f32 %v567, 1.442695
  %v570 = vpow.pop %v569
  %v571 = vmul.f32 %v568, 1.442695
  %v572 = vpow.pop %v571
  %v573 = vadd.f32 %v570, 1.0
  %v574 = vadd.f32 %v572, 1.0
  %v575 = vrcp.pop %v573
  %v576 = vmul.f32 %v573, %v575
  %v577 = vsub.f32 1.0, %v576
  %v578 = vmul.f32 %v575, %v577
  %v579 = vadd.f32 %v575, %v578
  %vm580 = vweird.f32 %v573
  %vm581 = vweird.f32 %v575
  %vm582 = vmor %vm580, %vm581
  %v583 = vsel %vm582, %v575, %v579
  %v584 = vand.u32 2147483647, %v573
  %vm585 = vcmp.eq.f32.partialorder %v584, 8.507059e+37
  %v586 = vand.u32 %v573, 2147483648
  %v587 = vor.u32 1.1754944e-38, %v586
  %v588 = vsel %vm585, %v587, %v583
  %v589 = vmul.f32 1.0, %v588
  %v590 = vrcp.pop %v574
  %v591 = vmul.f32 %v574, %v590
  %v592 = vsub.f32 1.0, %v591
  %v593 = vmul.f32 %v590, %v592
  %v594 = vadd.f32 %v590, %v593
  %vm595 = vweird.f32 %v574
  %vm596 = vweird.f32 %v590
  %vm597 = vmor %vm595, %vm596
  %v598 = vsel %vm597, %v590, %v594
  %v599 = vand.u32 2147483647, %v574
  %vm600 = vcmp.eq.f32.partialorder %v599, 8.507059e+37
  %v601 = vand.u32 %v574, 2147483648
  %v602 = vor.u32 1.1754944e-38, %v601
  %v603 = vsel %vm600, %v602, %v598
  %v604 = vmul.f32 1.0, %v603
  %605 = vrot.lane.b32.xlu0 %v558, 64
  %v606 = vpop.permute.xlu0 %605
  %607 = vrot.lane.b32.xlu0 %v562, 64
  %v608 = vpop.permute.xlu0 %607
  %v611 = vmul.f32 %v589, %v606
  %v612 = vmul.f32 %v604, %v608
  %615 = vrot.lane.b32.xlu0 %v611, 64
  %v616 = vpop.permute.xlu0 %615
  %617 = vrot.lane.b32.xlu0 %v612, 64
  %v618 = vpop.permute.xlu0 %617
  %v621 = vadd.f32 %v541, %v616
  %v622 = vadd.f32 %v542, %v618
  %v623 = vtanh.pop %v621
  %v624 = vtanh.pop %v622
  %v625 = vsub.f32 1.0, %v589
  %v626 = vsub.f32 1.0, %v604
  %629 = vrot.lane.b32.xlu0 %v623, 96
  %v630 = vpop.permute.xlu0 %629
  %631 = vrot.lane.b32.xlu0 %v624, 96
  %v632 = vpop.permute.xlu0 %631
  %v635 = vmul.f32 %v625, %v630
  %v636 = vmul.f32 %v626, %v632
  %v638 = vrot.slane %v543, 1
  %639 = vrot.lane.b32.xlu0 %v543, 32
  %v640 = vpop.permute.xlu0 %639
  %641 = vrot.lane.b32.xlu0 %v638, 32
  %v642 = vpop.permute.xlu0 %641
  %v645 = vmul.f32 %v589, %v640
  %v646 = vmul.f32 %v604, %v642
  %v647 = vadd.f32 %v635, %v645
  %v648 = vadd.f32 %v636, %v646
  %v651 = vrot.slane %v648, 7
  %v652 = vsel %vm153, %v651, %v647
  %653 = vrot.lane.b32.xlu0 %v652, 96
  %v654 = vpop.permute.xlu0 %653
  %656 = vst.msk [vmem:[#allocation2] sm:$0x3] %vm158, %v654
  %657 = vrot.lane.b32.xlu0 %v647, 96
  %v658 = vpop.permute.xlu0 %657
  %659 = vrot.lane.b32.xlu0 %v648, 96
  %v660 = vpop.permute.xlu0 %659
  %663 = vst.msk [vmem:[%s3 + $0x4] sm:$0x1] %vm166, %v658
  %664 = vst.msk [vmem:[%s3 + $0xc] sm:$0x1] %vm166, %v660
  %v665 = vld [vmem:[%s0 + $0x5] sm:$0x1]
  %v666 = vld [vmem:[%s0 + $0xd] sm:$0x1]
  %v667 = vld [vmem:[#allocation2] sm:$0x3]
  %v668 = vpack.c.bf16 %v667, %v667
  %v670 = vsel %vm45, %v668, 0
  %672 = vmatpush.bf16.msra.mxu0 0
  %673 = vmatpush.bf16.msra.mxu0 0
  %674 = vmatpush.bf16.msra.mxu0 0
  %675 = vmatpush.bf16.msra.mxu0 0
  %676 = vmatpush.bf16.msra.mxu0 0
  %677 = vmatpush.bf16.msra.mxu0 0
  %678 = vmatpush.bf16.msra.mxu0 %v42
  %679 = vmatpush.bf16.msra.mxu0 %v41
  %680 = vmatmul.bf16.gmra.mxu0 %v670
  %v681 = vpop.f32.mrf.mxu0
  %v682 = vadd.f32 %v31, %v681
  %v683 = vpop.f32.mrf.mxu0
  %684 = vdwg.mxu0
  %v686 = vrot.slane %v682, 1
  %v689 = vadd.f32 %v665, %v682
  %v690 = vadd.f32 %v666, %v686
  %v691 = vxor.u32 %v689, 2147483648
  %v692 = vxor.u32 %v690, 2147483648
  %v693 = vmul.f32 %v691, 1.442695
  %v694 = vpow.pop %v693
  %v695 = vmul.f32 %v692, 1.442695
  %v696 = vpow.pop %v695
  %v697 = vadd.f32 %v694, 1.0
  %v698 = vadd.f32 %v696, 1.0
  %v699 = vrcp.pop %v697
  %v700 = vmul.f32 %v697, %v699
  %v701 = vsub.f32 1.0, %v700
  %v702 = vmul.f32 %v699, %v701
  %v703 = vadd.f32 %v699, %v702
  %vm704 = vweird.f32 %v697
  %vm705 = vweird.f32 %v699
  %vm706 = vmor %vm704, %vm705
  %v707 = vsel %vm706, %v699, %v703
  %v708 = vand.u32 2147483647, %v697
  %vm709 = vcmp.eq.f32.partialorder %v708, 8.507059e+37
  %v710 = vand.u32 %v697, 2147483648
  %v711 = vor.u32 1.1754944e-38, %v710
  %v712 = vsel %vm709, %v711, %v707
  %v713 = vmul.f32 1.0, %v712
  %v714 = vrcp.pop %v698
  %v715 = vmul.f32 %v698, %v714
  %v716 = vsub.f32 1.0, %v715
  %v717 = vmul.f32 %v714, %v716
  %v718 = vadd.f32 %v714, %v717
  %vm719 = vweird.f32 %v698
  %vm720 = vweird.f32 %v714
  %vm721 = vmor %vm719, %vm720
  %v722 = vsel %vm721, %v714, %v718
  %v723 = vand.u32 2147483647, %v698
  %vm724 = vcmp.eq.f32.partialorder %v723, 8.507059e+37
  %v725 = vand.u32 %v698, 2147483648
  %v726 = vor.u32 1.1754944e-38, %v725
  %v727 = vsel %vm724, %v726, %v722
  %v728 = vmul.f32 1.0, %v727
  %729 = vrot.lane.b32.xlu0 %v682, 64
  %v730 = vpop.permute.xlu0 %729
  %731 = vrot.lane.b32.xlu0 %v686, 64
  %v732 = vpop.permute.xlu0 %731
  %v735 = vmul.f32 %v713, %v730
  %v736 = vmul.f32 %v728, %v732
  %739 = vrot.lane.b32.xlu0 %v735, 64
  %v740 = vpop.permute.xlu0 %739
  %741 = vrot.lane.b32.xlu0 %v736, 64
  %v742 = vpop.permute.xlu0 %741
  %v745 = vadd.f32 %v665, %v740
  %v746 = vadd.f32 %v666, %v742
  %v747 = vtanh.pop %v745
  %v748 = vtanh.pop %v746
  %v749 = vsub.f32 1.0, %v713
  %v750 = vsub.f32 1.0, %v728
  %753 = vrot.lane.b32.xlu0 %v747, 96
  %v754 = vpop.permute.xlu0 %753
  %755 = vrot.lane.b32.xlu0 %v748, 96
  %v756 = vpop.permute.xlu0 %755
  %v759 = vmul.f32 %v749, %v754
  %v760 = vmul.f32 %v750, %v756
  %v762 = vrot.slane %v667, 1
  %763 = vrot.lane.b32.xlu0 %v667, 32
  %v764 = vpop.permute.xlu0 %763
  %765 = vrot.lane.b32.xlu0 %v762, 32
  %v766 = vpop.permute.xlu0 %765
  %v769 = vmul.f32 %v713, %v764
  %v770 = vmul.f32 %v728, %v766
  %v771 = vadd.f32 %v759, %v769
  %v772 = vadd.f32 %v760, %v770
  %v775 = vrot.slane %v772, 7
  %v776 = vsel %vm153, %v775, %v771
  %777 = vrot.lane.b32.xlu0 %v776, 96
  %v778 = vpop.permute.xlu0 %777
  %780 = vst.msk [vmem:[#allocation2] sm:$0x3] %vm158, %v778
  %781 = vrot.lane.b32.xlu0 %v771, 96
  %v782 = vpop.permute.xlu0 %781
  %783 = vrot.lane.b32.xlu0 %v772, 96
  %v784 = vpop.permute.xlu0 %783
  %787 = vst.msk [vmem:[%s3 + $0x5] sm:$0x1] %vm166, %v782
  %788 = vst.msk [vmem:[%s3 + $0xd] sm:$0x1] %vm166, %v784
  %v789 = vld [vmem:[%s0 + $0x6] sm:$0x1]
  %v790 = vld [vmem:[%s0 + $0xe] sm:$0x1]
  %v791 = vld [vmem:[#allocation2] sm:$0x3]
  %v792 = vpack.c.bf16 %v791, %v791
  %v794 = vsel %vm45, %v792, 0
  %796 = vmatpush.bf16.msra.mxu0 0
  %797 = vmatpush.bf16.msra.mxu0 0
  %798 = vmatpush.bf16.msra.mxu0 0
  %799 = vmatpush.bf16.msra.mxu0 0
  %800 = vmatpush.bf16.msra.mxu0 0
  %801 = vmatpush.bf16.msra.mxu0 0
  %802 = vmatpush.bf16.msra.mxu0 %v42
  %803 = vmatpush.bf16.msra.mxu0 %v41
  %804 = vmatmul.bf16.gmra.mxu0 %v794
  %v805 = vpop.f32.mrf.mxu0
  %v806 = vadd.f32 %v31, %v805
  %v807 = vpop.f32.mrf.mxu0
  %808 = vdwg.mxu0
  %v810 = vrot.slane %v806, 1
  %v813 = vadd.f32 %v789, %v806
  %v814 = vadd.f32 %v790, %v810
  %v815 = vxor.u32 %v813, 2147483648
  %v816 = vxor.u32 %v814, 2147483648
  %v817 = vmul.f32 %v815, 1.442695
  %v818 = vpow.pop %v817
  %v819 = vmul.f32 %v816, 1.442695
  %v820 = vpow.pop %v819
  %v821 = vadd.f32 %v818, 1.0
  %v822 = vadd.f32 %v820, 1.0
  %v823 = vrcp.pop %v821
  %v824 = vmul.f32 %v821, %v823
  %v825 = vsub.f32 1.0, %v824
  %v826 = vmul.f32 %v823, %v825
  %v827 = vadd.f32 %v823, %v826
  %vm828 = vweird.f32 %v821
  %vm829 = vweird.f32 %v823
  %vm830 = vmor %vm828, %vm829
  %v831 = vsel %vm830, %v823, %v827
  %v832 = vand.u32 2147483647, %v821
  %vm833 = vcmp.eq.f32.partialorder %v832, 8.507059e+37
  %v834 = vand.u32 %v821, 2147483648
  %v835 = vor.u32 1.1754944e-38, %v834
  %v836 = vsel %vm833, %v835, %v831
  %v837 = vmul.f32 1.0, %v836
  %v838 = vrcp.pop %v822
  %v839 = vmul.f32 %v822, %v838
  %v840 = vsub.f32 1.0, %v839
  %v841 = vmul.f32 %v838, %v840
  %v842 = vadd.f32 %v838, %v841
  %vm843 = vweird.f32 %v822
  %vm844 = vweird.f32 %v838
  %vm845 = vmor %vm843, %vm844
  %v846 = vsel %vm845, %v838, %v842
  %v847 = vand.u32 2147483647, %v822
  %vm848 = vcmp.eq.f32.partialorder %v847, 8.507059e+37
  %v849 = vand.u32 %v822, 2147483648
  %v850 = vor.u32 1.1754944e-38, %v849
  %v851 = vsel %vm848, %v850, %v846
  %v852 = vmul.f32 1.0, %v851
  %853 = vrot.lane.b32.xlu0 %v806, 64
  %v854 = vpop.permute.xlu0 %853
  %855 = vrot.lane.b32.xlu0 %v810, 64
  %v856 = vpop.permute.xlu0 %855
  %v859 = vmul.f32 %v837, %v854
  %v860 = vmul.f32 %v852, %v856
  %863 = vrot.lane.b32.xlu0 %v859, 64
  %v864 = vpop.permute.xlu0 %863
  %865 = vrot.lane.b32.xlu0 %v860, 64
  %v866 = vpop.permute.xlu0 %865
  %v869 = vadd.f32 %v789, %v864
  %v870 = vadd.f32 %v790, %v866
  %v871 = vtanh.pop %v869
  %v872 = vtanh.pop %v870
  %v873 = vsub.f32 1.0, %v837
  %v874 = vsub.f32 1.0, %v852
  %877 = vrot.lane.b32.xlu0 %v871, 96
  %v878 = vpop.permute.xlu0 %877
  %879 = vrot.lane.b32.xlu0 %v872, 96
  %v880 = vpop.permute.xlu0 %879
  %v883 = vmul.f32 %v873, %v878
  %v884 = vmul.f32 %v874, %v880
  %v886 = vrot.slane %v791, 1
  %887 = vrot.lane.b32.xlu0 %v791, 32
  %v888 = vpop.permute.xlu0 %887
  %889 = vrot.lane.b32.xlu0 %v886, 32
  %v890 = vpop.permute.xlu0 %889
  %v893 = vmul.f32 %v837, %v888
  %v894 = vmul.f32 %v852, %v890
  %v895 = vadd.f32 %v883, %v893
  %v896 = vadd.f32 %v884, %v894
  %v899 = vrot.slane %v896, 7
  %v900 = vsel %vm153, %v899, %v895
  %901 = vrot.lane.b32.xlu0 %v900, 96
  %v902 = vpop.permute.xlu0 %901
  %904 = vst.msk [vmem:[#allocation2] sm:$0x3] %vm158, %v902
  %905 = vrot.lane.b32.xlu0 %v895, 96
  %v906 = vpop.permute.xlu0 %905
  %907 = vrot.lane.b32.xlu0 %v896, 96
  %v908 = vpop.permute.xlu0 %907
  %911 = vst.msk [vmem:[%s3 + $0x6] sm:$0x1] %vm166, %v906
  %912 = vst.msk [vmem:[%s3 + $0xe] sm:$0x1] %vm166, %v908
  %v913 = vld [vmem:[%s0 + $0x7] sm:$0x1]
  %v914 = vld [vmem:[%s0 + $0xf] sm:$0x1]
  %v915 = vld [vmem:[#allocation2] sm:$0x3]
  %v916 = vpack.c.bf16 %v915, %v915
  %v918 = vsel %vm45, %v916, 0
  %920 = vmatpush.bf16.msra.mxu0 0
  %921 = vmatpush.bf16.msra.mxu0 0
  %922 = vmatpush.bf16.msra.mxu0 0
  %923 = vmatpush.bf16.msra.mxu0 0
  %924 = vmatpush.bf16.msra.mxu0 0
  %925 = vmatpush.bf16.msra.mxu0 0
  %926 = vmatpush.bf16.msra.mxu0 %v42
  %927 = vmatpush.bf16.msra.mxu0 %v41
  %928 = vmatmul.bf16.gmra.mxu0 %v918
  %v929 = vpop.f32.mrf.mxu0
  %v930 = vadd.f32 %v31, %v929
  %v931 = vpop.f32.mrf.mxu0
  %932 = vdwg.mxu0
  %v934 = vrot.slane %v930, 1
  %v937 = vadd.f32 %v913, %v930
  %v938 = vadd.f32 %v914, %v934
  %v939 = vxor.u32 %v937, 2147483648
  %v940 = vxor.u32 %v938, 2147483648
  %v941 = vmul.f32 %v939, 1.442695
  %v942 = vpow.pop %v941
  %v943 = vmul.f32 %v940, 1.442695
  %v944 = vpow.pop %v943
  %v945 = vadd.f32 %v942, 1.0
  %v946 = vadd.f32 %v944, 1.0
  %v947 = vrcp.pop %v945
  %v948 = vmul.f32 %v945, %v947
  %v949 = vsub.f32 1.0, %v948
  %v950 = vmul.f32 %v947, %v949
  %v951 = vadd.f32 %v947, %v950
  %vm952 = vweird.f32 %v945
  %vm953 = vweird.f32 %v947
  %vm954 = vmor %vm952, %vm953
  %v955 = vsel %vm954, %v947, %v951
  %v956 = vand.u32 2147483647, %v945
  %vm957 = vcmp.eq.f32.partialorder %v956, 8.507059e+37
  %v958 = vand.u32 %v945, 2147483648
  %v959 = vor.u32 1.1754944e-38, %v958
  %v960 = vsel %vm957, %v959, %v955
  %v961 = vmul.f32 1.0, %v960
  %v962 = vrcp.pop %v946
  %v963 = vmul.f32 %v946, %v962
  %v964 = vsub.f32 1.0, %v963
  %v965 = vmul.f32 %v962, %v964
  %v966 = vadd.f32 %v962, %v965
  %vm967 = vweird.f32 %v946
  %vm968 = vweird.f32 %v962
  %vm969 = vmor %vm967, %vm968
  %v970 = vsel %vm969, %v962, %v966
  %v971 = vand.u32 2147483647, %v946
  %vm972 = vcmp.eq.f32.partialorder %v971, 8.507059e+37
  %v973 = vand.u32 %v946, 2147483648
  %v974 = vor.u32 1.1754944e-38, %v973
  %v975 = vsel %vm972, %v974, %v970
  %v976 = vmul.f32 1.0, %v975
  %977 = vrot.lane.b32.xlu0 %v930, 64
  %v978 = vpop.permute.xlu0 %977
  %979 = vrot.lane.b32.xlu0 %v934, 64
  %v980 = vpop.permute.xlu0 %979
  %v983 = vmul.f32 %v961, %v978
  %v984 = vmul.f32 %v976, %v980
  %987 = vrot.lane.b32.xlu0 %v983, 64
  %v988 = vpop.permute.xlu0 %987
  %989 = vrot.lane.b32.xlu0 %v984, 64
  %v990 = vpop.permute.xlu0 %989
  %v993 = vadd.f32 %v913, %v988
  %v994 = vadd.f32 %v914, %v990
  %v995 = vtanh.pop %v993
  %v996 = vtanh.pop %v994
  %v997 = vsub.f32 1.0, %v961
  %v998 = vsub.f32 1.0, %v976
  %1001 = vrot.lane.b32.xlu0 %v995, 96
  %v1002 = vpop.permute.xlu0 %1001
  %1003 = vrot.lane.b32.xlu0 %v996, 96
  %v1004 = vpop.permute.xlu0 %1003
  %v1007 = vmul.f32 %v997, %v1002
  %v1008 = vmul.f32 %v998, %v1004
  %v1010 = vrot.slane %v915, 1
  %1011 = vrot.lane.b32.xlu0 %v915, 32
  %v1012 = vpop.permute.xlu0 %1011
  %1013 = vrot.lane.b32.xlu0 %v1010, 32
  %v1014 = vpop.permute.xlu0 %1013
  %v1017 = vmul.f32 %v961, %v1012
  %v1018 = vmul.f32 %v976, %v1014
  %v1019 = vadd.f32 %v1007, %v1017
  %v1020 = vadd.f32 %v1008, %v1018
  %v1023 = vrot.slane %v1020, 7
  %v1024 = vsel %vm153, %v1023, %v1019
  %1025 = vrot.lane.b32.xlu0 %v1024, 96
  %v1026 = vpop.permute.xlu0 %1025
  %1028 = vst.msk [vmem:[#allocation2] sm:$0x3] %vm158, %v1026
  %1029 = vrot.lane.b32.xlu0 %v1019, 96
  %v1030 = vpop.permute.xlu0 %1029
  %1031 = vrot.lane.b32.xlu0 %v1020, 96
  %v1032 = vpop.permute.xlu0 %1031
  %1035 = vst.msk [vmem:[%s3 + $0x7] sm:$0x1] %vm166, %v1030
  %1036 = vst.msk [vmem:[%s3 + $0xf] sm:$0x1] %vm166, %v1032
  // Predicated region
  $region18: #{sstp_forward.8} parent=0 // pred_check
    _
  $region19: #{sstp_forward.8} parent=0 // pred_check_branch
    %1038 = sbr.rel (0) target = $region21
  $region20: #{sstp_forward.8} parent=0 // pred_region
    _
  $region21: #{sstp_forward.8} parent=0 // pred_fallthru
    _
  // Predicated region
  $region22: #{sstp_forward.8} parent=0 // pred_check
    _
  $region23: #{sstp_forward.8} parent=0 // pred_check_branch
    %1040 = sbr.rel (0) target = $region25
  $region24: #{sstp_forward.8} parent=0 // pred_region
    _
  $region25: #{sstp_forward.8} parent=0 // pred_fallthru
    _

// kernel: sstp_forward.13
$region0: #{sstp_forward.13}
  #allocation0 [shape = 'u32[]', space=smem, size = 0x4, offset = 0x4, fixed_abs, tag = 'smem constant byte address 0x4 - core index']
  #allocation1 [shape = 'u32[72,128]{1,0:T(1,128)}', space=vmem, size = 0x9000, scoped, tag = 'internal scratch']
  %s0 = inlined_call_operand.vmem [shape: f32[16,32], index: 0, kind: input, shape index: {}]
  %s1 = inlined_call_operand.vmem [shape: bf16[32,5], index: 1, kind: input, shape index: {}]
  %s2 = inlined_call_operand.vmem [shape: f32[1,5], index: 2, kind: input, shape index: {}]
  %s3 = inlined_call_operand.vmem [shape: f32[16,5], index: 3, kind: output, shape index: {}]
  %s4 = sld [smem:[#allocation0]]
  $region22: #{sstp_forward.13} parent=0
    _
  %s6 = ssub.s32 1, %s4
  %s7 = scalar_select 0, %s6, %s4
  // Predicated region
  $region2: #{sstp_forward.13} parent=0 // pred_check
    _
  $region3: #{sstp_forward.13} parent=0 // pred_check_branch
    %9 = sbr.rel (0) target = $region5
  $region4: #{sstp_forward.13} parent=0 // pred_region
    _
  $region5: #{sstp_forward.13} parent=0 // pred_fallthru
    _
  // Predicated region
  $region6: #{sstp_forward.13} parent=0 // pred_check
    _
  $region7: #{sstp_forward.13} parent=0 // pred_check_branch
    %11 = sbr.rel (0) target = $region9
  $region8: #{sstp_forward.13} parent=0 // pred_region
    _
  $region9: #{sstp_forward.13} parent=0 // pred_fallthru
    _
  // Predicated region
  $region10: #{sstp_forward.13} parent=0 // pred_check
    _
  $region11: #{sstp_forward.13} parent=0 // pred_check_branch
    %13 = sbr.rel (0) target = $region13
  $region12: #{sstp_forward.13} parent=0 // pred_region
    _
  $region13: #{sstp_forward.13} parent=0 // pred_fallthru
    _
  %v15 = vld [vmem:[%s0] sm:$0xff]
  %v16 = vld [vmem:[%s0 + $0x8] sm:$0xff]
  %v17 = vld [vmem:[%s1] sm:$0xf]
  %v18 = vld [vmem:[%s1 + $0x4] sm:$0xf]
  %v19 = vld [vmem:[%s1 + $0x8] sm:$0xf]
  %v20 = vld [vmem:[%s1 + $0xc] sm:$0xf]
  %v21 = vpack.c.bf16 %v16, %v15
  %v22 = vld [vmem:[%s2] sm:$0x1]
  %v24 = vperm.slane %v22, 0
  %v30 = vunpack.c.l.b16 %v17
  %v31 = vunpack.c.l.b16 %v18
  %v32 = vunpack.c.l.b16 %v19
  %v33 = vunpack.c.l.b16 %v20
  %v34 = vpack.c.b16 %v31, %v30
  %v35 = vpack.c.b16 %v33, %v32
  %vm38 = vcmask 261120
  %v40 = vsel %vm38, %v21, 0
  %42 = vmatpush.bf16.msra.mxu0 0
  %43 = vmatpush.bf16.msra.mxu0 0
  %44 = vmatpush.bf16.msra.mxu0 0
  %45 = vmatpush.bf16.msra.mxu0 0
  %46 = vmatpush.bf16.msra.mxu0 0
  %47 = vmatpush.bf16.msra.mxu0 0
  %48 = vmatpush.bf16.msra.mxu0 %v35
  %49 = vmatpush.bf16.msra.mxu0 %v34
  %50 = vmatmul.bf16.gmra.mxu0 %v40
  %v51 = vpop.f32.mrf.mxu0
  %v52 = vadd.f32 %v24, %v51
  %v53 = vpop.f32.mrf.mxu0
  %v54 = vadd.f32 %v24, %v53
  %55 = vdwg.mxu0
  %vm56 = vcmask 39936
  %57 = vst.msk [vmem:[%s3] sm:$0xff] %vm56, %v52
  %58 = vst.msk [vmem:[%s3 + $0x8] sm:$0xff] %vm56, %v54
  // Predicated region
  $region14: #{sstp_forward.13} parent=0 // pred_check
    _
  $region15: #{sstp_forward.13} parent=0 // pred_check_branch
    %60 = sbr.rel (0) target = $region17
  $region16: #{sstp_forward.13} parent=0 // pred_region
    _
  $region17: #{sstp_forward.13} parent=0 // pred_fallthru
    _
  // Predicated region
  $region18: #{sstp_forward.13} parent=0 // pred_check
    _
  $region19: #{sstp_forward.13} parent=0 // pred_check_branch
    %62 = sbr.rel (0) target = $region21
  $region20: #{sstp_forward.13} parent=0 // pred_region
    _
  $region21: #{sstp_forward.13} parent=0 // pred_fallthru
    _

// kernel: sstp_forward.11
$region0: #{sstp_forward.11}
  #allocation0 [shape = 'u32[]', space=smem, size = 0x4, offset = 0x4, fixed_abs, tag = 'smem constant byte address 0x4 - core index']
  #allocation1 [shape = 'u32[72,128]{1,0:T(1,128)}', space=vmem, size = 0x9000, scoped, tag = 'internal scratch']
  %s0 = inlined_call_operand.vmem [shape: f32[2,8,32], index: 0, kind: input, shape index: {}]
  %s1 = inlined_call_operand.vmem [shape: f32[2,8,32], index: 1, kind: input, shape index: {}]
  %s2 = inlined_call_operand.vmem [shape: f32[2,8,24], index: 2, kind: input, shape index: {}]
  %s3 = inlined_call_operand.vmem [shape: f32[2,1,16], index: 3, kind: input, shape index: {}]
  %s4 = inlined_call_operand.vmem [shape: f32[1,32], index: 4, kind: input, shape index: {}]
  %s5 = inlined_call_operand.vmem [shape: f32[1,32], index: 5, kind: input, shape index: {}]
  %s6 = inlined_call_operand.vmem [shape: bf16[24,32], index: 6, kind: input, shape index: {}]
  %s7 = inlined_call_operand.vmem [shape: f32[1,32], index: 7, kind: input, shape index: {}]
  %s8 = inlined_call_operand.vmem [shape: f32[1,32], index: 8, kind: input, shape index: {}]
  %s9 = inlined_call_operand.vmem [shape: f32[1,32], index: 9, kind: input, shape index: {}]
  %s10 = inlined_call_operand.vmem [shape: bf16[16,32], index: 10, kind: input, shape index: {}]
  %s11 = inlined_call_operand.vmem [shape: f32[1,32], index: 11, kind: input, shape index: {}]
  %s12 = inlined_call_operand.vmem [shape: f32[1,32], index: 12, kind: input, shape index: {}]
  %s13 = inlined_call_operand.vmem [shape: f32[1,32], index: 13, kind: input, shape index: {}]
  %s14 = inlined_call_operand.vmem [shape: f32[2,8,32], index: 14, kind: output, shape index: {}]
  %s15 = sld [smem:[#allocation0]]
  $region89: #{sstp_forward.11} parent=0
    _
  %s17 = ssub.s32 1, %s15
  %s18 = scalar_select 0, %s17, %s15
  loop: start=0, step=1, limit=4
  $region2: #{sstp_forward.11} parent=0 // loop_pre_header
    _
  $region3: #{sstp_forward.11} parent=0 // loop_header
    %s20 = sphi 0, %s24
    %p21 = scmp.ge.s32.totalorder %s20, 4
    %s30 = sphi 0, %s32
    %s33 = sphi 0, %s30
    %s34 = sphi 0, %s33
    %s50 = sphi 0, %s34
    %s56 = sphi 0, %s58
    %s59 = sphi 0, %s56
    %s60 = sphi 0, %s59
    %s76 = sphi 0, %s60
    %s82 = sphi 0, %s84
    %s85 = sphi 0, %s82
    %s86 = sphi 0, %s85
    %s102 = sphi 0, %s86
    %s108 = sphi 0, %s110
    %s111 = sphi 0, %s108
    %s112 = sphi 0, %s111
    %s128 = sphi 0, %s112
    %s132 = sphi 0, %s132
    %s134 = sphi 0, %s132
    %s135 = sphi 0, %s134
    %s149 = sphi 0, %s135
    %s153 = sphi 0, %s153
    %s155 = sphi 0, %s153
    %s156 = sphi 0, %s155
    %s170 = sphi 0, %s156
    %s174 = sphi 0, %s174
    %s176 = sphi 0, %s174
    %s177 = sphi 0, %s176
    %s191 = sphi 0, %s177
    %s195 = sphi 0, %s195
    %s197 = sphi 0, %s195
    %s198 = sphi 0, %s197
    %s212 = sphi 0, %s198
    %s216 = sphi 0, %s216
    %s218 = sphi 0, %s216
    %s219 = sphi 0, %s218
    %s233 = sphi 0, %s219
    %s237 = sphi 0, %s237
    %s239 = sphi 0, %s237
    %s240 = sphi 0, %s239
    %s254 = sphi 0, %s240
    %s258 = sphi 0, %s258
    %s260 = sphi 0, %s258
    %s261 = sphi 0, %s260
    %s275 = sphi 0, %s261
    %s279 = sphi 0, %s279
    %s281 = sphi 0, %s279
    %s282 = sphi 0, %s281
    %s296 = sphi 0, %s282
    %s300 = sphi 0, %s300
    %s302 = sphi 0, %s300
    %s303 = sphi 0, %s302
    %s317 = sphi 0, %s303
    %s321 = sphi 0, %s321
    %s323 = sphi 0, %s321
    %s324 = sphi 0, %s323
    %s338 = sphi 0, %s324
    %s344 = sphi 0, %s346
    %s347 = sphi 0, %s344
    %s348 = sphi 0, %s347
    %s364 = sphi 0, %s348
  $region4: #{sstp_forward.11} parent=0 // loop_header_branch
    %23 = sbr.rel (%p21) target = $region8
  $region5: #{sstp_forward.11} parent=0 // loop_body
    %s25 = ssub.s32 %s20, 1
    %s26 = ssub.s32 %s20, 2
    %s27 = sadd.s32 %s20, 1
    %s28 = ssub.s32 %s20, %s27
    %p29 = scmp.eq.s32.totalorder %s28, 0
    %s31 = sadd.s32 %s30, 1
    %s32 = scalar_select %p29, %s30, %s31
    %p35 = pneg %p29
    %p36 = scmp.eq.s32.totalorder %s20, 1
    %p37 = por %p35, %p36
    %p38 = scmp.ne.s32.totalorder %s30, %s33
    %p39 = scmp.eq.s32.totalorder %s20, 0
    %p40 = por %p38, %p39
    %p41 = scmp.ne.s32.totalorder %s30, %s33
    %p42 = scmp.eq.s32.totalorder %s25, 1
    %p43 = por %p41, %p42
    %p44 = scmp.ne.s32.totalorder %s33, %s34
    %p45 = scmp.eq.s32.totalorder %s25, 0
    %p46 = por %p44, %p45
    %p47 = scmp.ne.s32.totalorder %s33, %s34
    %p48 = scmp.eq.s32.totalorder %s26, 1
    %p49 = por %p47, %p48
    %p51 = scmp.ne.s32.totalorder %s34, %s50
    %p52 = scmp.eq.s32.totalorder %s26, 0
    %p53 = por %p51, %p52
    %s54 = ssub.s32 %s20, %s27
    %p55 = scmp.eq.s32.totalorder %s54, 0
    %s57 = sadd.s32 %s56, 1
    %s58 = scalar_select %p55, %s56, %s57
    %p61 = pneg %p55
    %p62 = scmp.eq.s32.totalorder %s20, 1
    %p63 = por %p61, %p62
    %p64 = scmp.ne.s32.totalorder %s56, %s59
    %p65 = scmp.eq.s32.totalorder %s20, 0
    %p66 = por %p64, %p65
    %p67 = scmp.ne.s32.totalorder %s56, %s59
    %p68 = scmp.eq.s32.totalorder %s25, 1
    %p69 = por %p67, %p68
    %p70 = scmp.ne.s32.totalorder %s59, %s60
    %p71 = scmp.eq.s32.totalorder %s25, 0
    %p72 = por %p70, %p71
    %p73 = scmp.ne.s32.totalorder %s59, %s60
    %p74 = scmp.eq.s32.totalorder %s26, 1
    %p75 = por %p73, %p74
    %p77 = scmp.ne.s32.totalorder %s60, %s76
    %p78 = scmp.eq.s32.totalorder %s26, 0
    %p79 = por %p77, %p78
    %s80 = ssub.s32 %s20, %s27
    %p81 = scmp.eq.s32.totalorder %s80, 0
    %s83 = sadd.s32 %s82, 1
    %s84 = scalar_select %p81, %s82, %s83
    %p87 = pneg %p81
    %p88 = scmp.eq.s32.totalorder %s20, 1
    %p89 = por %p87, %p88
    %p90 = scmp.ne.s32.totalorder %s82, %s85
    %p91 = scmp.eq.s32.totalorder %s20, 0
    %p92 = por %p90, %p91
    %p93 = scmp.ne.s32.totalorder %s82, %s85
    %p94 = scmp.eq.s32.totalorder %s25, 1
    %p95 = por %p93, %p94
    %p96 = scmp.ne.s32.totalorder %s85, %s86
    %p97 = scmp.eq.s32.totalorder %s25, 0
    %p98 = por %p96, %p97
    %p99 = scmp.ne.s32.totalorder %s85, %s86
    %p100 = scmp.eq.s32.totalorder %s26, 1
    %p101 = por %p99, %p100
    %p103 = scmp.ne.s32.totalorder %s86, %s102
    %p104 = scmp.eq.s32.totalorder %s26, 0
    %p105 = por %p103, %p104
    %s106 = ssub.s32 %s20, %s27
    %p107 = scmp.eq.s32.totalorder %s106, 0
    %s109 = sadd.s32 %s108, 1
    %s110 = scalar_select %p107, %s108, %s109
    %p113 = pneg %p107
    %p114 = scmp.eq.s32.totalorder %s20, 1
    %p115 = por %p113, %p114
    %p116 = scmp.ne.s32.totalorder %s108, %s111
    %p117 = scmp.eq.s32.totalorder %s20, 0
    %p118 = por %p116, %p117
    %p119 = scmp.ne.s32.totalorder %s108, %s111
    %p120 = scmp.eq.s32.totalorder %s25, 1
    %p121 = por %p119, %p120
    %p122 = scmp.ne.s32.totalorder %s111, %s112
    %p123 = scmp.eq.s32.totalorder %s25, 0
    %p124 = por %p122, %p123
    %p125 = scmp.ne.s32.totalorder %s111, %s112
    %p126 = scmp.eq.s32.totalorder %s26, 1
    %p127 = por %p125, %p126
    %p129 = scmp.ne.s32.totalorder %s112, %s128
    %p130 = scmp.eq.s32.totalorder %s26, 0
    %p131 = por %p129, %p130
    %s133 = sadd.s32 %s132, 1
    %p136 = scmp.eq.s32.totalorder %s20, 1
    %p137 = scmp.ne.s32.totalorder %s132, %s134
    %p138 = scmp.eq.s32.totalorder %s20, 0
    %p139 = por %p137, %p138
    %p140 = scmp.ne.s32.totalorder %s132, %s134
    %p141 = scmp.eq.s32.totalorder %s25, 1
    %p142 = por %p140, %p141
    %p143 = scmp.ne.s32.totalorder %s134, %s135
    %p144 = scmp.eq.s32.totalorder %s25, 0
    %p145 = por %p143, %p144
    %p146 = scmp.ne.s32.totalorder %s134, %s135
    %p147 = scmp.eq.s32.totalorder %s26, 1
    %p148 = por %p146, %p147
    %p150 = scmp.ne.s32.totalorder %s135, %s149
    %p151 = scmp.eq.s32.totalorder %s26, 0
    %p152 = por %p150, %p151
    %s154 = sadd.s32 %s153, 1
    %p157 = scmp.eq.s32.totalorder %s20, 1
    %p158 = scmp.ne.s32.totalorder %s153, %s155
    %p159 = scmp.eq.s32.totalorder %s20, 0
    %p160 = por %p158, %p159
    %p161 = scmp.ne.s32.totalorder %s153, %s155
    %p162 = scmp.eq.s32.totalorder %s25, 1
    %p163 = por %p161, %p162
    %p164 = scmp.ne.s32.totalorder %s155, %s156
    %p165 = scmp.eq.s32.totalorder %s25, 0
    %p166 = por %p164, %p165
    %p167 = scmp.ne.s32.totalorder %s155, %s156
    %p168 = scmp.eq.s32.totalorder %s26, 1
    %p169 = por %p167, %p168
    %p171 = scmp.ne.s32.totalorder %s156, %s170
    %p172 = scmp.eq.s32.totalorder %s26, 0
    %p173 = por %p171, %p172
    %s175 = sadd.s32 %s174, 1
    %p178 = scmp.eq.s32.totalorder %s20, 1
    %p179 = scmp.ne.s32.totalorder %s174, %s176
    %p180 = scmp.eq.s32.totalorder %s20, 0
    %p181 = por %p179, %p180
    %p182 = scmp.ne.s32.totalorder %s174, %s176
    %p183 = scmp.eq.s32.totalorder %s25, 1
    %p184 = por %p182, %p183
    %p185 = scmp.ne.s32.totalorder %s176, %s177
    %p186 = scmp.eq.s32.totalorder %s25, 0
    %p187 = por %p185, %p186
    %p188 = scmp.ne.s32.totalorder %s176, %s177
    %p189 = scmp.eq.s32.totalorder %s26, 1
    %p190 = por %p188, %p189
    %p192 = scmp.ne.s32.totalorder %s177, %s191
    %p193 = scmp.eq.s32.totalorder %s26, 0
    %p194 = por %p192, %p193
    %s196 = sadd.s32 %s195, 1
    %p199 = scmp.eq.s32.totalorder %s20, 1
    %p200 = scmp.ne.s32.totalorder %s195, %s197
    %p201 = scmp.eq.s32.totalorder %s20, 0
    %p202 = por %p200, %p201
    %p203 = scmp.ne.s32.totalorder %s195, %s197
    %p204 = scmp.eq.s32.totalorder %s25, 1
    %p205 = por %p203, %p204
    %p206 = scmp.ne.s32.totalorder %s197, %s198
    %p207 = scmp.eq.s32.totalorder %s25, 0
    %p208 = por %p206, %p207
    %p209 = scmp.ne.s32.totalorder %s197, %s198
    %p210 = scmp.eq.s32.totalorder %s26, 1
    %p211 = por %p209, %p210
    %p213 = scmp.ne.s32.totalorder %s198, %s212
    %p214 = scmp.eq.s32.totalorder %s26, 0
    %p215 = por %p213, %p214
    %s217 = sadd.s32 %s216, 1
    %p220 = scmp.eq.s32.totalorder %s20, 1
    %p221 = scmp.ne.s32.totalorder %s216, %s218
    %p222 = scmp.eq.s32.totalorder %s20, 0
    %p223 = por %p221, %p222
    %p224 = scmp.ne.s32.totalorder %s216, %s218
    %p225 = scmp.eq.s32.totalorder %s25, 1
    %p226 = por %p224, %p225
    %p227 = scmp.ne.s32.totalorder %s218, %s219
    %p228 = scmp.eq.s32.totalorder %s25, 0
    %p229 = por %p227, %p228
    %p230 = scmp.ne.s32.totalorder %s218, %s219
    %p231 = scmp.eq.s32.totalorder %s26, 1
    %p232 = por %p230, %p231
    %p234 = scmp.ne.s32.totalorder %s219, %s233
    %p235 = scmp.eq.s32.totalorder %s26, 0
    %p236 = por %p234, %p235
    %s238 = sadd.s32 %s237, 1
    %p241 = scmp.eq.s32.totalorder %s20, 1
    %p242 = scmp.ne.s32.totalorder %s237, %s239
    %p243 = scmp.eq.s32.totalorder %s20, 0
    %p244 = por %p242, %p243
    %p245 = scmp.ne.s32.totalorder %s237, %s239
    %p246 = scmp.eq.s32.totalorder %s25, 1
    %p247 = por %p245, %p246
    %p248 = scmp.ne.s32.totalorder %s239, %s240
    %p249 = scmp.eq.s32.totalorder %s25, 0
    %p250 = por %p248, %p249
    %p251 = scmp.ne.s32.totalorder %s239, %s240
    %p252 = scmp.eq.s32.totalorder %s26, 1
    %p253 = por %p251, %p252
    %p255 = scmp.ne.s32.totalorder %s240, %s254
    %p256 = scmp.eq.s32.totalorder %s26, 0
    %p257 = por %p255, %p256
    %s259 = sadd.s32 %s258, 1
    %p262 = scmp.eq.s32.totalorder %s20, 1
    %p263 = scmp.ne.s32.totalorder %s258, %s260
    %p264 = scmp.eq.s32.totalorder %s20, 0
    %p265 = por %p263, %p264
    %p266 = scmp.ne.s32.totalorder %s258, %s260
    %p267 = scmp.eq.s32.totalorder %s25, 1
    %p268 = por %p266, %p267
    %p269 = scmp.ne.s32.totalorder %s260, %s261
    %p270 = scmp.eq.s32.totalorder %s25, 0
    %p271 = por %p269, %p270
    %p272 = scmp.ne.s32.totalorder %s260, %s261
    %p273 = scmp.eq.s32.totalorder %s26, 1
    %p274 = por %p272, %p273
    %p276 = scmp.ne.s32.totalorder %s261, %s275
    %p277 = scmp.eq.s32.totalorder %s26, 0
    %p278 = por %p276, %p277
    %s280 = sadd.s32 %s279, 1
    %p283 = scmp.eq.s32.totalorder %s20, 1
    %p284 = scmp.ne.s32.totalorder %s279, %s281
    %p285 = scmp.eq.s32.totalorder %s20, 0
    %p286 = por %p284, %p285
    %p287 = scmp.ne.s32.totalorder %s279, %s281
    %p288 = scmp.eq.s32.totalorder %s25, 1
    %p289 = por %p287, %p288
    %p290 = scmp.ne.s32.totalorder %s281, %s282
    %p291 = scmp.eq.s32.totalorder %s25, 0
    %p292 = por %p290, %p291
    %p293 = scmp.ne.s32.totalorder %s281, %s282
    %p294 = scmp.eq.s32.totalorder %s26, 1
    %p295 = por %p293, %p294
    %p297 = scmp.ne.s32.totalorder %s282, %s296
    %p298 = scmp.eq.s32.totalorder %s26, 0
    %p299 = por %p297, %p298
    %s301 = sadd.s32 %s300, 1
    %p304 = scmp.eq.s32.totalorder %s20, 1
    %p305 = scmp.ne.s32.totalorder %s300, %s302
    %p306 = scmp.eq.s32.totalorder %s20, 0
    %p307 = por %p305, %p306
    %p308 = scmp.ne.s32.totalorder %s300, %s302
    %p309 = scmp.eq.s32.totalorder %s25, 1
    %p310 = por %p308, %p309
    %p311 = scmp.ne.s32.totalorder %s302, %s303
    %p312 = scmp.eq.s32.totalorder %s25, 0
    %p313 = por %p311, %p312
    %p314 = scmp.ne.s32.totalorder %s302, %s303
    %p315 = scmp.eq.s32.totalorder %s26, 1
    %p316 = por %p314, %p315
    %p318 = scmp.ne.s32.totalorder %s303, %s317
    %p319 = scmp.eq.s32.totalorder %s26, 0
    %p320 = por %p318, %p319
    %s322 = sadd.s32 %s321, 1
    %p325 = scmp.eq.s32.totalorder %s20, 1
    %p326 = scmp.ne.s32.totalorder %s321, %s323
    %p327 = scmp.eq.s32.totalorder %s20, 0
    %p328 = por %p326, %p327
    %p329 = scmp.ne.s32.totalorder %s321, %s323
    %p330 = scmp.eq.s32.totalorder %s25, 1
    %p331 = por %p329, %p330
    %p332 = scmp.ne.s32.totalorder %s323, %s324
    %p333 = scmp.eq.s32.totalorder %s25, 0
    %p334 = por %p332, %p333
    %p335 = scmp.ne.s32.totalorder %s323, %s324
    %p336 = scmp.eq.s32.totalorder %s26, 1
    %p337 = por %p335, %p336
    %p339 = scmp.ne.s32.totalorder %s324, %s338
    %p340 = scmp.eq.s32.totalorder %s26, 0
    %p341 = por %p339, %p340
    %s342 = ssub.s32 %s20, %s27
    %p343 = scmp.eq.s32.totalorder %s342, 0
    %s345 = sadd.s32 %s344, 1
    %s346 = scalar_select %p343, %s344, %s345
    %p349 = pneg %p343
    %p350 = scmp.eq.s32.totalorder %s20, 1
    %p351 = por %p349, %p350
    %p352 = scmp.ne.s32.totalorder %s344, %s347
    %p353 = scmp.eq.s32.totalorder %s20, 0
    %p354 = por %p352, %p353
    %p355 = scmp.ne.s32.totalorder %s344, %s347
    %p356 = scmp.eq.s32.totalorder %s25, 1
    %p357 = por %p355, %p356
    %p358 = scmp.ne.s32.totalorder %s347, %s348
    %p359 = scmp.eq.s32.totalorder %s25, 0
    %p360 = por %p358, %p359
    %p361 = scmp.ne.s32.totalorder %s347, %s348
    %p362 = scmp.eq.s32.totalorder %s26, 1
    %p363 = por %p361, %p362
    %p365 = scmp.ne.s32.totalorder %s348, %s364
    %p366 = scmp.eq.s32.totalorder %s26, 0
    %p367 = por %p365, %p366
    %p368 = scmp.le.s32.totalorder 1, %s20
    %p369 = scmp.lt.s32.totalorder %s20, 3
    %p370 = pnand %p368, %p369
    %p371 = pneg %p370
    // Predicated region
    $region9: #{sstp_forward.11} parent=5 // pred_check
      _
    $region10: #{sstp_forward.11} parent=5 // pred_check_branch
      %373 = sbr.rel (%p370) target = $region12
    $region11: #{sstp_forward.11} parent=5 // pred_region
      %s374 = ssub.s32 %s20, 1
      // Predicated region
      $region13: #{sstp_forward.11} parent=11 // pred_check
        %p375 = pneg %p145
      $region14: #{sstp_forward.11} parent=11 // pred_check_branch
        %377 = sbr.rel (%p375) target = $region16
      $region15: #{sstp_forward.11} parent=11 // pred_region
        _
      $region16: #{sstp_forward.11} parent=11 // pred_fallthru
        _
      // Predicated region
      $region17: #{sstp_forward.11} parent=11 // pred_check
        %p378 = pneg %p166
      $region18: #{sstp_forward.11} parent=11 // pred_check_branch
        %380 = sbr.rel (%p378) target = $region20
      $region19: #{sstp_forward.11} parent=11 // pred_region
        _
      $region20: #{sstp_forward.11} parent=11 // pred_fallthru
        _
      // Predicated region
      $region21: #{sstp_forward.11} parent=11 // pred_check
        %p381 = pneg %p187
      $region22: #{sstp_forward.11} parent=11 // pred_check_branch
        %383 = sbr.rel (%p381) target = $region24
      $region23: #{sstp_forward.11} parent=11 // pred_region
        _
      $region24: #{sstp_forward.11} parent=11 // pred_fallthru
        _
      // Predicated region
      $region25: #{sstp_forward.11} parent=11 // pred_check
        %p384 = pneg %p208
      $region26: #{sstp_forward.11} parent=11 // pred_check_branch
        %386 = sbr.rel (%p384) target = $region28
      $region27: #{sstp_forward.11} parent=11 // pred_region
        _
      $region28: #{sstp_forward.11} parent=11 // pred_fallthru
        _
      // Predicated region
      $region29: #{sstp_forward.11} parent=11 // pred_check
        %p387 = pneg %p229
      $region30: #{sstp_forward.11} parent=11 // pred_check_branch
        %389 = sbr.rel (%p387) target = $region32
      $region31: #{sstp_forward.11} parent=11 // pred_region
        _
      $region32: #{sstp_forward.11} parent=11 // pred_fallthru
        _
      // Predicated region
      $region33: #{sstp_forward.11} parent=11 // pred_check
        %p390 = pneg %p250
      $region34: #{sstp_forward.11} parent=11 // pred_check_branch
        %392 = sbr.rel (%p390) target = $region36
      $region35: #{sstp_forward.11} parent=11 // pred_region
        _
      $region36: #{sstp_forward.11} parent=11 // pred_fallthru
        _
      // Predicated region
      $region37: #{sstp_forward.11} parent=11 // pred_check
        %p393 = pneg %p271
      $region38: #{sstp_forward.11} parent=11 // pred_check_branch
        %395 = sbr.rel (%p393) target = $region40
      $region39: #{sstp_forward.11} parent=11 // pred_region
        _
      $region40: #{sstp_forward.11} parent=11 // pred_fallthru
        _
      // Predicated region
      $region41: #{sstp_forward.11} parent=11 // pred_check
        %p396 = pneg %p292
      $region42: #{sstp_forward.11} parent=11 // pred_check_branch
        %398 = sbr.rel (%p396) target = $region44
      $region43: #{sstp_forward.11} parent=11 // pred_region
        _
      $region44: #{sstp_forward.11} parent=11 // pred_fallthru
        _
      // Predicated region
      $region45: #{sstp_forward.11} parent=11 // pred_check
        %p399 = pneg %p313
      $region46: #{sstp_forward.11} parent=11 // pred_check_branch
        %401 = sbr.rel (%p399) target = $region48
      $region47: #{sstp_forward.11} parent=11 // pred_region
        _
      $region48: #{sstp_forward.11} parent=11 // pred_fallthru
        _
      // Predicated region
      $region49: #{sstp_forward.11} parent=11 // pred_check
        %p402 = pneg %p334
      $region50: #{sstp_forward.11} parent=11 // pred_check_branch
        %404 = sbr.rel (%p402) target = $region52
      $region51: #{sstp_forward.11} parent=11 // pred_region
        _
      $region52: #{sstp_forward.11} parent=11 // pred_fallthru
        _
    $region12: #{sstp_forward.11} parent=5 // pred_fallthru
      _
    %p405 = scmp.lt.s32.totalorder %s20, 2
    // Predicated region
    $region53: #{sstp_forward.11} parent=5 // pred_check
      %p406 = pneg %p405
    $region54: #{sstp_forward.11} parent=5 // pred_check_branch
      %408 = sbr.rel (%p406) target = $region56
    $region55: #{sstp_forward.11} parent=5 // pred_region
      // Predicated region
      $region57: #{sstp_forward.11} parent=55 // pred_check
        %p409 = pneg %p40
      $region58: #{sstp_forward.11} parent=55 // pred_check_branch
        %411 = sbr.rel (%p409) target = $region60
      $region59: #{sstp_forward.11} parent=55 // pred_region
        %p412 = scmp.lt.s32.totalorder %s20, 1
        %s413 = scalar_select %p412, %s20, 1
        %s414 = smul.addr %s413, 8
        %s415 = scalar_lea.vmem %s0, %s414
      $region60: #{sstp_forward.11} parent=55 // pred_fallthru
        _
      // Predicated region
      $region61: #{sstp_forward.11} parent=55 // pred_check
        %p416 = pneg %p66
      $region62: #{sstp_forward.11} parent=55 // pred_check_branch
        %418 = sbr.rel (%p416) target = $region64
      $region63: #{sstp_forward.11} parent=55 // pred_region
        %p419 = scmp.lt.s32.totalorder %s20, 1
        %s420 = scalar_select %p419, %s20, 1
        %s421 = smul.addr %s420, 8
        %s422 = scalar_lea.vmem %s1, %s421
      $region64: #{sstp_forward.11} parent=55 // pred_fallthru
        _
      // Predicated region
      $region65: #{sstp_forward.11} parent=55 // pred_check
        %p423 = pneg %p92
      $region66: #{sstp_forward.11} parent=55 // pred_check_branch
        %425 = sbr.rel (%p423) target = $region68
      $region67: #{sstp_forward.11} parent=55 // pred_region
        %p426 = scmp.lt.s32.totalorder %s20, 1
        %s427 = scalar_select %p426, %s20, 1
        %s428 = smul.addr %s427, 8
        %s429 = scalar_lea.vmem %s2, %s428
      $region68: #{sstp_forward.11} parent=55 // pred_fallthru
        _
      // Predicated region
      $region69: #{sstp_forward.11} parent=55 // pred_check
        %p430 = pneg %p118
      $region70: #{sstp_forward.11} parent=55 // pred_check_branch
        %432 = sbr.rel (%p430) target = $region72
      $region71: #{sstp_forward.11} parent=55 // pred_region
        %p433 = scmp.lt.s32.totalorder %s20, 1
        %s434 = scalar_select %p433, %s20, 1
        %s435 = scalar_lea.vmem %s3, %s434
      $region72: #{sstp_forward.11} parent=55 // pred_fallthru
        _
    $region56: #{sstp_forward.11} parent=5 // pred_fallthru
      _
    %p436 = scmp.le.s32.totalorder 1, %s20
    %p437 = scmp.lt.s32.totalorder %s20, 3
    %p438 = pnand %p436, %p437
    %p439 = pneg %p438
    // Predicated region
    $region73: #{sstp_forward.11} parent=5 // pred_check
      _
    $region74: #{sstp_forward.11} parent=5 // pred_check_branch
      %441 = sbr.rel (%p438) target = $region76
    $region75: #{sstp_forward.11} parent=5 // pred_region
      %s442 = ssub.s32 %s20, 1
      %p443 = scmp.lt.s32.totalorder %s25, 1
      %s444 = scalar_select %p443, %s25, 1
      %s445 = smul.addr %s444, 8
      %s446 = scalar_lea.vmem %s0, %s445
      %p447 = pneg %p46
      %p448 = pneg %p43
      %p449 = scmp.lt.s32.totalorder %s25, 1
      %s450 = scalar_select %p449, %s25, 1
      %s451 = smul.addr %s450, 8
      %s452 = scalar_lea.vmem %s1, %s451
      %p453 = pneg %p72
      %p454 = pneg %p69
      %p455 = scmp.lt.s32.totalorder %s25, 1
      %s456 = scalar_select %p455, %s25, 1
      %s457 = smul.addr %s456, 8
      %s458 = scalar_lea.vmem %s2, %s457
      %p459 = pneg %p98
      %p460 = pneg %p95
      %p461 = scmp.lt.s32.totalorder %s25, 1
      %s462 = scalar_select %p461, %s25, 1
      %s463 = scalar_lea.vmem %s3, %s462
      %p464 = pneg %p124
      %p465 = pneg %p121
      %p466 = pneg %p145
      %p467 = pneg %p142
      %p468 = pneg %p166
      %p469 = pneg %p163
      %p470 = pneg %p187
      %p471 = pneg %p184
      %p472 = pneg %p208
      %p473 = pneg %p205
      %p474 = pneg %p229
      %p475 = pneg %p226
      %p476 = pneg %p250
      %p477 = pneg %p247
      %p478 = pneg %p271
      %p479 = pneg %p268
      %p480 = pneg %p292
      %p481 = pneg %p289
      %p482 = pneg %p313
      %p483 = pneg %p310
      %p484 = pneg %p334
      %p485 = pneg %p331
      %p486 = pneg %p360
      %p487 = pneg %p357
      %p488 = scmp.lt.s32.totalorder %s25, 1
      %s489 = scalar_select %p488, %s25, 1
      %s490 = smul.addr %s489, 8
      %s491 = scalar_lea.vmem %s14, %s490
      %p492 = scmp.lt.s32.totalorder %s25, 1
      %s493 = scalar_select %p492, %s25, 1
      %s494 = smul.addr %s493, 8
      %s495 = scalar_lea.vmem %s0, %s494
      %p496 = scmp.lt.s32.totalorder %s25, 1
      %s497 = scalar_select %p496, %s25, 1
      %s498 = smul.addr %s497, 8
      %s499 = scalar_lea.vmem %s1, %s498
      %p500 = scmp.lt.s32.totalorder %s25, 1
      %s501 = scalar_select %p500, %s25, 1
      %s502 = smul.addr %s501, 8
      %s503 = scalar_lea.vmem %s2, %s502
      %p504 = scmp.lt.s32.totalorder %s25, 1
      %s505 = scalar_select %p504, %s25, 1
      %s506 = scalar_lea.vmem %s3, %s505
      %p507 = scmp.lt.s32.totalorder %s25, 1
      %s508 = scalar_select %p507, %s25, 1
      %s509 = smul.addr %s508, 8
      %s510 = scalar_lea.vmem %s14, %s509
      %v512 = vld [vmem:[%s495] sm:$0xff]
      %v513 = vld [vmem:[%s4] sm:$0x1]
      %v514 = vld [vmem:[%s5] sm:$0x1]
      %vm515 = vcmask 261120
      %v516 = vsel %vm515, %v512, 0.0
      %517 = vadd.xlane.f32.xlu0 %v516
      %v518 = vpop.xlane.xlu0 %517
      %v519 = vrcp.pop 32.0
      %v520 = vmul.f32 32.0, %v519
      %v521 = vsub.f32 1.0, %v520
      %v522 = vmul.f32 %v519, %v521
      %v523 = vadd.f32 %v519, %v522
      %vm524 = vweird.f32 %v519
      %v525 = vsel %vm524, %v519, %v523
      %v526 = vmul.f32 %v518, %v525
      %v527 = vsub.f32 %v512, %v526
      %v528 = vmul.f32 %v527, %v527
      %v529 = vsel %vm515, %v528, 0.0
      %530 = vadd.xlane.f32.xlu0 %v529
      %v531 = vpop.xlane.xlu0 %530
      %v532 = vmul.f32 %v531, %v525
      %v533 = vadd.f32 %v532, 1e-08
      %v534 = vrsqrt.pop %v533
      %v535 = vmul.f32 %v534, %v533
      %v536 = vmul.f32 %v535, %v534
      %v537 = vmul.f32 0.5, %v536
      %v538 = vsub.f32 1.5, %v537
      %v539 = vmul.f32 %v534, %v538
      %vm540 = vweird.f32 %v533
      %vm541 = vweird.f32 %v534
      %vm542 = vmor %vm540, %vm541
      %v543 = vsel %vm542, %v534, %v539
      %v544 = vmul.f32 %v527, %v543
      %v546 = vperm.slane %v513, 0
      %v548 = vmul.f32 %v544, %v546
      %v550 = vperm.slane %v514, 0
      %v552 = vadd.f32 %v548, %v550
      %v553 = vld [vmem:[%s499] sm:$0xff]
      %v554 = vsel %vm515, %v553, 0.0
      %555 = vadd.xlane.f32.xlu0 %v554
      %v556 = vpop.xlane.xlu0 %555
      %v557 = vmul.f32 %v556, %v525
      %v558 = vsub.f32 %v553, %v557
      %v559 = vmul.f32 %v558, %v558
      %v560 = vsel %vm515, %v559, 0.0
      %561 = vadd.xlane.f32.xlu0 %v560
      %v562 = vpop.xlane.xlu0 %561
      %v563 = vmul.f32 %v562, %v525
      %v564 = vadd.f32 %v563, 1e-08
      %v565 = vrsqrt.pop %v564
      %v566 = vmul.f32 %v565, %v564
      %v567 = vmul.f32 %v566, %v565
      %v568 = vmul.f32 0.5, %v567
      %v569 = vsub.f32 1.5, %v568
      %v570 = vmul.f32 %v565, %v569
      %vm571 = vweird.f32 %v564
      %vm572 = vweird.f32 %v565
      %vm573 = vmor %vm571, %vm572
      %v574 = vsel %vm573, %v565, %v570
      %v575 = vmul.f32 %v558, %v574
      %v576 = vmul.f32 %v575, %v546
      %v577 = vadd.f32 %v576, %v550
      %v578 = vld [vmem:[%s503] sm:$0xff]
      %v579 = vld [vmem:[%s6] sm:$0xf]
      %v580 = vld [vmem:[%s6 + $0x4] sm:$0xf]
      %v581 = vld [vmem:[%s6 + $0x8] sm:$0xf]
      %v582 = vpack.c.bf16 %v578, %v578
      %v583 = vld [vmem:[%s7] sm:$0x1]
      %v585 = vperm.slane %v583, 0
      %v590 = vunpack.c.l.b16 %v579
      %v591 = vunpack.c.l.b16 %v580
      %v592 = vunpack.c.l.b16 %v581
      %v593 = vpack.c.b16 %v591, %v590
      %v594 = vpack.c.b16 %v592, %v592
      %vm596 = vcmask 195584
      %v598 = vsel %vm596, %v582, 0
      %vm600 = vcmask 1043456
      %v602 = vsel %vm600, %v594, 0
      %604 = vmatpush.bf16.msra.mxu0 0
      %605 = vmatpush.bf16.msra.mxu0 0
      %606 = vmatpush.bf16.msra.mxu0 0
      %607 = vmatpush.bf16.msra.mxu0 0
      %608 = vmatpush.bf16.msra.mxu0 0
      %609 = vmatpush.bf16.msra.mxu0 0
      %610 = vmatpush.bf16.msra.mxu0 %v602
      %611 = vmatpush.bf16.msra.mxu0 %v593
      %612 = vmatmul.bf16.gmra.mxu0 %v598
      %v613 = vpop.f32.mrf.mxu0
      %v614 = vadd.f32 %v585, %v613
      %v615 = vpop.f32.mrf.mxu0
      %616 = vdwg.mxu0
      %v617 = vld [vmem:[%s8] sm:$0x1]
      %v618 = vld [vmem:[%s9] sm:$0x1]
      %v619 = vsel %vm515, %v614, 0.0
      %620 = vadd.xlane.f32.xlu0 %v619
      %v621 = vpop.xlane.xlu0 %620
      %v622 = vmul.f32 %v621, %v525
      %v623 = vsub.f32 %v614, %v622
      %v624 = vmul.f32 %v623, %v623
      %v625 = vsel %vm515, %v624, 0.0
      %626 = vadd.xlane.f32.xlu0 %v625
      %v627 = vpop.xlane.xlu0 %626
      %v628 = vmul.f32 %v627, %v525
      %v629 = vadd.f32 %v628, 1e-08
      %v630 = vrsqrt.pop %v629
      %v631 = vmul.f32 %v630, %v629
      %v632 = vmul.f32 %v631, %v630
      %v633 = vmul.f32 0.5, %v632
      %v634 = vsub.f32 1.5, %v633
      %v635 = vmul.f32 %v630, %v634
      %vm636 = vweird.f32 %v629
      %vm637 = vweird.f32 %v630
      %vm638 = vmor %vm636, %vm637
      %v639 = vsel %vm638, %v630, %v635
      %v640 = vmul.f32 %v623, %v639
      %v642 = vperm.slane %v617, 0
      %v644 = vmul.f32 %v640, %v642
      %v646 = vperm.slane %v618, 0
      %v648 = vadd.f32 %v644, %v646
      %v649 = vld [vmem:[%s506] sm:$0x1]
      %v650 = vld [vmem:[%s10] sm:$0xf]
      %v651 = vld [vmem:[%s10 + $0x4] sm:$0xf]
      %v652 = vpack.c.bf16 %v649, %v649
      %v653 = vld [vmem:[%s11] sm:$0x1]
      %v656 = vunpack.c.l.b16 %v650
      %v657 = vunpack.c.l.b16 %v651
      %v658 = vpack.c.b16 %v657, %v656
      %vm660 = vcmask 130048
      %v662 = vsel %vm660, %v652, 0
      %664 = vmatpush.bf16.msra.mxu0 0
      %665 = vmatpush.bf16.msra.mxu0 0
      %666 = vmatpush.bf16.msra.mxu0 0
      %667 = vmatpush.bf16.msra.mxu0 0
      %668 = vmatpush.bf16.msra.mxu0 0
      %669 = vmatpush.bf16.msra.mxu0 0
      %670 = vmatpush.bf16.msra.mxu0 0
      %671 = vmatpush.bf16.msra.mxu0 %v658
      %672 = vmatmul.bf16.gmra.mxu0 %v662
      %v673 = vpop.f32.mrf.mxu0
      %v674 = vadd.f32 %v653, %v673
      %v675 = vpop.f32.mrf.mxu0
      %676 = vdwg.mxu0
      %v677 = vld [vmem:[%s12] sm:$0x1]
      %v678 = vld [vmem:[%s13] sm:$0x1]
      %vm679 = vcmask 253952
      %v680 = vsel %vm679, %v674, 0.0
      %681 = vadd.xlane.f32.xlu0 %v680
      %v682 = vpop.xlane.xlu0 %681
      %v683 = vmul.f32 %v682, %v525
      %v684 = vsub.f32 %v674, %v683
      %v685 = vmul.f32 %v684, %v684
      %v686 = vsel %vm679, %v685, 0.0
      %687 = vadd.xlane.f32.xlu0 %v686
      %v688 = vpop.xlane.xlu0 %687
      %v689 = vmul.f32 %v688, %v525
      %v690 = vadd.f32 %v689, 1e-08
      %v691 = vrsqrt.pop %v690
      %v692 = vmul.f32 %v691, %v690
      %v693 = vmul.f32 %v692, %v691
      %v694 = vmul.f32 0.5, %v693
      %v695 = vsub.f32 1.5, %v694
      %v696 = vmul.f32 %v691, %v695
      %vm697 = vweird.f32 %v690
      %vm698 = vweird.f32 %v691
      %vm699 = vmor %vm697, %vm698
      %v700 = vsel %vm699, %v691, %v696
      %v701 = vmul.f32 %v684, %v700
      %v702 = vmul.f32 %v701, %v677
      %v703 = vadd.f32 %v702, %v678
      %v704 = vadd.f32 %v552, %v577
      %v705 = vadd.f32 %v704, %v648
      %v706 = vperm.slane %v703, 0
      %v707 = vadd.f32 %v705, %v706
      %708 = vst.msk [vmem:[%s510] sm:$0xff] %vm515, %v707
      %p709 = scmp.lt.s32.totalorder %s25, 1
      %s710 = scalar_select %p709, %s25, 1
      %s711 = smul.addr %s710, 8
      %s712 = scalar_lea.vmem %s14, %s711
      // Predicated region
      $region77: #{sstp_forward.11} parent=75 // pred_check
        %p713 = pneg %p357
      $region78: #{sstp_forward.11} parent=75 // pred_check_branch
        %715 = sbr.rel (%p713) target = $region80
      $region79: #{sstp_forward.11} parent=75 // pred_region
        _
      $region80: #{sstp_forward.11} parent=75 // pred_fallthru
        _
    $region76: #{sstp_forward.11} parent=5 // pred_fallthru
      _
    %p716 = scmp.le.s32.totalorder 2, %s20
    // Predicated region
    $region81: #{sstp_forward.11} parent=5 // pred_check
      %p717 = pneg %p716
    $region82: #{sstp_forward.11} parent=5 // pred_check_branch
      %719 = sbr.rel (%p717) target = $region84
    $region83: #{sstp_forward.11} parent=5 // pred_region
      %s720 = ssub.s32 %s20, 2
      // Predicated region
      $region85: #{sstp_forward.11} parent=83 // pred_check
        %p721 = pneg %p363
      $region86: #{sstp_forward.11} parent=83 // pred_check_branch
        %723 = sbr.rel (%p721) target = $region88
      $region87: #{sstp_forward.11} parent=83 // pred_region
        %p724 = scmp.lt.s32.totalorder %s26, 1
        %s725 = scalar_select %p724, %s26, 1
        %s726 = smul.addr %s725, 8
        %s727 = scalar_lea.vmem %s14, %s726
      $region88: #{sstp_forward.11} parent=83 // pred_fallthru
        _
    $region84: #{sstp_forward.11} parent=5 // pred_fallthru
      _
  $region6: #{sstp_forward.11} parent=0 // loop_footer
    %s24 = sadd.s32 1, %s20
  $region7: #{sstp_forward.11} parent=0 // loop_footer_branch
    %19 = sbr.rel target = $region3
  $region8: #{sstp_forward.11} parent=0 // loop_exit
    _

// kernel: sstp_forward.12
$region0: #{sstp_forward.12}
  #allocation0 [shape = 'u32[]', space=smem, size = 0x4, offset = 0x4, fixed_abs, tag = 'smem constant byte address 0x4 - core index']
  #allocation1 [shape = 'u32[72,128]{1,0:T(1,128)}', space=vmem, size = 0x9000, scoped, tag = 'internal scratch']
  %s0 = inlined_call_operand.vmem [shape: f32[16,32], index: 0, kind: input, shape index: {}]
  %s1 = inlined_call_operand.vmem [shape: bf16[32,20], index: 1, kind: input, shape index: {}]
  %s2 = inlined_call_operand.vmem [shape: f32[1,20], index: 2, kind: input, shape index: {}]
  %s3 = inlined_call_operand.hbm [shape: f32[16,20], index: 3, kind: output, shape index: {}]
  %s4 = sld [smem:[#allocation0]]
  $region22: #{sstp_forward.12} parent=0
    _
  %s6 = ssub.s32 1, %s4
  %s7 = scalar_select 0, %s6, %s4
  $region1: #{sstp_forward.12} parent=0
    #allocation2 [shape = 'u8[8192]{0}', space=vmem, size = 0x2000, scoped, tag = 'output window, operand 0, single buffered']
    #allocation3 [shape = 's32[1]{0}', space=sflag, size = 0x4, scoped, tag = 'scoped memory for sstp_forward.12']
    %8 = vsyncpa [#allocation3], 0
    // Predicated region
    $region2: #{sstp_forward.12} parent=1 // pred_check
      _
    $region3: #{sstp_forward.12} parent=1 // pred_check_branch
      %10 = sbr.rel (0) target = $region5
    $region4: #{sstp_forward.12} parent=1 // pred_region
      _
    $region5: #{sstp_forward.12} parent=1 // pred_fallthru
      _
    // Predicated region
    $region6: #{sstp_forward.12} parent=1 // pred_check
      _
    $region7: #{sstp_forward.12} parent=1 // pred_check_branch
      %12 = sbr.rel (0) target = $region9
    $region8: #{sstp_forward.12} parent=1 // pred_region
      _
    $region9: #{sstp_forward.12} parent=1 // pred_fallthru
      _
    // Predicated region
    $region10: #{sstp_forward.12} parent=1 // pred_check
      _
    $region11: #{sstp_forward.12} parent=1 // pred_check_branch
      %14 = sbr.rel (0) target = $region13
    $region12: #{sstp_forward.12} parent=1 // pred_region
      _
    $region13: #{sstp_forward.12} parent=1 // pred_fallthru
      _
    %v16 = vld [vmem:[%s0] sm:$0xff]
    %v17 = vld [vmem:[%s0 + $0x8] sm:$0xff]
    %v18 = vld [vmem:[%s1] sm:$0xf]
    %v19 = vld [vmem:[%s1 + $0x4] sm:$0xf]
    %v20 = vld [vmem:[%s1 + $0x8] sm:$0xf]
    %v21 = vld [vmem:[%s1 + $0xc] sm:$0xf]
    %v22 = vpack.c.bf16 %v17, %v16
    %v23 = vld [vmem:[%s2] sm:$0x1]
    %v25 = vperm.slane %v23, 0
    %v31 = vunpack.c.l.b16 %v18
    %v32 = vunpack.c.l.b16 %v19
    %v33 = vunpack.c.l.b16 %v20
    %v34 = vunpack.c.l.b16 %v21
    %v35 = vpack.c.b16 %v32, %v31
    %v36 = vpack.c.b16 %v34, %v33
    %vm39 = vcmask 261120
    %v41 = vsel %vm39, %v22, 0
    %43 = vmatpush.bf16.msra.mxu0 0
    %44 = vmatpush.bf16.msra.mxu0 0
    %45 = vmatpush.bf16.msra.mxu0 0
    %46 = vmatpush.bf16.msra.mxu0 0
    %47 = vmatpush.bf16.msra.mxu0 0
    %48 = vmatpush.bf16.msra.mxu0 0
    %49 = vmatpush.bf16.msra.mxu0 %v36
    %50 = vmatpush.bf16.msra.mxu0 %v35
    %51 = vmatmul.bf16.gmra.mxu0 %v41
    %v52 = vpop.f32.mrf.mxu0
    %v53 = vadd.f32 %v25, %v52
    %v54 = vpop.f32.mrf.mxu0
    %v55 = vadd.f32 %v25, %v54
    %56 = vdwg.mxu0
    %vm57 = vcmask 162816
    %58 = vst.msk [vmem:[#allocation2] sm:$0xff] %vm57, %v53
    %59 = vst.msk [vmem:[#allocation2 + $0x8] sm:$0xff] %vm57, %v55
    // Predicated region
    $region14: #{sstp_forward.12} parent=1 // pred_check
      _
    $region15: #{sstp_forward.12} parent=1 // pred_check_branch
      %61 = sbr.rel (0) target = $region17
    $region16: #{sstp_forward.12} parent=1 // pred_region
      %63 = vsyncadd [#allocation3], 0
      %s64 = sshll.u32 [#allocation2], 4
      %s65 = int_to_ptr.vmem [resolvable:$true] %s64
      %s66 = sshll.u32 %s3, 4
      %s67 = int_to_ptr.hbm [resolvable:$true] %s66
      %72 = dma.vmem_to_hbm [thread:$0]  %s65, 256, %s67, [#allocation3], 128, 128, 8
    $region17: #{sstp_forward.12} parent=1 // pred_fallthru
      _
    // Predicated region
    $region18: #{sstp_forward.12} parent=1 // pred_check
      _
    $region19: #{sstp_forward.12} parent=1 // pred_check_branch
      %74 = sbr.rel (0) target = $region21
    $region20: #{sstp_forward.12} parent=1 // pred_region
      %76 = dma.done [#allocation3], 256
    $region21: #{sstp_forward.12} parent=1 // pred_fallthru
      _
    %77 = vsyncpa [#allocation3], 1

</llo_original>
